<compile_context>
chip_gen: v6e
topology: v6e:2x2x1
jax: 0.10.0
libtpu: 0.0.40
codegen_flags: <defaults>
</compile_context>

<pallas_src>
import jax
import jax.numpy as jnp
from jax.experimental import pallas as pl
from jax.experimental.pallas import tpu as pltpu


def _round_up(n, m):
    return (n + m - 1) // m * m


# ---------------------------------------------------------------------------
# Pallas kernels
# ---------------------------------------------------------------------------
def _conv_pool_kernel(p0_ref, p1_ref, p2_ref, p3_ref, w_ref, b_ref, o_ref):
    """Fused conv (as 4 quadrant matmuls) + 2x2 max-pool + bias + ReLU.

    p{0..3}_ref: (M, Kpad) im2col patches for the 4 positions of each 2x2
                 pool window (M = B*PH*PW rows ordered (b, i, j)).
    w_ref:       (Kpad, 128)  lane-dense, zero-padded weight matrix.
    b_ref:       (1, 128)     zero-padded bias row.
    o_ref:       (M, 128)     pooled, activated output (lane-dense).
    """
    w = w_ref[...]

    def mm(p_ref):
        return jnp.dot(p_ref[...], w, preferred_element_type=jnp.float32)

    m = jnp.maximum(jnp.maximum(mm(p0_ref), mm(p1_ref)),
                    jnp.maximum(mm(p2_ref), mm(p3_ref)))
    # bias/ReLU commute with the window max (bias is per-channel constant).
    o_ref[...] = jnp.maximum(m + b_ref[...], 0.0)


def _fc_fused_kernel(x_ref, w1_ref, b1_ref, w2_ref, b2_ref, w3_ref, b3_ref,
                     o_ref):
    """fc1+ReLU -> fc2+ReLU -> fc3, all intermediates stay on-chip."""
    h = jnp.dot(x_ref[...], w1_ref[...], preferred_element_type=jnp.float32)
    h = jnp.maximum(h + b1_ref[...], 0.0)
    h = jnp.dot(h, w2_ref[...], preferred_element_type=jnp.float32)
    h = jnp.maximum(h + b2_ref[...], 0.0)
    o_ref[...] = (jnp.dot(h, w3_ref[...], preferred_element_type=jnp.float32)
                  + b3_ref[...])


def _full_spec(shape):
    return pl.BlockSpec(shape, lambda i, _n=len(shape): (0,) * _n)


# ---------------------------------------------------------------------------
# Wrappers
# ---------------------------------------------------------------------------
def conv_relu_pool(x_nhwc, w_mat, b_row, k=5):
    """Valid conv (stride 1) + bias + ReLU + 2x2 max-pool, fused in Pallas.

    Returns (B*PH*PW, 128) rows ordered (b, i, j); lanes = output channels
    zero-padded to 128 (lane-dense stores).
    """
    B, H, W, C = x_nhwc.shape
    OH, OW = H - k + 1, W - k + 1
    PH, PW = OH // 2, OW // 2
    Kpad, cout_pad = w_mat.shape
    K = k * k * C
    M = B * PH * PW

    # Glue: build im2col patches for each of the 4 pool-window quadrants.
    # Pure data rearrangement; the arithmetic happens inside the kernel.
    def quadrant(di, dj):
        cols = []
        for kh in range(k):
            for kw in range(k):
                h0, w0 = di + kh, dj + kw
                cols.append(x_nhwc[:, h0:h0 + 2 * PH:2, w0:w0 + 2 * PW:2, :])
        p = jnp.concatenate(cols, axis=-1).reshape(M, K)
        return jnp.pad(p, ((0, 0), (0, Kpad - K)))

    quads = [quadrant(0, 0), quadrant(0, 1), quadrant(1, 0), quadrant(1, 1)]

    spec_p = _full_spec((M, Kpad))
    return pl.pallas_call(
        _conv_pool_kernel,
        out_shape=jax.ShapeDtypeStruct((M, cout_pad), jnp.float32),
        grid=(1,),
        in_specs=[spec_p, spec_p, spec_p, spec_p,
                  _full_spec((Kpad, cout_pad)),
                  _full_spec((1, cout_pad))],
        out_specs=_full_spec((M, cout_pad)),
        compiler_params=pltpu.CompilerParams(
            dimension_semantics=("arbitrary",)),
    )(*quads, w_mat, b_row)


def fc_fused(x, w1, b1, w2, b2, w3, b3):
    B, K1 = x.shape
    N1, N2, N3 = w1.shape[1], w2.shape[1], w3.shape[1]
    return pl.pallas_call(
        _fc_fused_kernel,
        out_shape=jax.ShapeDtypeStruct((B, N3), jnp.float32),
        grid=(1,),
        in_specs=[_full_spec((B, K1)),
                  _full_spec((K1, N1)), _full_spec((1, N1)),
                  _full_spec((N1, N2)), _full_spec((1, N2)),
                  _full_spec((N2, N3)), _full_spec((1, N3))],
        out_specs=_full_spec((B, N3)),
        compiler_params=pltpu.CompilerParams(
            dimension_semantics=("arbitrary",)),
    )(x, w1, b1, w2, b2, w3, b3)


# ---------------------------------------------------------------------------
# Parameter init (PyTorch-style) + one-time prep (hoisted reshapes / padding)
# ---------------------------------------------------------------------------
def init_params(key):
    ks = jax.random.split(key, 10)

    def u(k, shape, fan_in):
        bound = 1.0 / jnp.sqrt(float(fan_in))
        return jax.random.uniform(k, shape, jnp.float32, -bound, bound)

    return {
        "conv1_w": u(ks[0], (6, 3, 5, 5), 3 * 5 * 5),
        "conv1_b": u(ks[1], (6,), 3 * 5 * 5),
        "conv2_w": u(ks[2], (16, 6, 5, 5), 6 * 5 * 5),
        "conv2_b": u(ks[3], (16,), 6 * 5 * 5),
        "fc1_w": u(ks[4], (120, 400), 400),
        "fc1_b": u(ks[5], (120,), 400),
        "fc2_w": u(ks[6], (84, 120), 120),
        "fc2_b": u(ks[7], (84,), 120),
        "fc3_w": u(ks[8], (10, 84), 84),
        "fc3_b": u(ks[9], (10,), 84),
    }


CPAD = 128  # conv output channels padded to a full lane width


def prepare_params(params):
    """One-time weight preprocessing (kept out of the traced forward)."""
    def conv_mat(w_oihw, b):
        o, i, kh, kw = w_oihw.shape
        kdim = kh * kw * i
        kpad = _round_up(kdim, 128)
        wm = jnp.transpose(w_oihw, (2, 3, 1, 0)).reshape(kdim, o)   # rows (kh,kw,ci)
        wm = jnp.pad(wm, ((0, kpad - kdim), (0, CPAD - o)))
        br = jnp.pad(b.reshape(1, o), ((0, 0), (0, CPAD - o)))
        return wm, br

    c1w, c1b = conv_mat(params["conv1_w"], params["conv1_b"])        # (128,128)
    c2w, c2b = conv_mat(params["conv2_w"], params["conv2_b"])        # (256,128)

    # fc1: PyTorch flattens (c, h, w); our pooled activations flatten as
    # (h*w, padded-c) -> permute/pad fc1's input columns once here so no
    # runtime transpose is needed.
    w1 = params["fc1_w"].reshape(120, 16, 25)          # (o, c, hw)
    w1 = jnp.transpose(w1, (2, 1, 0))                  # (hw, c, o)
    w1 = jnp.pad(w1, ((0, 0), (0, CPAD - 16), (0, 0))) # (25, 128, o)
    w1 = w1.reshape(25 * CPAD, 120)                    # (3200, 120)

    return {
        "c1w": c1w, "c1b": c1b,
        "c2w": c2w, "c2b": c2b,
        "fc1_w": w1, "fc1_b": params["fc1_b"].reshape(1, -1),
        "fc2_w": params["fc2_w"].T, "fc2_b": params["fc2_b"].reshape(1, -1),
        "fc3_w": params["fc3_w"].T, "fc3_b": params["fc3_b"].reshape(1, -1),
    }


# ---------------------------------------------------------------------------
# Forward pass
# ---------------------------------------------------------------------------
def lenet_forward(prep, x_nchw):
    # NCHW (PyTorch) -> NHWC for the TPU kernels.
    x = jnp.transpose(x_nchw, (0, 2, 3, 1)).astype(jnp.float32)     # (B,32,32,3)
    B = x.shape[0]

    y = conv_relu_pool(x, prep["c1w"], prep["c1b"])                 # (B*196,128)
    y = y.reshape(B, 14, 14, CPAD)[..., :6]                         # (B,14,14,6)
    y = conv_relu_pool(y, prep["c2w"], prep["c2b"])                 # (B*25,128)

    # Flatten (h*w, padded-c) per image; fc1's columns were permuted/padded to
    # consume this order directly (padded channels are exact zeros).
    y = y.reshape(B, 25 * CPAD)                                     # (B,3200)
    return fc_fused(y, prep["fc1_w"], prep["fc1_b"],
                    prep["fc2_w"], prep["fc2_b"],
                    prep["fc3_w"], prep["fc3_b"])                   # (B,10)

# TODO(synk): for large batch, move im2col patch construction inside the conv
# kernel (accumulate over (kh,kw) in VMEM) and tile M across cores (v7x).


# ---------------------------------------------------------------------------
# Pure-JAX reference (same math as nn.Module, no Pallas) for a sanity check
# ---------------------------------------------------------------------------
def _im2col_ref(x, k):
    B, H, W, C = x.shape
    OH, OW = H - k + 1, W - k + 1
    cols = []
    for kh in range(k):
        for kw in range(k):
            cols.append(x[:, kh:kh + OH, kw:kw + OW, :])
    return jnp.concatenate(cols, axis=-1).reshape(B * OH * OW, k * k * C)


def lenet_reference(params, x_nchw):
    hp = jax.lax.Precision.HIGHEST

    def conv(x, w, b, k):
        B, H, W, Cin = x.shape
        Cout = w.shape[0]
        OH, OW = H - k + 1, W - k + 1
        p = _im2col_ref(x, k)
        wm = jnp.transpose(w, (2, 3, 1, 0)).reshape(k * k * Cin, Cout)
        y = jnp.dot(p, wm, precision=hp) + b
        return jnp.maximum(y, 0.0).reshape(B, OH, OW, Cout)

    def pool(x):
        return jnp.maximum(
            jnp.maximum(x[:, 0::2, 0::2, :], x[:, 0::2, 1::2, :]),
            jnp.maximum(x[:, 1::2, 0::2, :], x[:, 1::2, 1::2, :]),
        )

    x = jnp.transpose(x_nchw, (0, 2, 3, 1)).astype(jnp.float32)
    x = pool(conv(x, params["conv1_w"], params["conv1_b"], 5))
    x = pool(conv(x, params["conv2_w"], params["conv2_b"], 5))
    B = x.shape[0]
    x = jnp.transpose(x, (0, 3, 1, 2)).reshape(B, 400)               # (c,h,w) flatten
    x = jnp.maximum(jnp.dot(x, params["fc1_w"].T, precision=hp) + params["fc1_b"], 0.0)
    x = jnp.maximum(jnp.dot(x, params["fc2_w"].T, precision=hp) + params["fc2_b"], 0.0)
    return jnp.dot(x, params["fc3_w"].T, precision=hp) + params["fc3_b"]


if __name__ == "__main__":
    key = jax.random.PRNGKey(0)
    pkey, xkey = jax.random.split(key)
    params = init_params(pkey)
    prep = prepare_params(params)          # hoisted, one-time weight prep
    # LeNet's fc1 (16*5*5 inputs) forces 32x32 spatial; batch kept small.
    x = jax.random.normal(xkey, (2, 3, 32, 32), dtype=jnp.float32)

    out = jax.jit(lenet_forward)(prep, x)
    out = jax.block_until_ready(out)

    ref = lenet_reference(params, x)
    assert out.shape == (2, 10), out.shape
    assert bool(jnp.all(jnp.isfinite(out)))
    assert bool(jnp.allclose(out, ref, rtol=5e-2, atol=5e-2)), (out, ref)

    print("KERNEL_OK")
</pallas_src>

<mosaic_0001>
module attributes {stable_mosaic.version = 11 : i64} {
  func.func @_conv_pool_kernel(%arg0: i32, %arg1: memref<392x128xf32, #tpu.memory_space<vmem>>, %arg2: memref<392x128xf32, #tpu.memory_space<vmem>>, %arg3: memref<392x128xf32, #tpu.memory_space<vmem>>, %arg4: memref<392x128xf32, #tpu.memory_space<vmem>>, %arg5: memref<128x128xf32, #tpu.memory_space<vmem>>, %arg6: memref<1x128xf32, #tpu.memory_space<vmem>>, %arg7: memref<392x128xf32, #tpu.memory_space<vmem>>) attributes {dimension_semantics = [#tpu.dimension_semantics<arbitrary>], iteration_bounds = array<i64: 1>, scalar_prefetch = 0 : i64, scratch_operands = 0 : i64, tpu.core_type = #tpu.core_type<tc>, window_params = [{pipeline_mode = #tpu.pipeline_mode<synchronous>, transform_indices = @transform_0, window_bounds = array<i64: 392, 128>}, {pipeline_mode = #tpu.pipeline_mode<synchronous>, transform_indices = @transform_1, window_bounds = array<i64: 392, 128>}, {pipeline_mode = #tpu.pipeline_mode<synchronous>, transform_indices = @transform_2, window_bounds = array<i64: 392, 128>}, {pipeline_mode = #tpu.pipeline_mode<synchronous>, transform_indices = @transform_3, window_bounds = array<i64: 392, 128>}, {pipeline_mode = #tpu.pipeline_mode<synchronous>, transform_indices = @transform_4, window_bounds = array<i64: 128, 128>}, {pipeline_mode = #tpu.pipeline_mode<synchronous>, transform_indices = @transform_5, window_bounds = array<i64: 1, 128>}, {pipeline_mode = #tpu.pipeline_mode<synchronous>, transform_indices = @transform_6, window_bounds = array<i64: 392, 128>}]} {
    %c0 = arith.constant 0 : index
    %c0_0 = arith.constant 0 : index
    %0 = vector.load %arg5[%c0, %c0_0] : memref<128x128xf32, #tpu.memory_space<vmem>>, vector<128x128xf32>
    %c0_1 = arith.constant 0 : index
    %c0_2 = arith.constant 0 : index
    %1 = vector.load %arg1[%c0_1, %c0_2] : memref<392x128xf32, #tpu.memory_space<vmem>>, vector<392x128xf32>
    %cst = arith.constant dense<0.000000e+00> : vector<392x128xf32>
    %2 = tpu.matmul %1, %0, %cst {dimension_numbers = #tpu.dot_dimension_numbers<[1], [0], [0], [1], [0, 0, 1, 1], [], []>} : vector<392x128xf32>, vector<128x128xf32>, vector<392x128xf32> -> vector<392x128xf32>
    %c0_3 = arith.constant 0 : index
    %c0_4 = arith.constant 0 : index
    %3 = vector.load %arg2[%c0_3, %c0_4] : memref<392x128xf32, #tpu.memory_space<vmem>>, vector<392x128xf32>
    %cst_5 = arith.constant dense<0.000000e+00> : vector<392x128xf32>
    %4 = tpu.matmul %3, %0, %cst_5 {dimension_numbers = #tpu.dot_dimension_numbers<[1], [0], [0], [1], [0, 0, 1, 1], [], []>} : vector<392x128xf32>, vector<128x128xf32>, vector<392x128xf32> -> vector<392x128xf32>
    %5 = arith.maximumf %2, %4 : vector<392x128xf32>
    %c0_6 = arith.constant 0 : index
    %c0_7 = arith.constant 0 : index
    %6 = vector.load %arg3[%c0_6, %c0_7] : memref<392x128xf32, #tpu.memory_space<vmem>>, vector<392x128xf32>
    %cst_8 = arith.constant dense<0.000000e+00> : vector<392x128xf32>
    %7 = tpu.matmul %6, %0, %cst_8 {dimension_numbers = #tpu.dot_dimension_numbers<[1], [0], [0], [1], [0, 0, 1, 1], [], []>} : vector<392x128xf32>, vector<128x128xf32>, vector<392x128xf32> -> vector<392x128xf32>
    %c0_9 = arith.constant 0 : index
    %c0_10 = arith.constant 0 : index
    %8 = vector.load %arg4[%c0_9, %c0_10] : memref<392x128xf32, #tpu.memory_space<vmem>>, vector<392x128xf32>
    %cst_11 = arith.constant dense<0.000000e+00> : vector<392x128xf32>
    %9 = tpu.matmul %8, %0, %cst_11 {dimension_numbers = #tpu.dot_dimension_numbers<[1], [0], [0], [1], [0, 0, 1, 1], [], []>} : vector<392x128xf32>, vector<128x128xf32>, vector<392x128xf32> -> vector<392x128xf32>
    %10 = arith.maximumf %7, %9 : vector<392x128xf32>
    %11 = arith.maximumf %5, %10 : vector<392x128xf32>
    %c0_12 = arith.constant 0 : index
    %c0_13 = arith.constant 0 : index
    %12 = vector.load %arg6[%c0_12, %c0_13] : memref<1x128xf32, #tpu.memory_space<vmem>>, vector<1x128xf32>
    %13 = vector.broadcast %12 : vector<1x128xf32> to vector<392x128xf32>
    %14 = arith.addf %11, %13 : vector<392x128xf32>
    %cst_14 = arith.constant 0.000000e+00 : f32
    %15 = vector.broadcast %cst_14 : f32 to vector<392x128xf32>
    %16 = arith.maximumf %14, %15 : vector<392x128xf32>
    %c0_15 = arith.constant 0 : index
    %c0_16 = arith.constant 0 : index
    %17 = vector.load %arg7[%c0_15, %c0_16] : memref<392x128xf32, #tpu.memory_space<vmem>>, vector<392x128xf32>
    tpu.vector_store %arg7[%c0_15, %c0_16], %16 {strides = array<i32>} : memref<392x128xf32, #tpu.memory_space<vmem>>, vector<392x128xf32>,
    return
  }
  func.func @transform_0(%arg0: i32) -> (i32, i32) {
    %c0_i32 = arith.constant 0 : i32
    %c0_i32_0 = arith.constant 0 : i32
    %c0_i32_1 = arith.constant 0 : i32
    return %c0_i32, %c0_i32_0 : i32, i32
  }
  func.func @transform_1(%arg0: i32) -> (i32, i32) {
    %c0_i32 = arith.constant 0 : i32
    %c0_i32_0 = arith.constant 0 : i32
    %c0_i32_1 = arith.constant 0 : i32
    return %c0_i32, %c0_i32_0 : i32, i32
  }
  func.func @transform_2(%arg0: i32) -> (i32, i32) {
    %c0_i32 = arith.constant 0 : i32
    %c0_i32_0 = arith.constant 0 : i32
    %c0_i32_1 = arith.constant 0 : i32
    return %c0_i32, %c0_i32_0 : i32, i32
  }
  func.func @transform_3(%arg0: i32) -> (i32, i32) {
    %c0_i32 = arith.constant 0 : i32
    %c0_i32_0 = arith.constant 0 : i32
    %c0_i32_1 = arith.constant 0 : i32
    return %c0_i32, %c0_i32_0 : i32, i32
  }
  func.func @transform_4(%arg0: i32) -> (i32, i32) {
    %c0_i32 = arith.constant 0 : i32
    %c0_i32_0 = arith.constant 0 : i32
    %c0_i32_1 = arith.constant 0 : i32
    return %c0_i32, %c0_i32_0 : i32, i32
  }
  func.func @transform_5(%arg0: i32) -> (i32, i32) {
    %c0_i32 = arith.constant 0 : i32
    %c0_i32_0 = arith.constant 0 : i32
    %c0_i32_1 = arith.constant 0 : i32
    return %c0_i32, %c0_i32_0 : i32, i32
  }
  func.func @transform_6(%arg0: i32) -> (i32, i32) {
    %c0_i32 = arith.constant 0 : i32
    %c0_i32_0 = arith.constant 0 : i32
    %c0_i32_1 = arith.constant 0 : i32
    return %c0_i32, %c0_i32_0 : i32, i32
  }
}

module attributes {stable_mosaic.version = 11 : i64} {
  func.func @_conv_pool_kernel(%arg0: i32, %arg1: memref<50x256xf32, #tpu.memory_space<vmem>>, %arg2: memref<50x256xf32, #tpu.memory_space<vmem>>, %arg3: memref<50x256xf32, #tpu.memory_space<vmem>>, %arg4: memref<50x256xf32, #tpu.memory_space<vmem>>, %arg5: memref<256x128xf32, #tpu.memory_space<vmem>>, %arg6: memref<1x128xf32, #tpu.memory_space<vmem>>, %arg7: memref<50x128xf32, #tpu.memory_space<vmem>>) attributes {dimension_semantics = [#tpu.dimension_semantics<arbitrary>], iteration_bounds = array<i64: 1>, scalar_prefetch = 0 : i64, scratch_operands = 0 : i64, tpu.core_type = #tpu.core_type<tc>, window_params = [{pipeline_mode = #tpu.pipeline_mode<synchronous>, transform_indices = @transform_0, window_bounds = array<i64: 50, 256>}, {pipeline_mode = #tpu.pipeline_mode<synchronous>, transform_indices = @transform_1, window_bounds = array<i64: 50, 256>}, {pipeline_mode = #tpu.pipeline_mode<synchronous>, transform_indices = @transform_2, window_bounds = array<i64: 50, 256>}, {pipeline_mode = #tpu.pipeline_mode<synchronous>, transform_indices = @transform_3, window_bounds = array<i64: 50, 256>}, {pipeline_mode = #tpu.pipeline_mode<synchronous>, transform_indices = @transform_4, window_bounds = array<i64: 256, 128>}, {pipeline_mode = #tpu.pipeline_mode<synchronous>, transform_indices = @transform_5, window_bounds = array<i64: 1, 128>}, {pipeline_mode = #tpu.pipeline_mode<synchronous>, transform_indices = @transform_6, window_bounds = array<i64: 50, 128>}]} {
    %c0 = arith.constant 0 : index
    %c0_0 = arith.constant 0 : index
    %0 = vector.load %arg5[%c0, %c0_0] : memref<256x128xf32, #tpu.memory_space<vmem>>, vector<256x128xf32>
    %c0_1 = arith.constant 0 : index
    %c0_2 = arith.constant 0 : index
    %1 = vector.load %arg1[%c0_1, %c0_2] : memref<50x256xf32, #tpu.memory_space<vmem>>, vector<50x256xf32>
    %cst = arith.constant dense<0.000000e+00> : vector<50x128xf32>
    %2 = tpu.matmul %1, %0, %cst {dimension_numbers = #tpu.dot_dimension_numbers<[1], [0], [0], [1], [0, 0, 1, 1], [], []>} : vector<50x256xf32>, vector<256x128xf32>, vector<50x128xf32> -> vector<50x128xf32>
    %c0_3 = arith.constant 0 : index
    %c0_4 = arith.constant 0 : index
    %3 = vector.load %arg2[%c0_3, %c0_4] : memref<50x256xf32, #tpu.memory_space<vmem>>, vector<50x256xf32>
    %cst_5 = arith.constant dense<0.000000e+00> : vector<50x128xf32>
    %4 = tpu.matmul %3, %0, %cst_5 {dimension_numbers = #tpu.dot_dimension_numbers<[1], [0], [0], [1], [0, 0, 1, 1], [], []>} : vector<50x256xf32>, vector<256x128xf32>, vector<50x128xf32> -> vector<50x128xf32>
    %5 = arith.maximumf %2, %4 : vector<50x128xf32>
    %c0_6 = arith.constant 0 : index
    %c0_7 = arith.constant 0 : index
    %6 = vector.load %arg3[%c0_6, %c0_7] : memref<50x256xf32, #tpu.memory_space<vmem>>, vector<50x256xf32>
    %cst_8 = arith.constant dense<0.000000e+00> : vector<50x128xf32>
    %7 = tpu.matmul %6, %0, %cst_8 {dimension_numbers = #tpu.dot_dimension_numbers<[1], [0], [0], [1], [0, 0, 1, 1], [], []>} : vector<50x256xf32>, vector<256x128xf32>, vector<50x128xf32> -> vector<50x128xf32>
    %c0_9 = arith.constant 0 : index
    %c0_10 = arith.constant 0 : index
    %8 = vector.load %arg4[%c0_9, %c0_10] : memref<50x256xf32, #tpu.memory_space<vmem>>, vector<50x256xf32>
    %cst_11 = arith.constant dense<0.000000e+00> : vector<50x128xf32>
    %9 = tpu.matmul %8, %0, %cst_11 {dimension_numbers = #tpu.dot_dimension_numbers<[1], [0], [0], [1], [0, 0, 1, 1], [], []>} : vector<50x256xf32>, vector<256x128xf32>, vector<50x128xf32> -> vector<50x128xf32>
    %10 = arith.maximumf %7, %9 : vector<50x128xf32>
    %11 = arith.maximumf %5, %10 : vector<50x128xf32>
    %c0_12 = arith.constant 0 : index
    %c0_13 = arith.constant 0 : index
    %12 = vector.load %arg6[%c0_12, %c0_13] : memref<1x128xf32, #tpu.memory_space<vmem>>, vector<1x128xf32>
    %13 = vector.broadcast %12 : vector<1x128xf32> to vector<50x128xf32>
    %14 = arith.addf %11, %13 : vector<50x128xf32>
    %cst_14 = arith.constant 0.000000e+00 : f32
    %15 = vector.broadcast %cst_14 : f32 to vector<50x128xf32>
    %16 = arith.maximumf %14, %15 : vector<50x128xf32>
    %c0_15 = arith.constant 0 : index
    %c0_16 = arith.constant 0 : index
    %17 = vector.load %arg7[%c0_15, %c0_16] : memref<50x128xf32, #tpu.memory_space<vmem>>, vector<50x128xf32>
    tpu.vector_store %arg7[%c0_15, %c0_16], %16 {strides = array<i32>} : memref<50x128xf32, #tpu.memory_space<vmem>>, vector<50x128xf32>,
    return
  }
  func.func @transform_0(%arg0: i32) -> (i32, i32) {
    %c0_i32 = arith.constant 0 : i32
    %c0_i32_0 = arith.constant 0 : i32
    %c0_i32_1 = arith.constant 0 : i32
    return %c0_i32, %c0_i32_0 : i32, i32
  }
  func.func @transform_1(%arg0: i32) -> (i32, i32) {
    %c0_i32 = arith.constant 0 : i32
    %c0_i32_0 = arith.constant 0 : i32
    %c0_i32_1 = arith.constant 0 : i32
    return %c0_i32, %c0_i32_0 : i32, i32
  }
  func.func @transform_2(%arg0: i32) -> (i32, i32) {
    %c0_i32 = arith.constant 0 : i32
    %c0_i32_0 = arith.constant 0 : i32
    %c0_i32_1 = arith.constant 0 : i32
    return %c0_i32, %c0_i32_0 : i32, i32
  }
  func.func @transform_3(%arg0: i32) -> (i32, i32) {
    %c0_i32 = arith.constant 0 : i32
    %c0_i32_0 = arith.constant 0 : i32
    %c0_i32_1 = arith.constant 0 : i32
    return %c0_i32, %c0_i32_0 : i32, i32
  }
  func.func @transform_4(%arg0: i32) -> (i32, i32) {
    %c0_i32 = arith.constant 0 : i32
    %c0_i32_0 = arith.constant 0 : i32
    %c0_i32_1 = arith.constant 0 : i32
    return %c0_i32, %c0_i32_0 : i32, i32
  }
  func.func @transform_5(%arg0: i32) -> (i32, i32) {
    %c0_i32 = arith.constant 0 : i32
    %c0_i32_0 = arith.constant 0 : i32
    %c0_i32_1 = arith.constant 0 : i32
    return %c0_i32, %c0_i32_0 : i32, i32
  }
  func.func @transform_6(%arg0: i32) -> (i32, i32) {
    %c0_i32 = arith.constant 0 : i32
    %c0_i32_0 = arith.constant 0 : i32
    %c0_i32_1 = arith.constant 0 : i32
    return %c0_i32, %c0_i32_0 : i32, i32
  }
}

module attributes {stable_mosaic.version = 11 : i64} {
  func.func @_fc_fused_kernel(%arg0: i32, %arg1: memref<2x3200xf32, #tpu.memory_space<vmem>>, %arg2: memref<3200x120xf32, #tpu.memory_space<vmem>>, %arg3: memref<1x120xf32, #tpu.memory_space<vmem>>, %arg4: memref<120x84xf32, #tpu.memory_space<vmem>>, %arg5: memref<1x84xf32, #tpu.memory_space<vmem>>, %arg6: memref<84x10xf32, #tpu.memory_space<vmem>>, %arg7: memref<1x10xf32, #tpu.memory_space<vmem>>, %arg8: memref<2x10xf32, #tpu.memory_space<vmem>>) attributes {dimension_semantics = [#tpu.dimension_semantics<arbitrary>], iteration_bounds = array<i64: 1>, scalar_prefetch = 0 : i64, scratch_operands = 0 : i64, tpu.core_type = #tpu.core_type<tc>, window_params = [{pipeline_mode = #tpu.pipeline_mode<synchronous>, transform_indices = @transform_0, window_bounds = array<i64: 2, 3200>}, {pipeline_mode = #tpu.pipeline_mode<synchronous>, transform_indices = @transform_1, window_bounds = array<i64: 3200, 120>}, {pipeline_mode = #tpu.pipeline_mode<synchronous>, transform_indices = @transform_2, window_bounds = array<i64: 1, 120>}, {pipeline_mode = #tpu.pipeline_mode<synchronous>, transform_indices = @transform_3, window_bounds = array<i64: 120, 84>}, {pipeline_mode = #tpu.pipeline_mode<synchronous>, transform_indices = @transform_4, window_bounds = array<i64: 1, 84>}, {pipeline_mode = #tpu.pipeline_mode<synchronous>, transform_indices = @transform_5, window_bounds = array<i64: 84, 10>}, {pipeline_mode = #tpu.pipeline_mode<synchronous>, transform_indices = @transform_6, window_bounds = array<i64: 1, 10>}, {pipeline_mode = #tpu.pipeline_mode<synchronous>, transform_indices = @transform_7, window_bounds = array<i64: 2, 10>}]} {
    %c0 = arith.constant 0 : index
    %c0_0 = arith.constant 0 : index
    %0 = vector.load %arg1[%c0, %c0_0] : memref<2x3200xf32, #tpu.memory_space<vmem>>, vector<2x3200xf32>
    %c0_1 = arith.constant 0 : index
    %c0_2 = arith.constant 0 : index
    %1 = vector.load %arg2[%c0_1, %c0_2] : memref<3200x120xf32, #tpu.memory_space<vmem>>, vector<3200x120xf32>
    %cst = arith.constant dense<0.000000e+00> : vector<2x120xf32>
    %2 = tpu.matmul %0, %1, %cst {dimension_numbers = #tpu.dot_dimension_numbers<[1], [0], [0], [1], [0, 0, 1, 1], [], []>} : vector<2x3200xf32>, vector<3200x120xf32>, vector<2x120xf32> -> vector<2x120xf32>
    %c0_3 = arith.constant 0 : index
    %c0_4 = arith.constant 0 : index
    %3 = vector.load %arg3[%c0_3, %c0_4] : memref<1x120xf32, #tpu.memory_space<vmem>>, vector<1x120xf32>
    %4 = vector.broadcast %3 : vector<1x120xf32> to vector<2x120xf32>
    %5 = arith.addf %2, %4 : vector<2x120xf32>
    %cst_5 = arith.constant 0.000000e+00 : f32
    %6 = vector.broadcast %cst_5 : f32 to vector<2x120xf32>
    %7 = arith.maximumf %5, %6 : vector<2x120xf32>
    %c0_6 = arith.constant 0 : index
    %c0_7 = arith.constant 0 : index
    %8 = vector.load %arg4[%c0_6, %c0_7] : memref<120x84xf32, #tpu.memory_space<vmem>>, vector<120x84xf32>
    %cst_8 = arith.constant dense<0.000000e+00> : vector<2x84xf32>
    %9 = tpu.matmul %7, %8, %cst_8 {dimension_numbers = #tpu.dot_dimension_numbers<[1], [0], [0], [1], [0, 0, 1, 1], [], []>} : vector<2x120xf32>, vector<120x84xf32>, vector<2x84xf32> -> vector<2x84xf32>
    %c0_9 = arith.constant 0 : index
    %c0_10 = arith.constant 0 : index
    %10 = vector.load %arg5[%c0_9, %c0_10] : memref<1x84xf32, #tpu.memory_space<vmem>>, vector<1x84xf32>
    %11 = vector.broadcast %10 : vector<1x84xf32> to vector<2x84xf32>
    %12 = arith.addf %9, %11 : vector<2x84xf32>
    %cst_11 = arith.constant 0.000000e+00 : f32
    %13 = vector.broadcast %cst_11 : f32 to vector<2x84xf32>
    %14 = arith.maximumf %12, %13 : vector<2x84xf32>
    %c0_12 = arith.constant 0 : index
    %c0_13 = arith.constant 0 : index
    %15 = vector.load %arg6[%c0_12, %c0_13] : memref<84x10xf32, #tpu.memory_space<vmem>>, vector<84x10xf32>
    %cst_14 = arith.constant dense<0.000000e+00> : vector<2x10xf32>
    %16 = tpu.matmul %14, %15, %cst_14 {dimension_numbers = #tpu.dot_dimension_numbers<[1], [0], [0], [1], [0, 0, 1, 1], [], []>} : vector<2x84xf32>, vector<84x10xf32>, vector<2x10xf32> -> vector<2x10xf32>
    %c0_15 = arith.constant 0 : index
    %c0_16 = arith.constant 0 : index
    %17 = vector.load %arg7[%c0_15, %c0_16] : memref<1x10xf32, #tpu.memory_space<vmem>>, vector<1x10xf32>
    %18 = vector.broadcast %17 : vector<1x10xf32> to vector<2x10xf32>
    %19 = arith.addf %16, %18 : vector<2x10xf32>
    %c0_17 = arith.constant 0 : index
    %c0_18 = arith.constant 0 : index
    %20 = vector.load %arg8[%c0_17, %c0_18] : memref<2x10xf32, #tpu.memory_space<vmem>>, vector<2x10xf32>
    tpu.vector_store %arg8[%c0_17, %c0_18], %19 {strides = array<i32>} : memref<2x10xf32, #tpu.memory_space<vmem>>, vector<2x10xf32>,
    return
  }
  func.func @transform_0(%arg0: i32) -> (i32, i32) {
    %c0_i32 = arith.constant 0 : i32
    %c0_i32_0 = arith.constant 0 : i32
    %c0_i32_1 = arith.constant 0 : i32
    return %c0_i32, %c0_i32_0 : i32, i32
  }
  func.func @transform_1(%arg0: i32) -> (i32, i32) {
    %c0_i32 = arith.constant 0 : i32
    %c0_i32_0 = arith.constant 0 : i32
    %c0_i32_1 = arith.constant 0 : i32
    return %c0_i32, %c0_i32_0 : i32, i32
  }
  func.func @transform_2(%arg0: i32) -> (i32, i32) {
    %c0_i32 = arith.constant 0 : i32
    %c0_i32_0 = arith.constant 0 : i32
    %c0_i32_1 = arith.constant 0 : i32
    return %c0_i32, %c0_i32_0 : i32, i32
  }
  func.func @transform_3(%arg0: i32) -> (i32, i32) {
    %c0_i32 = arith.constant 0 : i32
    %c0_i32_0 = arith.constant 0 : i32
    %c0_i32_1 = arith.constant 0 : i32
    return %c0_i32, %c0_i32_0 : i32, i32
  }
  func.func @transform_4(%arg0: i32) -> (i32, i32) {
    %c0_i32 = arith.constant 0 : i32
    %c0_i32_0 = arith.constant 0 : i32
    %c0_i32_1 = arith.constant 0 : i32
    return %c0_i32, %c0_i32_0 : i32, i32
  }
  func.func @transform_5(%arg0: i32) -> (i32, i32) {
    %c0_i32 = arith.constant 0 : i32
    %c0_i32_0 = arith.constant 0 : i32
    %c0_i32_1 = arith.constant 0 : i32
    return %c0_i32, %c0_i32_0 : i32, i32
  }
  func.func @transform_6(%arg0: i32) -> (i32, i32) {
    %c0_i32 = arith.constant 0 : i32
    %c0_i32_0 = arith.constant 0 : i32
    %c0_i32_1 = arith.constant 0 : i32
    return %c0_i32, %c0_i32_0 : i32, i32
  }
  func.func @transform_7(%arg0: i32) -> (i32, i32) {
    %c0_i32 = arith.constant 0 : i32
    %c0_i32_0 = arith.constant 0 : i32
    %c0_i32_1 = arith.constant 0 : i32
    return %c0_i32, %c0_i32_0 : i32, i32
  }
}

</mosaic_0001>

<llo_original>
// kernel: lenet_forward.3
$region0: #{lenet_forward.3}
  #allocation0 [shape = 'u32[]', space=smem, size = 0x4, offset = 0x4, fixed_abs, tag = 'smem constant byte address 0x4 - core index']
  #allocation1 [shape = 'u32[144,128]{1,0:T(1,128)}', space=vmem, size = 0x12000, scoped, tag = 'internal scratch']
  %s0 = inlined_call_operand.vmem [shape: f32[392,128], index: 0, kind: input, shape index: {}]
  %s1 = inlined_call_operand.vmem [shape: f32[392,128], index: 1, kind: input, shape index: {}]
  %s2 = inlined_call_operand.vmem [shape: f32[392,128], index: 2, kind: input, shape index: {}]
  %s3 = inlined_call_operand.vmem [shape: f32[392,128], index: 3, kind: input, shape index: {}]
  %s4 = inlined_call_operand.vmem [shape: f32[128,128], index: 4, kind: input, shape index: {}]
  %s5 = inlined_call_operand.vmem [shape: f32[1,128], index: 5, kind: input, shape index: {}]
  %s6 = inlined_call_operand.vmem [shape: f32[392,128], index: 6, kind: output, shape index: {}]
  %s7 = sld [smem:[#allocation0]]
  $region34: #{lenet_forward.3} parent=0
    _
  %s9 = ssub.s32 1, %s7
  %s10 = scalar_select 0, %s9, %s7
  // Predicated region
  $region2: #{lenet_forward.3} parent=0 // pred_check
    _
  $region3: #{lenet_forward.3} parent=0 // pred_check_branch
    %12 = sbr.rel (0) target = $region5
  $region4: #{lenet_forward.3} parent=0 // pred_region
    _
  $region5: #{lenet_forward.3} parent=0 // pred_fallthru
    _
  // Predicated region
  $region6: #{lenet_forward.3} parent=0 // pred_check
    _
  $region7: #{lenet_forward.3} parent=0 // pred_check_branch
    %14 = sbr.rel (0) target = $region9
  $region8: #{lenet_forward.3} parent=0 // pred_region
    _
  $region9: #{lenet_forward.3} parent=0 // pred_fallthru
    _
  // Predicated region
  $region10: #{lenet_forward.3} parent=0 // pred_check
    _
  $region11: #{lenet_forward.3} parent=0 // pred_check_branch
    %16 = sbr.rel (0) target = $region13
  $region12: #{lenet_forward.3} parent=0 // pred_region
    _
  $region13: #{lenet_forward.3} parent=0 // pred_fallthru
    _
  // Predicated region
  $region14: #{lenet_forward.3} parent=0 // pred_check
    _
  $region15: #{lenet_forward.3} parent=0 // pred_check_branch
    %18 = sbr.rel (0) target = $region17
  $region16: #{lenet_forward.3} parent=0 // pred_region
    _
  $region17: #{lenet_forward.3} parent=0 // pred_fallthru
    _
  // Predicated region
  $region18: #{lenet_forward.3} parent=0 // pred_check
    _
  $region19: #{lenet_forward.3} parent=0 // pred_check_branch
    %20 = sbr.rel (0) target = $region21
  $region20: #{lenet_forward.3} parent=0 // pred_region
    _
  $region21: #{lenet_forward.3} parent=0 // pred_fallthru
    _
  // Predicated region
  $region22: #{lenet_forward.3} parent=0 // pred_check
    _
  $region23: #{lenet_forward.3} parent=0 // pred_check_branch
    %22 = sbr.rel (0) target = $region25
  $region24: #{lenet_forward.3} parent=0 // pred_region
    _
  $region25: #{lenet_forward.3} parent=0 // pred_fallthru
    _
  %v23 = vld [vmem:[%s4] sm:$0xff]
  %v24 = vld [vmem:[%s4 + $0x8] sm:$0xff]
  %v25 = vld [vmem:[%s4 + $0x10] sm:$0xff]
  %v26 = vld [vmem:[%s4 + $0x18] sm:$0xff]
  %v27 = vld [vmem:[%s4 + $0x20] sm:$0xff]
  %v28 = vld [vmem:[%s4 + $0x28] sm:$0xff]
  %v29 = vld [vmem:[%s4 + $0x30] sm:$0xff]
  %v30 = vld [vmem:[%s4 + $0x38] sm:$0xff]
  %v31 = vld [vmem:[%s4 + $0x40] sm:$0xff]
  %v32 = vld [vmem:[%s4 + $0x48] sm:$0xff]
  %v33 = vld [vmem:[%s4 + $0x50] sm:$0xff]
  %v34 = vld [vmem:[%s4 + $0x58] sm:$0xff]
  %v35 = vld [vmem:[%s4 + $0x60] sm:$0xff]
  %v36 = vld [vmem:[%s4 + $0x68] sm:$0xff]
  %v37 = vld [vmem:[%s4 + $0x70] sm:$0xff]
  %v38 = vld [vmem:[%s4 + $0x78] sm:$0xff]
  %v39 = vld [vmem:[%s0] sm:$0xff]
  %v40 = vld [vmem:[%s0 + $0x8] sm:$0xff]
  %v41 = vld [vmem:[%s0 + $0x10] sm:$0xff]
  %v42 = vld [vmem:[%s0 + $0x18] sm:$0xff]
  %v43 = vld [vmem:[%s0 + $0x20] sm:$0xff]
  %v44 = vld [vmem:[%s0 + $0x28] sm:$0xff]
  %v45 = vld [vmem:[%s0 + $0x30] sm:$0xff]
  %v46 = vld [vmem:[%s0 + $0x38] sm:$0xff]
  %v47 = vld [vmem:[%s0 + $0x40] sm:$0xff]
  %v48 = vld [vmem:[%s0 + $0x48] sm:$0xff]
  %v49 = vld [vmem:[%s0 + $0x50] sm:$0xff]
  %v50 = vld [vmem:[%s0 + $0x58] sm:$0xff]
  %v51 = vld [vmem:[%s0 + $0x60] sm:$0xff]
  %v52 = vld [vmem:[%s0 + $0x68] sm:$0xff]
  %v53 = vld [vmem:[%s0 + $0x70] sm:$0xff]
  %v54 = vld [vmem:[%s0 + $0x78] sm:$0xff]
  %v55 = vld [vmem:[%s0 + $0x80] sm:$0xff]
  %v56 = vld [vmem:[%s0 + $0x88] sm:$0xff]
  %v57 = vld [vmem:[%s0 + $0x90] sm:$0xff]
  %v58 = vld [vmem:[%s0 + $0x98] sm:$0xff]
  %v59 = vld [vmem:[%s0 + $0xa0] sm:$0xff]
  %v60 = vld [vmem:[%s0 + $0xa8] sm:$0xff]
  %v61 = vld [vmem:[%s0 + $0xb0] sm:$0xff]
  %v62 = vld [vmem:[%s0 + $0xb8] sm:$0xff]
  %v63 = vld [vmem:[%s0 + $0xc0] sm:$0xff]
  %v64 = vld [vmem:[%s0 + $0xc8] sm:$0xff]
  %v65 = vld [vmem:[%s0 + $0xd0] sm:$0xff]
  %v66 = vld [vmem:[%s0 + $0xd8] sm:$0xff]
  %v67 = vld [vmem:[%s0 + $0xe0] sm:$0xff]
  %v68 = vld [vmem:[%s0 + $0xe8] sm:$0xff]
  %v69 = vld [vmem:[%s0 + $0xf0] sm:$0xff]
  %v70 = vld [vmem:[%s0 + $0xf8] sm:$0xff]
  %v71 = vld [vmem:[%s0 + $0x100] sm:$0xff]
  %v72 = vld [vmem:[%s0 + $0x108] sm:$0xff]
  %v73 = vld [vmem:[%s0 + $0x110] sm:$0xff]
  %v74 = vld [vmem:[%s0 + $0x118] sm:$0xff]
  %v75 = vld [vmem:[%s0 + $0x120] sm:$0xff]
  %v76 = vld [vmem:[%s0 + $0x128] sm:$0xff]
  %v77 = vld [vmem:[%s0 + $0x130] sm:$0xff]
  %v78 = vld [vmem:[%s0 + $0x138] sm:$0xff]
  %v79 = vld [vmem:[%s0 + $0x140] sm:$0xff]
  %v80 = vld [vmem:[%s0 + $0x148] sm:$0xff]
  %v81 = vld [vmem:[%s0 + $0x150] sm:$0xff]
  %v82 = vld [vmem:[%s0 + $0x158] sm:$0xff]
  %v83 = vld [vmem:[%s0 + $0x160] sm:$0xff]
  %v84 = vld [vmem:[%s0 + $0x168] sm:$0xff]
  %v85 = vld [vmem:[%s0 + $0x170] sm:$0xff]
  %v86 = vld [vmem:[%s0 + $0x178] sm:$0xff]
  %v87 = vld [vmem:[%s0 + $0x180] sm:$0xff]
  %88 = vmatprep.subr.mxu0 0.0
  %89 = vmatpush1.msra.mxu0 %v38
  %90 = vmatprep.subr.mxu0 0.0
  %91 = vmatpush1.msra.mxu0 %v37
  %92 = vmatprep.subr.mxu0 0.0
  %93 = vmatpush1.msra.mxu0 %v36
  %94 = vmatprep.subr.mxu0 0.0
  %95 = vmatpush1.msra.mxu0 %v35
  %96 = vmatprep.subr.mxu0 0.0
  %97 = vmatpush1.msra.mxu0 %v34
  %98 = vmatprep.subr.mxu0 0.0
  %99 = vmatpush1.msra.mxu0 %v33
  %100 = vmatprep.subr.mxu0 0.0
  %101 = vmatpush1.msra.mxu0 %v32
  %102 = vmatprep.subr.mxu0 0.0
  %103 = vmatpush1.msra.mxu0 %v31
  %104 = vmatprep.subr.mxu0 0.0
  %105 = vmatpush1.msra.mxu0 %v30
  %106 = vmatprep.subr.mxu0 0.0
  %107 = vmatpush1.msra.mxu0 %v29
  %108 = vmatprep.subr.mxu0 0.0
  %109 = vmatpush1.msra.mxu0 %v28
  %110 = vmatprep.subr.mxu0 0.0
  %111 = vmatpush1.msra.mxu0 %v27
  %112 = vmatprep.subr.mxu0 0.0
  %113 = vmatpush1.msra.mxu0 %v26
  %114 = vmatprep.subr.mxu0 0.0
  %115 = vmatpush1.msra.mxu0 %v25
  %116 = vmatprep.subr.mxu0 0.0
  %117 = vmatpush1.msra.mxu0 %v24
  %118 = vmatprep.subr.mxu0 0.0
  %119 = vmatpush1.msra.mxu0 %v23
  %120 = vmatprep.subr.mxu0 0.0
  %121 = vmatpush2.msra.mxu0 0.0
  %122 = vmatprep.subr.mxu0 0.0
  %123 = vmatpush2.msra.mxu0 0.0
  %124 = vmatprep.subr.mxu0 0.0
  %125 = vmatpush2.msra.mxu0 0.0
  %126 = vmatprep.subr.mxu0 0.0
  %127 = vmatpush2.msra.mxu0 0.0
  %128 = vmatprep.subr.mxu0 0.0
  %129 = vmatpush2.msra.mxu0 0.0
  %130 = vmatprep.subr.mxu0 0.0
  %131 = vmatpush2.msra.mxu0 0.0
  %132 = vmatprep.subr.mxu0 0.0
  %133 = vmatpush2.msra.mxu0 0.0
  %134 = vmatprep.subr.mxu0 0.0
  %135 = vmatpush2.msra.mxu0 0.0
  %136 = vmatprep.subr.mxu0 0.0
  %137 = vmatpush2.msra.mxu0 0.0
  %138 = vmatprep.subr.mxu0 0.0
  %139 = vmatpush2.msra.mxu0 0.0
  %140 = vmatprep.subr.mxu0 0.0
  %141 = vmatpush2.msra.mxu0 0.0
  %142 = vmatprep.subr.mxu0 0.0
  %143 = vmatpush2.msra.mxu0 0.0
  %144 = vmatprep.subr.mxu0 0.0
  %145 = vmatpush2.msra.mxu0 0.0
  %146 = vmatprep.subr.mxu0 0.0
  %147 = vmatpush2.msra.mxu0 0.0
  %148 = vmatprep.subr.mxu0 0.0
  %149 = vmatpush2.msra.mxu0 0.0
  %150 = vmatprep.subr.mxu0 0.0
  %151 = vmatpush2.msra.mxu0 0.0
  %152 = vmatprep.mubr.f32.mxu0 0.0
  %153 = vmatmul.mubr.f32.gmra.mxu0 %v39
  %v154 = vpop.f32.mrf.mxu0
  %v155 = vadd.f32 0.0, %v154
  %v156 = vpop.f32.mrf.mxu0
  %157 = vmatprep.mubr.f32.mxu0 0.0
  %158 = vmatmul.mubr.f32.gmra.mxu0 %v40
  %v159 = vpop.f32.mrf.mxu0
  %v160 = vadd.f32 0.0, %v159
  %v161 = vpop.f32.mrf.mxu0
  %162 = vmatprep.mubr.f32.mxu0 0.0
  %163 = vmatmul.mubr.f32.gmra.mxu0 %v41
  %v164 = vpop.f32.mrf.mxu0
  %v165 = vadd.f32 0.0, %v164
  %v166 = vpop.f32.mrf.mxu0
  %167 = vmatprep.mubr.f32.mxu0 0.0
  %168 = vmatmul.mubr.f32.gmra.mxu0 %v42
  %v169 = vpop.f32.mrf.mxu0
  %v170 = vadd.f32 0.0, %v169
  %v171 = vpop.f32.mrf.mxu0
  %172 = vmatprep.mubr.f32.mxu0 0.0
  %173 = vmatmul.mubr.f32.gmra.mxu0 %v43
  %v174 = vpop.f32.mrf.mxu0
  %v175 = vadd.f32 0.0, %v174
  %v176 = vpop.f32.mrf.mxu0
  %177 = vmatprep.mubr.f32.mxu0 0.0
  %178 = vmatmul.mubr.f32.gmra.mxu0 %v44
  %v179 = vpop.f32.mrf.mxu0
  %v180 = vadd.f32 0.0, %v179
  %v181 = vpop.f32.mrf.mxu0
  %182 = vmatprep.mubr.f32.mxu0 0.0
  %183 = vmatmul.mubr.f32.gmra.mxu0 %v45
  %v184 = vpop.f32.mrf.mxu0
  %v185 = vadd.f32 0.0, %v184
  %v186 = vpop.f32.mrf.mxu0
  %187 = vmatprep.mubr.f32.mxu0 0.0
  %188 = vmatmul.mubr.f32.gmra.mxu0 %v46
  %v189 = vpop.f32.mrf.mxu0
  %v190 = vadd.f32 0.0, %v189
  %v191 = vpop.f32.mrf.mxu0
  %192 = vmatprep.mubr.f32.mxu0 0.0
  %193 = vmatmul.mubr.f32.gmra.mxu0 %v47
  %v194 = vpop.f32.mrf.mxu0
  %v195 = vadd.f32 0.0, %v194
  %v196 = vpop.f32.mrf.mxu0
  %197 = vmatprep.mubr.f32.mxu0 0.0
  %198 = vmatmul.mubr.f32.gmra.mxu0 %v48
  %v199 = vpop.f32.mrf.mxu0
  %v200 = vadd.f32 0.0, %v199
  %v201 = vpop.f32.mrf.mxu0
  %202 = vmatprep.mubr.f32.mxu0 0.0
  %203 = vmatmul.mubr.f32.gmra.mxu0 %v49
  %v204 = vpop.f32.mrf.mxu0
  %v205 = vadd.f32 0.0, %v204
  %v206 = vpop.f32.mrf.mxu0
  %207 = vmatprep.mubr.f32.mxu0 0.0
  %208 = vmatmul.mubr.f32.gmra.mxu0 %v50
  %v209 = vpop.f32.mrf.mxu0
  %v210 = vadd.f32 0.0, %v209
  %v211 = vpop.f32.mrf.mxu0
  %212 = vmatprep.mubr.f32.mxu0 0.0
  %213 = vmatmul.mubr.f32.gmra.mxu0 %v51
  %v214 = vpop.f32.mrf.mxu0
  %v215 = vadd.f32 0.0, %v214
  %v216 = vpop.f32.mrf.mxu0
  %217 = vmatprep.mubr.f32.mxu0 0.0
  %218 = vmatmul.mubr.f32.gmra.mxu0 %v52
  %v219 = vpop.f32.mrf.mxu0
  %v220 = vadd.f32 0.0, %v219
  %v221 = vpop.f32.mrf.mxu0
  %222 = vmatprep.mubr.f32.mxu0 0.0
  %223 = vmatmul.mubr.f32.gmra.mxu0 %v53
  %v224 = vpop.f32.mrf.mxu0
  %v225 = vadd.f32 0.0, %v224
  %v226 = vpop.f32.mrf.mxu0
  %227 = vmatprep.mubr.f32.mxu0 0.0
  %228 = vmatmul.mubr.f32.gmra.mxu0 %v54
  %v229 = vpop.f32.mrf.mxu0
  %v230 = vadd.f32 0.0, %v229
  %v231 = vpop.f32.mrf.mxu0
  %232 = vmatprep.mubr.f32.mxu0 0.0
  %233 = vmatmul.mubr.f32.gmra.mxu0 %v55
  %v234 = vpop.f32.mrf.mxu0
  %v235 = vadd.f32 0.0, %v234
  %v236 = vpop.f32.mrf.mxu0
  %237 = vmatprep.mubr.f32.mxu0 0.0
  %238 = vmatmul.mubr.f32.gmra.mxu0 %v56
  %v239 = vpop.f32.mrf.mxu0
  %v240 = vadd.f32 0.0, %v239
  %v241 = vpop.f32.mrf.mxu0
  %242 = vmatprep.mubr.f32.mxu0 0.0
  %243 = vmatmul.mubr.f32.gmra.mxu0 %v57
  %v244 = vpop.f32.mrf.mxu0
  %v245 = vadd.f32 0.0, %v244
  %v246 = vpop.f32.mrf.mxu0
  %247 = vmatprep.mubr.f32.mxu0 0.0
  %248 = vmatmul.mubr.f32.gmra.mxu0 %v58
  %v249 = vpop.f32.mrf.mxu0
  %v250 = vadd.f32 0.0, %v249
  %v251 = vpop.f32.mrf.mxu0
  %252 = vmatprep.mubr.f32.mxu0 0.0
  %253 = vmatmul.mubr.f32.gmra.mxu0 %v59
  %v254 = vpop.f32.mrf.mxu0
  %v255 = vadd.f32 0.0, %v254
  %v256 = vpop.f32.mrf.mxu0
  %257 = vmatprep.mubr.f32.mxu0 0.0
  %258 = vmatmul.mubr.f32.gmra.mxu0 %v60
  %v259 = vpop.f32.mrf.mxu0
  %v260 = vadd.f32 0.0, %v259
  %v261 = vpop.f32.mrf.mxu0
  %262 = vmatprep.mubr.f32.mxu0 0.0
  %263 = vmatmul.mubr.f32.gmra.mxu0 %v61
  %v264 = vpop.f32.mrf.mxu0
  %v265 = vadd.f32 0.0, %v264
  %v266 = vpop.f32.mrf.mxu0
  %267 = vmatprep.mubr.f32.mxu0 0.0
  %268 = vmatmul.mubr.f32.gmra.mxu0 %v62
  %v269 = vpop.f32.mrf.mxu0
  %v270 = vadd.f32 0.0, %v269
  %v271 = vpop.f32.mrf.mxu0
  %272 = vmatprep.mubr.f32.mxu0 0.0
  %273 = vmatmul.mubr.f32.gmra.mxu0 %v63
  %v274 = vpop.f32.mrf.mxu0
  %v275 = vadd.f32 0.0, %v274
  %v276 = vpop.f32.mrf.mxu0
  %277 = vmatprep.mubr.f32.mxu0 0.0
  %278 = vmatmul.mubr.f32.gmra.mxu0 %v64
  %v279 = vpop.f32.mrf.mxu0
  %v280 = vadd.f32 0.0, %v279
  %v281 = vpop.f32.mrf.mxu0
  %282 = vmatprep.mubr.f32.mxu0 0.0
  %283 = vmatmul.mubr.f32.gmra.mxu0 %v65
  %v284 = vpop.f32.mrf.mxu0
  %v285 = vadd.f32 0.0, %v284
  %v286 = vpop.f32.mrf.mxu0
  %287 = vmatprep.mubr.f32.mxu0 0.0
  %288 = vmatmul.mubr.f32.gmra.mxu0 %v66
  %v289 = vpop.f32.mrf.mxu0
  %v290 = vadd.f32 0.0, %v289
  %v291 = vpop.f32.mrf.mxu0
  %292 = vmatprep.mubr.f32.mxu0 0.0
  %293 = vmatmul.mubr.f32.gmra.mxu0 %v67
  %v294 = vpop.f32.mrf.mxu0
  %v295 = vadd.f32 0.0, %v294
  %v296 = vpop.f32.mrf.mxu0
  %297 = vmatprep.mubr.f32.mxu0 0.0
  %298 = vmatmul.mubr.f32.gmra.mxu0 %v68
  %v299 = vpop.f32.mrf.mxu0
  %v300 = vadd.f32 0.0, %v299
  %v301 = vpop.f32.mrf.mxu0
  %302 = vmatprep.mubr.f32.mxu0 0.0
  %303 = vmatmul.mubr.f32.gmra.mxu0 %v69
  %v304 = vpop.f32.mrf.mxu0
  %v305 = vadd.f32 0.0, %v304
  %v306 = vpop.f32.mrf.mxu0
  %307 = vmatprep.mubr.f32.mxu0 0.0
  %308 = vmatmul.mubr.f32.gmra.mxu0 %v70
  %v309 = vpop.f32.mrf.mxu0
  %v310 = vadd.f32 0.0, %v309
  %v311 = vpop.f32.mrf.mxu0
  %312 = vmatprep.mubr.f32.mxu0 0.0
  %313 = vmatmul.mubr.f32.gmra.mxu0 %v71
  %v314 = vpop.f32.mrf.mxu0
  %v315 = vadd.f32 0.0, %v314
  %v316 = vpop.f32.mrf.mxu0
  %317 = vmatprep.mubr.f32.mxu0 0.0
  %318 = vmatmul.mubr.f32.gmra.mxu0 %v72
  %v319 = vpop.f32.mrf.mxu0
  %v320 = vadd.f32 0.0, %v319
  %v321 = vpop.f32.mrf.mxu0
  %322 = vmatprep.mubr.f32.mxu0 0.0
  %323 = vmatmul.mubr.f32.gmra.mxu0 %v73
  %v324 = vpop.f32.mrf.mxu0
  %v325 = vadd.f32 0.0, %v324
  %v326 = vpop.f32.mrf.mxu0
  %327 = vmatprep.mubr.f32.mxu0 0.0
  %328 = vmatmul.mubr.f32.gmra.mxu0 %v74
  %v329 = vpop.f32.mrf.mxu0
  %v330 = vadd.f32 0.0, %v329
  %v331 = vpop.f32.mrf.mxu0
  %332 = vmatprep.mubr.f32.mxu0 0.0
  %333 = vmatmul.mubr.f32.gmra.mxu0 %v75
  %v334 = vpop.f32.mrf.mxu0
  %v335 = vadd.f32 0.0, %v334
  %v336 = vpop.f32.mrf.mxu0
  %337 = vmatprep.mubr.f32.mxu0 0.0
  %338 = vmatmul.mubr.f32.gmra.mxu0 %v76
  %v339 = vpop.f32.mrf.mxu0
  %v340 = vadd.f32 0.0, %v339
  %v341 = vpop.f32.mrf.mxu0
  %342 = vmatprep.mubr.f32.mxu0 0.0
  %343 = vmatmul.mubr.f32.gmra.mxu0 %v77
  %v344 = vpop.f32.mrf.mxu0
  %v345 = vadd.f32 0.0, %v344
  %v346 = vpop.f32.mrf.mxu0
  %347 = vmatprep.mubr.f32.mxu0 0.0
  %348 = vmatmul.mubr.f32.gmra.mxu0 %v78
  %v349 = vpop.f32.mrf.mxu0
  %v350 = vadd.f32 0.0, %v349
  %v351 = vpop.f32.mrf.mxu0
  %352 = vmatprep.mubr.f32.mxu0 0.0
  %353 = vmatmul.mubr.f32.gmra.mxu0 %v79
  %v354 = vpop.f32.mrf.mxu0
  %v355 = vadd.f32 0.0, %v354
  %v356 = vpop.f32.mrf.mxu0
  %357 = vmatprep.mubr.f32.mxu0 0.0
  %358 = vmatmul.mubr.f32.gmra.mxu0 %v80
  %v359 = vpop.f32.mrf.mxu0
  %v360 = vadd.f32 0.0, %v359
  %v361 = vpop.f32.mrf.mxu0
  %362 = vmatprep.mubr.f32.mxu0 0.0
  %363 = vmatmul.mubr.f32.gmra.mxu0 %v81
  %v364 = vpop.f32.mrf.mxu0
  %v365 = vadd.f32 0.0, %v364
  %v366 = vpop.f32.mrf.mxu0
  %367 = vmatprep.mubr.f32.mxu0 0.0
  %368 = vmatmul.mubr.f32.gmra.mxu0 %v82
  %v369 = vpop.f32.mrf.mxu0
  %v370 = vadd.f32 0.0, %v369
  %v371 = vpop.f32.mrf.mxu0
  %372 = vmatprep.mubr.f32.mxu0 0.0
  %373 = vmatmul.mubr.f32.gmra.mxu0 %v83
  %v374 = vpop.f32.mrf.mxu0
  %v375 = vadd.f32 0.0, %v374
  %v376 = vpop.f32.mrf.mxu0
  %377 = vmatprep.mubr.f32.mxu0 0.0
  %378 = vmatmul.mubr.f32.gmra.mxu0 %v84
  %v379 = vpop.f32.mrf.mxu0
  %v380 = vadd.f32 0.0, %v379
  %v381 = vpop.f32.mrf.mxu0
  %382 = vmatprep.mubr.f32.mxu0 0.0
  %383 = vmatmul.mubr.f32.gmra.mxu0 %v85
  %v384 = vpop.f32.mrf.mxu0
  %v385 = vadd.f32 0.0, %v384
  %v386 = vpop.f32.mrf.mxu0
  %387 = vmatprep.mubr.f32.mxu0 0.0
  %388 = vmatmul.mubr.f32.gmra.mxu0 %v86
  %v389 = vpop.f32.mrf.mxu0
  %v390 = vadd.f32 0.0, %v389
  %v391 = vpop.f32.mrf.mxu0
  %392 = vmatprep.mubr.f32.mxu0 0.0
  %393 = vmatmul.mubr.f32.gmra.mxu0 %v87
  %v394 = vpop.f32.mrf.mxu0
  %v395 = vadd.f32 0.0, %v394
  %v396 = vpop.f32.mrf.mxu0
  %397 = vdwg.mxu0
  %v398 = vld [vmem:[%s1] sm:$0xff]
  %v399 = vld [vmem:[%s1 + $0x8] sm:$0xff]
  %v400 = vld [vmem:[%s1 + $0x10] sm:$0xff]
  %v401 = vld [vmem:[%s1 + $0x18] sm:$0xff]
  %v402 = vld [vmem:[%s1 + $0x20] sm:$0xff]
  %v403 = vld [vmem:[%s1 + $0x28] sm:$0xff]
  %v404 = vld [vmem:[%s1 + $0x30] sm:$0xff]
  %v405 = vld [vmem:[%s1 + $0x38] sm:$0xff]
  %v406 = vld [vmem:[%s1 + $0x40] sm:$0xff]
  %v407 = vld [vmem:[%s1 + $0x48] sm:$0xff]
  %v408 = vld [vmem:[%s1 + $0x50] sm:$0xff]
  %v409 = vld [vmem:[%s1 + $0x58] sm:$0xff]
  %v410 = vld [vmem:[%s1 + $0x60] sm:$0xff]
  %v411 = vld [vmem:[%s1 + $0x68] sm:$0xff]
  %v412 = vld [vmem:[%s1 + $0x70] sm:$0xff]
  %v413 = vld [vmem:[%s1 + $0x78] sm:$0xff]
  %v414 = vld [vmem:[%s1 + $0x80] sm:$0xff]
  %v415 = vld [vmem:[%s1 + $0x88] sm:$0xff]
  %v416 = vld [vmem:[%s1 + $0x90] sm:$0xff]
  %v417 = vld [vmem:[%s1 + $0x98] sm:$0xff]
  %v418 = vld [vmem:[%s1 + $0xa0] sm:$0xff]
  %v419 = vld [vmem:[%s1 + $0xa8] sm:$0xff]
  %v420 = vld [vmem:[%s1 + $0xb0] sm:$0xff]
  %v421 = vld [vmem:[%s1 + $0xb8] sm:$0xff]
  %v422 = vld [vmem:[%s1 + $0xc0] sm:$0xff]
  %v423 = vld [vmem:[%s1 + $0xc8] sm:$0xff]
  %v424 = vld [vmem:[%s1 + $0xd0] sm:$0xff]
  %v425 = vld [vmem:[%s1 + $0xd8] sm:$0xff]
  %v426 = vld [vmem:[%s1 + $0xe0] sm:$0xff]
  %v427 = vld [vmem:[%s1 + $0xe8] sm:$0xff]
  %v428 = vld [vmem:[%s1 + $0xf0] sm:$0xff]
  %v429 = vld [vmem:[%s1 + $0xf8] sm:$0xff]
  %v430 = vld [vmem:[%s1 + $0x100] sm:$0xff]
  %v431 = vld [vmem:[%s1 + $0x108] sm:$0xff]
  %v432 = vld [vmem:[%s1 + $0x110] sm:$0xff]
  %v433 = vld [vmem:[%s1 + $0x118] sm:$0xff]
  %v434 = vld [vmem:[%s1 + $0x120] sm:$0xff]
  %v435 = vld [vmem:[%s1 + $0x128] sm:$0xff]
  %v436 = vld [vmem:[%s1 + $0x130] sm:$0xff]
  %v437 = vld [vmem:[%s1 + $0x138] sm:$0xff]
  %v438 = vld [vmem:[%s1 + $0x140] sm:$0xff]
  %v439 = vld [vmem:[%s1 + $0x148] sm:$0xff]
  %v440 = vld [vmem:[%s1 + $0x150] sm:$0xff]
  %v441 = vld [vmem:[%s1 + $0x158] sm:$0xff]
  %v442 = vld [vmem:[%s1 + $0x160] sm:$0xff]
  %v443 = vld [vmem:[%s1 + $0x168] sm:$0xff]
  %v444 = vld [vmem:[%s1 + $0x170] sm:$0xff]
  %v445 = vld [vmem:[%s1 + $0x178] sm:$0xff]
  %v446 = vld [vmem:[%s1 + $0x180] sm:$0xff]
  %447 = vmatprep.subr.mxu0 0.0
  %448 = vmatpush1.msra.mxu0 %v38
  %449 = vmatprep.subr.mxu0 0.0
  %450 = vmatpush1.msra.mxu0 %v37
  %451 = vmatprep.subr.mxu0 0.0
  %452 = vmatpush1.msra.mxu0 %v36
  %453 = vmatprep.subr.mxu0 0.0
  %454 = vmatpush1.msra.mxu0 %v35
  %455 = vmatprep.subr.mxu0 0.0
  %456 = vmatpush1.msra.mxu0 %v34
  %457 = vmatprep.subr.mxu0 0.0
  %458 = vmatpush1.msra.mxu0 %v33
  %459 = vmatprep.subr.mxu0 0.0
  %460 = vmatpush1.msra.mxu0 %v32
  %461 = vmatprep.subr.mxu0 0.0
  %462 = vmatpush1.msra.mxu0 %v31
  %463 = vmatprep.subr.mxu0 0.0
  %464 = vmatpush1.msra.mxu0 %v30
  %465 = vmatprep.subr.mxu0 0.0
  %466 = vmatpush1.msra.mxu0 %v29
  %467 = vmatprep.subr.mxu0 0.0
  %468 = vmatpush1.msra.mxu0 %v28
  %469 = vmatprep.subr.mxu0 0.0
  %470 = vmatpush1.msra.mxu0 %v27
  %471 = vmatprep.subr.mxu0 0.0
  %472 = vmatpush1.msra.mxu0 %v26
  %473 = vmatprep.subr.mxu0 0.0
  %474 = vmatpush1.msra.mxu0 %v25
  %475 = vmatprep.subr.mxu0 0.0
  %476 = vmatpush1.msra.mxu0 %v24
  %477 = vmatprep.subr.mxu0 0.0
  %478 = vmatpush1.msra.mxu0 %v23
  %479 = vmatprep.subr.mxu0 0.0
  %480 = vmatpush2.msra.mxu0 0.0
  %481 = vmatprep.subr.mxu0 0.0
  %482 = vmatpush2.msra.mxu0 0.0
  %483 = vmatprep.subr.mxu0 0.0
  %484 = vmatpush2.msra.mxu0 0.0
  %485 = vmatprep.subr.mxu0 0.0
  %486 = vmatpush2.msra.mxu0 0.0
  %487 = vmatprep.subr.mxu0 0.0
  %488 = vmatpush2.msra.mxu0 0.0
  %489 = vmatprep.subr.mxu0 0.0
  %490 = vmatpush2.msra.mxu0 0.0
  %491 = vmatprep.subr.mxu0 0.0
  %492 = vmatpush2.msra.mxu0 0.0
  %493 = vmatprep.subr.mxu0 0.0
  %494 = vmatpush2.msra.mxu0 0.0
  %495 = vmatprep.subr.mxu0 0.0
  %496 = vmatpush2.msra.mxu0 0.0
  %497 = vmatprep.subr.mxu0 0.0
  %498 = vmatpush2.msra.mxu0 0.0
  %499 = vmatprep.subr.mxu0 0.0
  %500 = vmatpush2.msra.mxu0 0.0
  %501 = vmatprep.subr.mxu0 0.0
  %502 = vmatpush2.msra.mxu0 0.0
  %503 = vmatprep.subr.mxu0 0.0
  %504 = vmatpush2.msra.mxu0 0.0
  %505 = vmatprep.subr.mxu0 0.0
  %506 = vmatpush2.msra.mxu0 0.0
  %507 = vmatprep.subr.mxu0 0.0
  %508 = vmatpush2.msra.mxu0 0.0
  %509 = vmatprep.subr.mxu0 0.0
  %510 = vmatpush2.msra.mxu0 0.0
  %511 = vmatprep.mubr.f32.mxu0 0.0
  %512 = vmatmul.mubr.f32.gmra.mxu0 %v398
  %v513 = vpop.f32.mrf.mxu0
  %v514 = vadd.f32 0.0, %v513
  %v515 = vpop.f32.mrf.mxu0
  %516 = vmatprep.mubr.f32.mxu0 0.0
  %517 = vmatmul.mubr.f32.gmra.mxu0 %v399
  %v518 = vpop.f32.mrf.mxu0
  %v519 = vadd.f32 0.0, %v518
  %v520 = vpop.f32.mrf.mxu0
  %521 = vmatprep.mubr.f32.mxu0 0.0
  %522 = vmatmul.mubr.f32.gmra.mxu0 %v400
  %v523 = vpop.f32.mrf.mxu0
  %v524 = vadd.f32 0.0, %v523
  %v525 = vpop.f32.mrf.mxu0
  %526 = vmatprep.mubr.f32.mxu0 0.0
  %527 = vmatmul.mubr.f32.gmra.mxu0 %v401
  %v528 = vpop.f32.mrf.mxu0
  %v529 = vadd.f32 0.0, %v528
  %v530 = vpop.f32.mrf.mxu0
  %531 = vmatprep.mubr.f32.mxu0 0.0
  %532 = vmatmul.mubr.f32.gmra.mxu0 %v402
  %v533 = vpop.f32.mrf.mxu0
  %v534 = vadd.f32 0.0, %v533
  %v535 = vpop.f32.mrf.mxu0
  %536 = vmatprep.mubr.f32.mxu0 0.0
  %537 = vmatmul.mubr.f32.gmra.mxu0 %v403
  %v538 = vpop.f32.mrf.mxu0
  %v539 = vadd.f32 0.0, %v538
  %v540 = vpop.f32.mrf.mxu0
  %541 = vmatprep.mubr.f32.mxu0 0.0
  %542 = vmatmul.mubr.f32.gmra.mxu0 %v404
  %v543 = vpop.f32.mrf.mxu0
  %v544 = vadd.f32 0.0, %v543
  %v545 = vpop.f32.mrf.mxu0
  %546 = vmatprep.mubr.f32.mxu0 0.0
  %547 = vmatmul.mubr.f32.gmra.mxu0 %v405
  %v548 = vpop.f32.mrf.mxu0
  %v549 = vadd.f32 0.0, %v548
  %v550 = vpop.f32.mrf.mxu0
  %551 = vmatprep.mubr.f32.mxu0 0.0
  %552 = vmatmul.mubr.f32.gmra.mxu0 %v406
  %v553 = vpop.f32.mrf.mxu0
  %v554 = vadd.f32 0.0, %v553
  %v555 = vpop.f32.mrf.mxu0
  %556 = vmatprep.mubr.f32.mxu0 0.0
  %557 = vmatmul.mubr.f32.gmra.mxu0 %v407
  %v558 = vpop.f32.mrf.mxu0
  %v559 = vadd.f32 0.0, %v558
  %v560 = vpop.f32.mrf.mxu0
  %561 = vmatprep.mubr.f32.mxu0 0.0
  %562 = vmatmul.mubr.f32.gmra.mxu0 %v408
  %v563 = vpop.f32.mrf.mxu0
  %v564 = vadd.f32 0.0, %v563
  %v565 = vpop.f32.mrf.mxu0
  %566 = vmatprep.mubr.f32.mxu0 0.0
  %567 = vmatmul.mubr.f32.gmra.mxu0 %v409
  %v568 = vpop.f32.mrf.mxu0
  %v569 = vadd.f32 0.0, %v568
  %v570 = vpop.f32.mrf.mxu0
  %571 = vmatprep.mubr.f32.mxu0 0.0
  %572 = vmatmul.mubr.f32.gmra.mxu0 %v410
  %v573 = vpop.f32.mrf.mxu0
  %v574 = vadd.f32 0.0, %v573
  %v575 = vpop.f32.mrf.mxu0
  %576 = vmatprep.mubr.f32.mxu0 0.0
  %577 = vmatmul.mubr.f32.gmra.mxu0 %v411
  %v578 = vpop.f32.mrf.mxu0
  %v579 = vadd.f32 0.0, %v578
  %v580 = vpop.f32.mrf.mxu0
  %581 = vmatprep.mubr.f32.mxu0 0.0
  %582 = vmatmul.mubr.f32.gmra.mxu0 %v412
  %v583 = vpop.f32.mrf.mxu0
  %v584 = vadd.f32 0.0, %v583
  %v585 = vpop.f32.mrf.mxu0
  %586 = vmatprep.mubr.f32.mxu0 0.0
  %587 = vmatmul.mubr.f32.gmra.mxu0 %v413
  %v588 = vpop.f32.mrf.mxu0
  %v589 = vadd.f32 0.0, %v588
  %v590 = vpop.f32.mrf.mxu0
  %591 = vmatprep.mubr.f32.mxu0 0.0
  %592 = vmatmul.mubr.f32.gmra.mxu0 %v414
  %v593 = vpop.f32.mrf.mxu0
  %v594 = vadd.f32 0.0, %v593
  %v595 = vpop.f32.mrf.mxu0
  %596 = vmatprep.mubr.f32.mxu0 0.0
  %597 = vmatmul.mubr.f32.gmra.mxu0 %v415
  %v598 = vpop.f32.mrf.mxu0
  %v599 = vadd.f32 0.0, %v598
  %v600 = vpop.f32.mrf.mxu0
  %601 = vmatprep.mubr.f32.mxu0 0.0
  %602 = vmatmul.mubr.f32.gmra.mxu0 %v416
  %v603 = vpop.f32.mrf.mxu0
  %v604 = vadd.f32 0.0, %v603
  %v605 = vpop.f32.mrf.mxu0
  %606 = vmatprep.mubr.f32.mxu0 0.0
  %607 = vmatmul.mubr.f32.gmra.mxu0 %v417
  %v608 = vpop.f32.mrf.mxu0
  %v609 = vadd.f32 0.0, %v608
  %v610 = vpop.f32.mrf.mxu0
  %611 = vmatprep.mubr.f32.mxu0 0.0
  %612 = vmatmul.mubr.f32.gmra.mxu0 %v418
  %v613 = vpop.f32.mrf.mxu0
  %v614 = vadd.f32 0.0, %v613
  %v615 = vpop.f32.mrf.mxu0
  %616 = vmatprep.mubr.f32.mxu0 0.0
  %617 = vmatmul.mubr.f32.gmra.mxu0 %v419
  %v618 = vpop.f32.mrf.mxu0
  %v619 = vadd.f32 0.0, %v618
  %v620 = vpop.f32.mrf.mxu0
  %621 = vmatprep.mubr.f32.mxu0 0.0
  %622 = vmatmul.mubr.f32.gmra.mxu0 %v420
  %v623 = vpop.f32.mrf.mxu0
  %v624 = vadd.f32 0.0, %v623
  %v625 = vpop.f32.mrf.mxu0
  %626 = vmatprep.mubr.f32.mxu0 0.0
  %627 = vmatmul.mubr.f32.gmra.mxu0 %v421
  %v628 = vpop.f32.mrf.mxu0
  %v629 = vadd.f32 0.0, %v628
  %v630 = vpop.f32.mrf.mxu0
  %631 = vmatprep.mubr.f32.mxu0 0.0
  %632 = vmatmul.mubr.f32.gmra.mxu0 %v422
  %v633 = vpop.f32.mrf.mxu0
  %v634 = vadd.f32 0.0, %v633
  %v635 = vpop.f32.mrf.mxu0
  %636 = vmatprep.mubr.f32.mxu0 0.0
  %637 = vmatmul.mubr.f32.gmra.mxu0 %v423
  %v638 = vpop.f32.mrf.mxu0
  %v639 = vadd.f32 0.0, %v638
  %v640 = vpop.f32.mrf.mxu0
  %641 = vmatprep.mubr.f32.mxu0 0.0
  %642 = vmatmul.mubr.f32.gmra.mxu0 %v424
  %v643 = vpop.f32.mrf.mxu0
  %v644 = vadd.f32 0.0, %v643
  %v645 = vpop.f32.mrf.mxu0
  %646 = vmatprep.mubr.f32.mxu0 0.0
  %647 = vmatmul.mubr.f32.gmra.mxu0 %v425
  %v648 = vpop.f32.mrf.mxu0
  %v649 = vadd.f32 0.0, %v648
  %v650 = vpop.f32.mrf.mxu0
  %651 = vmatprep.mubr.f32.mxu0 0.0
  %652 = vmatmul.mubr.f32.gmra.mxu0 %v426
  %v653 = vpop.f32.mrf.mxu0
  %v654 = vadd.f32 0.0, %v653
  %v655 = vpop.f32.mrf.mxu0
  %656 = vmatprep.mubr.f32.mxu0 0.0
  %657 = vmatmul.mubr.f32.gmra.mxu0 %v427
  %v658 = vpop.f32.mrf.mxu0
  %v659 = vadd.f32 0.0, %v658
  %v660 = vpop.f32.mrf.mxu0
  %661 = vmatprep.mubr.f32.mxu0 0.0
  %662 = vmatmul.mubr.f32.gmra.mxu0 %v428
  %v663 = vpop.f32.mrf.mxu0
  %v664 = vadd.f32 0.0, %v663
  %v665 = vpop.f32.mrf.mxu0
  %666 = vmatprep.mubr.f32.mxu0 0.0
  %667 = vmatmul.mubr.f32.gmra.mxu0 %v429
  %v668 = vpop.f32.mrf.mxu0
  %v669 = vadd.f32 0.0, %v668
  %v670 = vpop.f32.mrf.mxu0
  %671 = vmatprep.mubr.f32.mxu0 0.0
  %672 = vmatmul.mubr.f32.gmra.mxu0 %v430
  %v673 = vpop.f32.mrf.mxu0
  %v674 = vadd.f32 0.0, %v673
  %v675 = vpop.f32.mrf.mxu0
  %676 = vmatprep.mubr.f32.mxu0 0.0
  %677 = vmatmul.mubr.f32.gmra.mxu0 %v431
  %v678 = vpop.f32.mrf.mxu0
  %v679 = vadd.f32 0.0, %v678
  %v680 = vpop.f32.mrf.mxu0
  %681 = vmatprep.mubr.f32.mxu0 0.0
  %682 = vmatmul.mubr.f32.gmra.mxu0 %v432
  %v683 = vpop.f32.mrf.mxu0
  %v684 = vadd.f32 0.0, %v683
  %v685 = vpop.f32.mrf.mxu0
  %686 = vmatprep.mubr.f32.mxu0 0.0
  %687 = vmatmul.mubr.f32.gmra.mxu0 %v433
  %v688 = vpop.f32.mrf.mxu0
  %v689 = vadd.f32 0.0, %v688
  %v690 = vpop.f32.mrf.mxu0
  %691 = vmatprep.mubr.f32.mxu0 0.0
  %692 = vmatmul.mubr.f32.gmra.mxu0 %v434
  %v693 = vpop.f32.mrf.mxu0
  %v694 = vadd.f32 0.0, %v693
  %v695 = vpop.f32.mrf.mxu0
  %696 = vmatprep.mubr.f32.mxu0 0.0
  %697 = vmatmul.mubr.f32.gmra.mxu0 %v435
  %v698 = vpop.f32.mrf.mxu0
  %v699 = vadd.f32 0.0, %v698
  %v700 = vpop.f32.mrf.mxu0
  %701 = vmatprep.mubr.f32.mxu0 0.0
  %702 = vmatmul.mubr.f32.gmra.mxu0 %v436
  %v703 = vpop.f32.mrf.mxu0
  %v704 = vadd.f32 0.0, %v703
  %v705 = vpop.f32.mrf.mxu0
  %706 = vmatprep.mubr.f32.mxu0 0.0
  %707 = vmatmul.mubr.f32.gmra.mxu0 %v437
  %v708 = vpop.f32.mrf.mxu0
  %v709 = vadd.f32 0.0, %v708
  %v710 = vpop.f32.mrf.mxu0
  %711 = vmatprep.mubr.f32.mxu0 0.0
  %712 = vmatmul.mubr.f32.gmra.mxu0 %v438
  %v713 = vpop.f32.mrf.mxu0
  %v714 = vadd.f32 0.0, %v713
  %v715 = vpop.f32.mrf.mxu0
  %716 = vmatprep.mubr.f32.mxu0 0.0
  %717 = vmatmul.mubr.f32.gmra.mxu0 %v439
  %v718 = vpop.f32.mrf.mxu0
  %v719 = vadd.f32 0.0, %v718
  %v720 = vpop.f32.mrf.mxu0
  %721 = vmatprep.mubr.f32.mxu0 0.0
  %722 = vmatmul.mubr.f32.gmra.mxu0 %v440
  %v723 = vpop.f32.mrf.mxu0
  %v724 = vadd.f32 0.0, %v723
  %v725 = vpop.f32.mrf.mxu0
  %726 = vmatprep.mubr.f32.mxu0 0.0
  %727 = vmatmul.mubr.f32.gmra.mxu0 %v441
  %v728 = vpop.f32.mrf.mxu0
  %v729 = vadd.f32 0.0, %v728
  %v730 = vpop.f32.mrf.mxu0
  %731 = vmatprep.mubr.f32.mxu0 0.0
  %732 = vmatmul.mubr.f32.gmra.mxu0 %v442
  %v733 = vpop.f32.mrf.mxu0
  %v734 = vadd.f32 0.0, %v733
  %v735 = vpop.f32.mrf.mxu0
  %736 = vmatprep.mubr.f32.mxu0 0.0
  %737 = vmatmul.mubr.f32.gmra.mxu0 %v443
  %v738 = vpop.f32.mrf.mxu0
  %v739 = vadd.f32 0.0, %v738
  %v740 = vpop.f32.mrf.mxu0
  %741 = vmatprep.mubr.f32.mxu0 0.0
  %742 = vmatmul.mubr.f32.gmra.mxu0 %v444
  %v743 = vpop.f32.mrf.mxu0
  %v744 = vadd.f32 0.0, %v743
  %v745 = vpop.f32.mrf.mxu0
  %746 = vmatprep.mubr.f32.mxu0 0.0
  %747 = vmatmul.mubr.f32.gmra.mxu0 %v445
  %v748 = vpop.f32.mrf.mxu0
  %v749 = vadd.f32 0.0, %v748
  %v750 = vpop.f32.mrf.mxu0
  %751 = vmatprep.mubr.f32.mxu0 0.0
  %752 = vmatmul.mubr.f32.gmra.mxu0 %v446
  %v753 = vpop.f32.mrf.mxu0
  %v754 = vadd.f32 0.0, %v753
  %v755 = vpop.f32.mrf.mxu0
  %756 = vdwg.mxu0
  %v757 = vmax.f32 %v155, %v514
  %v758 = vmax.f32 %v160, %v519
  %v759 = vmax.f32 %v165, %v524
  %v760 = vmax.f32 %v170, %v529
  %v761 = vmax.f32 %v175, %v534
  %v762 = vmax.f32 %v180, %v539
  %v763 = vmax.f32 %v185, %v544
  %v764 = vmax.f32 %v190, %v549
  %v765 = vmax.f32 %v195, %v554
  %v766 = vmax.f32 %v200, %v559
  %v767 = vmax.f32 %v205, %v564
  %v768 = vmax.f32 %v210, %v569
  %v769 = vmax.f32 %v215, %v574
  %v770 = vmax.f32 %v220, %v579
  %v771 = vmax.f32 %v225, %v584
  %v772 = vmax.f32 %v230, %v589
  %v773 = vmax.f32 %v235, %v594
  %v774 = vmax.f32 %v240, %v599
  %v775 = vmax.f32 %v245, %v604
  %v776 = vmax.f32 %v250, %v609
  %v777 = vmax.f32 %v255, %v614
  %v778 = vmax.f32 %v260, %v619
  %v779 = vmax.f32 %v265, %v624
  %v780 = vmax.f32 %v270, %v629
  %v781 = vmax.f32 %v275, %v634
  %v782 = vmax.f32 %v280, %v639
  %v783 = vmax.f32 %v285, %v644
  %v784 = vmax.f32 %v290, %v649
  %v785 = vmax.f32 %v295, %v654
  %v786 = vmax.f32 %v300, %v659
  %v787 = vmax.f32 %v305, %v664
  %v788 = vmax.f32 %v310, %v669
  %v789 = vmax.f32 %v315, %v674
  %v790 = vmax.f32 %v320, %v679
  %v791 = vmax.f32 %v325, %v684
  %v792 = vmax.f32 %v330, %v689
  %v793 = vmax.f32 %v335, %v694
  %v794 = vmax.f32 %v340, %v699
  %v795 = vmax.f32 %v345, %v704
  %v796 = vmax.f32 %v350, %v709
  %v797 = vmax.f32 %v355, %v714
  %v798 = vmax.f32 %v360, %v719
  %v799 = vmax.f32 %v365, %v724
  %v800 = vmax.f32 %v370, %v729
  %v801 = vmax.f32 %v375, %v734
  %v802 = vmax.f32 %v380, %v739
  %v803 = vmax.f32 %v385, %v744
  %v804 = vmax.f32 %v390, %v749
  %v805 = vmax.f32 %v395, %v754
  %v806 = vld [vmem:[%s2] sm:$0xff]
  %v807 = vld [vmem:[%s2 + $0x8] sm:$0xff]
  %v808 = vld [vmem:[%s2 + $0x10] sm:$0xff]
  %v809 = vld [vmem:[%s2 + $0x18] sm:$0xff]
  %v810 = vld [vmem:[%s2 + $0x20] sm:$0xff]
  %v811 = vld [vmem:[%s2 + $0x28] sm:$0xff]
  %v812 = vld [vmem:[%s2 + $0x30] sm:$0xff]
  %v813 = vld [vmem:[%s2 + $0x38] sm:$0xff]
  %v814 = vld [vmem:[%s2 + $0x40] sm:$0xff]
  %v815 = vld [vmem:[%s2 + $0x48] sm:$0xff]
  %v816 = vld [vmem:[%s2 + $0x50] sm:$0xff]
  %v817 = vld [vmem:[%s2 + $0x58] sm:$0xff]
  %v818 = vld [vmem:[%s2 + $0x60] sm:$0xff]
  %v819 = vld [vmem:[%s2 + $0x68] sm:$0xff]
  %v820 = vld [vmem:[%s2 + $0x70] sm:$0xff]
  %v821 = vld [vmem:[%s2 + $0x78] sm:$0xff]
  %v822 = vld [vmem:[%s2 + $0x80] sm:$0xff]
  %v823 = vld [vmem:[%s2 + $0x88] sm:$0xff]
  %v824 = vld [vmem:[%s2 + $0x90] sm:$0xff]
  %v825 = vld [vmem:[%s2 + $0x98] sm:$0xff]
  %v826 = vld [vmem:[%s2 + $0xa0] sm:$0xff]
  %v827 = vld [vmem:[%s2 + $0xa8] sm:$0xff]
  %v828 = vld [vmem:[%s2 + $0xb0] sm:$0xff]
  %v829 = vld [vmem:[%s2 + $0xb8] sm:$0xff]
  %v830 = vld [vmem:[%s2 + $0xc0] sm:$0xff]
  %v831 = vld [vmem:[%s2 + $0xc8] sm:$0xff]
  %v832 = vld [vmem:[%s2 + $0xd0] sm:$0xff]
  %v833 = vld [vmem:[%s2 + $0xd8] sm:$0xff]
  %v834 = vld [vmem:[%s2 + $0xe0] sm:$0xff]
  %v835 = vld [vmem:[%s2 + $0xe8] sm:$0xff]
  %v836 = vld [vmem:[%s2 + $0xf0] sm:$0xff]
  %v837 = vld [vmem:[%s2 + $0xf8] sm:$0xff]
  %v838 = vld [vmem:[%s2 + $0x100] sm:$0xff]
  %v839 = vld [vmem:[%s2 + $0x108] sm:$0xff]
  %v840 = vld [vmem:[%s2 + $0x110] sm:$0xff]
  %v841 = vld [vmem:[%s2 + $0x118] sm:$0xff]
  %v842 = vld [vmem:[%s2 + $0x120] sm:$0xff]
  %v843 = vld [vmem:[%s2 + $0x128] sm:$0xff]
  %v844 = vld [vmem:[%s2 + $0x130] sm:$0xff]
  %v845 = vld [vmem:[%s2 + $0x138] sm:$0xff]
  %v846 = vld [vmem:[%s2 + $0x140] sm:$0xff]
  %v847 = vld [vmem:[%s2 + $0x148] sm:$0xff]
  %v848 = vld [vmem:[%s2 + $0x150] sm:$0xff]
  %v849 = vld [vmem:[%s2 + $0x158] sm:$0xff]
  %v850 = vld [vmem:[%s2 + $0x160] sm:$0xff]
  %v851 = vld [vmem:[%s2 + $0x168] sm:$0xff]
  %v852 = vld [vmem:[%s2 + $0x170] sm:$0xff]
  %v853 = vld [vmem:[%s2 + $0x178] sm:$0xff]
  %v854 = vld [vmem:[%s2 + $0x180] sm:$0xff]
  %855 = vmatprep.subr.mxu0 0.0
  %856 = vmatpush1.msra.mxu0 %v38
  %857 = vmatprep.subr.mxu0 0.0
  %858 = vmatpush1.msra.mxu0 %v37
  %859 = vmatprep.subr.mxu0 0.0
  %860 = vmatpush1.msra.mxu0 %v36
  %861 = vmatprep.subr.mxu0 0.0
  %862 = vmatpush1.msra.mxu0 %v35
  %863 = vmatprep.subr.mxu0 0.0
  %864 = vmatpush1.msra.mxu0 %v34
  %865 = vmatprep.subr.mxu0 0.0
  %866 = vmatpush1.msra.mxu0 %v33
  %867 = vmatprep.subr.mxu0 0.0
  %868 = vmatpush1.msra.mxu0 %v32
  %869 = vmatprep.subr.mxu0 0.0
  %870 = vmatpush1.msra.mxu0 %v31
  %871 = vmatprep.subr.mxu0 0.0
  %872 = vmatpush1.msra.mxu0 %v30
  %873 = vmatprep.subr.mxu0 0.0
  %874 = vmatpush1.msra.mxu0 %v29
  %875 = vmatprep.subr.mxu0 0.0
  %876 = vmatpush1.msra.mxu0 %v28
  %877 = vmatprep.subr.mxu0 0.0
  %878 = vmatpush1.msra.mxu0 %v27
  %879 = vmatprep.subr.mxu0 0.0
  %880 = vmatpush1.msra.mxu0 %v26
  %881 = vmatprep.subr.mxu0 0.0
  %882 = vmatpush1.msra.mxu0 %v25
  %883 = vmatprep.subr.mxu0 0.0
  %884 = vmatpush1.msra.mxu0 %v24
  %885 = vmatprep.subr.mxu0 0.0
  %886 = vmatpush1.msra.mxu0 %v23
  %887 = vmatprep.subr.mxu0 0.0
  %888 = vmatpush2.msra.mxu0 0.0
  %889 = vmatprep.subr.mxu0 0.0
  %890 = vmatpush2.msra.mxu0 0.0
  %891 = vmatprep.subr.mxu0 0.0
  %892 = vmatpush2.msra.mxu0 0.0
  %893 = vmatprep.subr.mxu0 0.0
  %894 = vmatpush2.msra.mxu0 0.0
  %895 = vmatprep.subr.mxu0 0.0
  %896 = vmatpush2.msra.mxu0 0.0
  %897 = vmatprep.subr.mxu0 0.0
  %898 = vmatpush2.msra.mxu0 0.0
  %899 = vmatprep.subr.mxu0 0.0
  %900 = vmatpush2.msra.mxu0 0.0
  %901 = vmatprep.subr.mxu0 0.0
  %902 = vmatpush2.msra.mxu0 0.0
  %903 = vmatprep.subr.mxu0 0.0
  %904 = vmatpush2.msra.mxu0 0.0
  %905 = vmatprep.subr.mxu0 0.0
  %906 = vmatpush2.msra.mxu0 0.0
  %907 = vmatprep.subr.mxu0 0.0
  %908 = vmatpush2.msra.mxu0 0.0
  %909 = vmatprep.subr.mxu0 0.0
  %910 = vmatpush2.msra.mxu0 0.0
  %911 = vmatprep.subr.mxu0 0.0
  %912 = vmatpush2.msra.mxu0 0.0
  %913 = vmatprep.subr.mxu0 0.0
  %914 = vmatpush2.msra.mxu0 0.0
  %915 = vmatprep.subr.mxu0 0.0
  %916 = vmatpush2.msra.mxu0 0.0
  %917 = vmatprep.subr.mxu0 0.0
  %918 = vmatpush2.msra.mxu0 0.0
  %919 = vmatprep.mubr.f32.mxu0 0.0
  %920 = vmatmul.mubr.f32.gmra.mxu0 %v806
  %v921 = vpop.f32.mrf.mxu0
  %v922 = vadd.f32 0.0, %v921
  %v923 = vpop.f32.mrf.mxu0
  %924 = vmatprep.mubr.f32.mxu0 0.0
  %925 = vmatmul.mubr.f32.gmra.mxu0 %v807
  %v926 = vpop.f32.mrf.mxu0
  %v927 = vadd.f32 0.0, %v926
  %v928 = vpop.f32.mrf.mxu0
  %929 = vmatprep.mubr.f32.mxu0 0.0
  %930 = vmatmul.mubr.f32.gmra.mxu0 %v808
  %v931 = vpop.f32.mrf.mxu0
  %v932 = vadd.f32 0.0, %v931
  %v933 = vpop.f32.mrf.mxu0
  %934 = vmatprep.mubr.f32.mxu0 0.0
  %935 = vmatmul.mubr.f32.gmra.mxu0 %v809
  %v936 = vpop.f32.mrf.mxu0
  %v937 = vadd.f32 0.0, %v936
  %v938 = vpop.f32.mrf.mxu0
  %939 = vmatprep.mubr.f32.mxu0 0.0
  %940 = vmatmul.mubr.f32.gmra.mxu0 %v810
  %v941 = vpop.f32.mrf.mxu0
  %v942 = vadd.f32 0.0, %v941
  %v943 = vpop.f32.mrf.mxu0
  %944 = vmatprep.mubr.f32.mxu0 0.0
  %945 = vmatmul.mubr.f32.gmra.mxu0 %v811
  %v946 = vpop.f32.mrf.mxu0
  %v947 = vadd.f32 0.0, %v946
  %v948 = vpop.f32.mrf.mxu0
  %949 = vmatprep.mubr.f32.mxu0 0.0
  %950 = vmatmul.mubr.f32.gmra.mxu0 %v812
  %v951 = vpop.f32.mrf.mxu0
  %v952 = vadd.f32 0.0, %v951
  %v953 = vpop.f32.mrf.mxu0
  %954 = vmatprep.mubr.f32.mxu0 0.0
  %955 = vmatmul.mubr.f32.gmra.mxu0 %v813
  %v956 = vpop.f32.mrf.mxu0
  %v957 = vadd.f32 0.0, %v956
  %v958 = vpop.f32.mrf.mxu0
  %959 = vmatprep.mubr.f32.mxu0 0.0
  %960 = vmatmul.mubr.f32.gmra.mxu0 %v814
  %v961 = vpop.f32.mrf.mxu0
  %v962 = vadd.f32 0.0, %v961
  %v963 = vpop.f32.mrf.mxu0
  %964 = vmatprep.mubr.f32.mxu0 0.0
  %965 = vmatmul.mubr.f32.gmra.mxu0 %v815
  %v966 = vpop.f32.mrf.mxu0
  %v967 = vadd.f32 0.0, %v966
  %v968 = vpop.f32.mrf.mxu0
  %969 = vmatprep.mubr.f32.mxu0 0.0
  %970 = vmatmul.mubr.f32.gmra.mxu0 %v816
  %v971 = vpop.f32.mrf.mxu0
  %v972 = vadd.f32 0.0, %v971
  %v973 = vpop.f32.mrf.mxu0
  %974 = vmatprep.mubr.f32.mxu0 0.0
  %975 = vmatmul.mubr.f32.gmra.mxu0 %v817
  %v976 = vpop.f32.mrf.mxu0
  %v977 = vadd.f32 0.0, %v976
  %v978 = vpop.f32.mrf.mxu0
  %979 = vmatprep.mubr.f32.mxu0 0.0
  %980 = vmatmul.mubr.f32.gmra.mxu0 %v818
  %v981 = vpop.f32.mrf.mxu0
  %v982 = vadd.f32 0.0, %v981
  %v983 = vpop.f32.mrf.mxu0
  %984 = vmatprep.mubr.f32.mxu0 0.0
  %985 = vmatmul.mubr.f32.gmra.mxu0 %v819
  %v986 = vpop.f32.mrf.mxu0
  %v987 = vadd.f32 0.0, %v986
  %v988 = vpop.f32.mrf.mxu0
  %989 = vmatprep.mubr.f32.mxu0 0.0
  %990 = vmatmul.mubr.f32.gmra.mxu0 %v820
  %v991 = vpop.f32.mrf.mxu0
  %v992 = vadd.f32 0.0, %v991
  %v993 = vpop.f32.mrf.mxu0
  %994 = vmatprep.mubr.f32.mxu0 0.0
  %995 = vmatmul.mubr.f32.gmra.mxu0 %v821
  %v996 = vpop.f32.mrf.mxu0
  %v997 = vadd.f32 0.0, %v996
  %v998 = vpop.f32.mrf.mxu0
  %999 = vmatprep.mubr.f32.mxu0 0.0
  %1000 = vmatmul.mubr.f32.gmra.mxu0 %v822
  %v1001 = vpop.f32.mrf.mxu0
  %v1002 = vadd.f32 0.0, %v1001
  %v1003 = vpop.f32.mrf.mxu0
  %1004 = vmatprep.mubr.f32.mxu0 0.0
  %1005 = vmatmul.mubr.f32.gmra.mxu0 %v823
  %v1006 = vpop.f32.mrf.mxu0
  %v1007 = vadd.f32 0.0, %v1006
  %v1008 = vpop.f32.mrf.mxu0
  %1009 = vmatprep.mubr.f32.mxu0 0.0
  %1010 = vmatmul.mubr.f32.gmra.mxu0 %v824
  %v1011 = vpop.f32.mrf.mxu0
  %v1012 = vadd.f32 0.0, %v1011
  %v1013 = vpop.f32.mrf.mxu0
  %1014 = vmatprep.mubr.f32.mxu0 0.0
  %1015 = vmatmul.mubr.f32.gmra.mxu0 %v825
  %v1016 = vpop.f32.mrf.mxu0
  %v1017 = vadd.f32 0.0, %v1016
  %v1018 = vpop.f32.mrf.mxu0
  %1019 = vmatprep.mubr.f32.mxu0 0.0
  %1020 = vmatmul.mubr.f32.gmra.mxu0 %v826
  %v1021 = vpop.f32.mrf.mxu0
  %v1022 = vadd.f32 0.0, %v1021
  %v1023 = vpop.f32.mrf.mxu0
  %1024 = vmatprep.mubr.f32.mxu0 0.0
  %1025 = vmatmul.mubr.f32.gmra.mxu0 %v827
  %v1026 = vpop.f32.mrf.mxu0
  %v1027 = vadd.f32 0.0, %v1026
  %v1028 = vpop.f32.mrf.mxu0
  %1029 = vmatprep.mubr.f32.mxu0 0.0
  %1030 = vmatmul.mubr.f32.gmra.mxu0 %v828
  %v1031 = vpop.f32.mrf.mxu0
  %v1032 = vadd.f32 0.0, %v1031
  %v1033 = vpop.f32.mrf.mxu0
  %1034 = vmatprep.mubr.f32.mxu0 0.0
  %1035 = vmatmul.mubr.f32.gmra.mxu0 %v829
  %v1036 = vpop.f32.mrf.mxu0
  %v1037 = vadd.f32 0.0, %v1036
  %v1038 = vpop.f32.mrf.mxu0
  %1039 = vmatprep.mubr.f32.mxu0 0.0
  %1040 = vmatmul.mubr.f32.gmra.mxu0 %v830
  %v1041 = vpop.f32.mrf.mxu0
  %v1042 = vadd.f32 0.0, %v1041
  %v1043 = vpop.f32.mrf.mxu0
  %1044 = vmatprep.mubr.f32.mxu0 0.0
  %1045 = vmatmul.mubr.f32.gmra.mxu0 %v831
  %v1046 = vpop.f32.mrf.mxu0
  %v1047 = vadd.f32 0.0, %v1046
  %v1048 = vpop.f32.mrf.mxu0
  %1049 = vmatprep.mubr.f32.mxu0 0.0
  %1050 = vmatmul.mubr.f32.gmra.mxu0 %v832
  %v1051 = vpop.f32.mrf.mxu0
  %v1052 = vadd.f32 0.0, %v1051
  %v1053 = vpop.f32.mrf.mxu0
  %1054 = vmatprep.mubr.f32.mxu0 0.0
  %1055 = vmatmul.mubr.f32.gmra.mxu0 %v833
  %v1056 = vpop.f32.mrf.mxu0
  %v1057 = vadd.f32 0.0, %v1056
  %v1058 = vpop.f32.mrf.mxu0
  %1059 = vmatprep.mubr.f32.mxu0 0.0
  %1060 = vmatmul.mubr.f32.gmra.mxu0 %v834
  %v1061 = vpop.f32.mrf.mxu0
  %v1062 = vadd.f32 0.0, %v1061
  %v1063 = vpop.f32.mrf.mxu0
  %1064 = vmatprep.mubr.f32.mxu0 0.0
  %1065 = vmatmul.mubr.f32.gmra.mxu0 %v835
  %v1066 = vpop.f32.mrf.mxu0
  %v1067 = vadd.f32 0.0, %v1066
  %v1068 = vpop.f32.mrf.mxu0
  %1069 = vmatprep.mubr.f32.mxu0 0.0
  %1070 = vmatmul.mubr.f32.gmra.mxu0 %v836
  %v1071 = vpop.f32.mrf.mxu0
  %v1072 = vadd.f32 0.0, %v1071
  %v1073 = vpop.f32.mrf.mxu0
  %1074 = vmatprep.mubr.f32.mxu0 0.0
  %1075 = vmatmul.mubr.f32.gmra.mxu0 %v837
  %v1076 = vpop.f32.mrf.mxu0
  %v1077 = vadd.f32 0.0, %v1076
  %v1078 = vpop.f32.mrf.mxu0
  %1079 = vmatprep.mubr.f32.mxu0 0.0
  %1080 = vmatmul.mubr.f32.gmra.mxu0 %v838
  %v1081 = vpop.f32.mrf.mxu0
  %v1082 = vadd.f32 0.0, %v1081
  %v1083 = vpop.f32.mrf.mxu0
  %1084 = vmatprep.mubr.f32.mxu0 0.0
  %1085 = vmatmul.mubr.f32.gmra.mxu0 %v839
  %v1086 = vpop.f32.mrf.mxu0
  %v1087 = vadd.f32 0.0, %v1086
  %v1088 = vpop.f32.mrf.mxu0
  %1089 = vmatprep.mubr.f32.mxu0 0.0
  %1090 = vmatmul.mubr.f32.gmra.mxu0 %v840
  %v1091 = vpop.f32.mrf.mxu0
  %v1092 = vadd.f32 0.0, %v1091
  %v1093 = vpop.f32.mrf.mxu0
  %1094 = vmatprep.mubr.f32.mxu0 0.0
  %1095 = vmatmul.mubr.f32.gmra.mxu0 %v841
  %v1096 = vpop.f32.mrf.mxu0
  %v1097 = vadd.f32 0.0, %v1096
  %v1098 = vpop.f32.mrf.mxu0
  %1099 = vmatprep.mubr.f32.mxu0 0.0
  %1100 = vmatmul.mubr.f32.gmra.mxu0 %v842
  %v1101 = vpop.f32.mrf.mxu0
  %v1102 = vadd.f32 0.0, %v1101
  %v1103 = vpop.f32.mrf.mxu0
  %1104 = vmatprep.mubr.f32.mxu0 0.0
  %1105 = vmatmul.mubr.f32.gmra.mxu0 %v843
  %v1106 = vpop.f32.mrf.mxu0
  %v1107 = vadd.f32 0.0, %v1106
  %v1108 = vpop.f32.mrf.mxu0
  %1109 = vmatprep.mubr.f32.mxu0 0.0
  %1110 = vmatmul.mubr.f32.gmra.mxu0 %v844
  %v1111 = vpop.f32.mrf.mxu0
  %v1112 = vadd.f32 0.0, %v1111
  %v1113 = vpop.f32.mrf.mxu0
  %1114 = vmatprep.mubr.f32.mxu0 0.0
  %1115 = vmatmul.mubr.f32.gmra.mxu0 %v845
  %v1116 = vpop.f32.mrf.mxu0
  %v1117 = vadd.f32 0.0, %v1116
  %v1118 = vpop.f32.mrf.mxu0
  %1119 = vmatprep.mubr.f32.mxu0 0.0
  %1120 = vmatmul.mubr.f32.gmra.mxu0 %v846
  %v1121 = vpop.f32.mrf.mxu0
  %v1122 = vadd.f32 0.0, %v1121
  %v1123 = vpop.f32.mrf.mxu0
  %1124 = vmatprep.mubr.f32.mxu0 0.0
  %1125 = vmatmul.mubr.f32.gmra.mxu0 %v847
  %v1126 = vpop.f32.mrf.mxu0
  %v1127 = vadd.f32 0.0, %v1126
  %v1128 = vpop.f32.mrf.mxu0
  %1129 = vmatprep.mubr.f32.mxu0 0.0
  %1130 = vmatmul.mubr.f32.gmra.mxu0 %v848
  %v1131 = vpop.f32.mrf.mxu0
  %v1132 = vadd.f32 0.0, %v1131
  %v1133 = vpop.f32.mrf.mxu0
  %1134 = vmatprep.mubr.f32.mxu0 0.0
  %1135 = vmatmul.mubr.f32.gmra.mxu0 %v849
  %v1136 = vpop.f32.mrf.mxu0
  %v1137 = vadd.f32 0.0, %v1136
  %v1138 = vpop.f32.mrf.mxu0
  %1139 = vmatprep.mubr.f32.mxu0 0.0
  %1140 = vmatmul.mubr.f32.gmra.mxu0 %v850
  %v1141 = vpop.f32.mrf.mxu0
  %v1142 = vadd.f32 0.0, %v1141
  %v1143 = vpop.f32.mrf.mxu0
  %1144 = vmatprep.mubr.f32.mxu0 0.0
  %1145 = vmatmul.mubr.f32.gmra.mxu0 %v851
  %v1146 = vpop.f32.mrf.mxu0
  %v1147 = vadd.f32 0.0, %v1146
  %v1148 = vpop.f32.mrf.mxu0
  %1149 = vmatprep.mubr.f32.mxu0 0.0
  %1150 = vmatmul.mubr.f32.gmra.mxu0 %v852
  %v1151 = vpop.f32.mrf.mxu0
  %v1152 = vadd.f32 0.0, %v1151
  %v1153 = vpop.f32.mrf.mxu0
  %1154 = vmatprep.mubr.f32.mxu0 0.0
  %1155 = vmatmul.mubr.f32.gmra.mxu0 %v853
  %v1156 = vpop.f32.mrf.mxu0
  %v1157 = vadd.f32 0.0, %v1156
  %v1158 = vpop.f32.mrf.mxu0
  %1159 = vmatprep.mubr.f32.mxu0 0.0
  %1160 = vmatmul.mubr.f32.gmra.mxu0 %v854
  %v1161 = vpop.f32.mrf.mxu0
  %v1162 = vadd.f32 0.0, %v1161
  %v1163 = vpop.f32.mrf.mxu0
  %1164 = vdwg.mxu0
  %v1165 = vld [vmem:[%s3] sm:$0xff]
  %v1166 = vld [vmem:[%s3 + $0x8] sm:$0xff]
  %v1167 = vld [vmem:[%s3 + $0x10] sm:$0xff]
  %v1168 = vld [vmem:[%s3 + $0x18] sm:$0xff]
  %v1169 = vld [vmem:[%s3 + $0x20] sm:$0xff]
  %v1170 = vld [vmem:[%s3 + $0x28] sm:$0xff]
  %v1171 = vld [vmem:[%s3 + $0x30] sm:$0xff]
  %v1172 = vld [vmem:[%s3 + $0x38] sm:$0xff]
  %v1173 = vld [vmem:[%s3 + $0x40] sm:$0xff]
  %v1174 = vld [vmem:[%s3 + $0x48] sm:$0xff]
  %v1175 = vld [vmem:[%s3 + $0x50] sm:$0xff]
  %v1176 = vld [vmem:[%s3 + $0x58] sm:$0xff]
  %v1177 = vld [vmem:[%s3 + $0x60] sm:$0xff]
  %v1178 = vld [vmem:[%s3 + $0x68] sm:$0xff]
  %v1179 = vld [vmem:[%s3 + $0x70] sm:$0xff]
  %v1180 = vld [vmem:[%s3 + $0x78] sm:$0xff]
  %v1181 = vld [vmem:[%s3 + $0x80] sm:$0xff]
  %v1182 = vld [vmem:[%s3 + $0x88] sm:$0xff]
  %v1183 = vld [vmem:[%s3 + $0x90] sm:$0xff]
  %v1184 = vld [vmem:[%s3 + $0x98] sm:$0xff]
  %v1185 = vld [vmem:[%s3 + $0xa0] sm:$0xff]
  %v1186 = vld [vmem:[%s3 + $0xa8] sm:$0xff]
  %v1187 = vld [vmem:[%s3 + $0xb0] sm:$0xff]
  %v1188 = vld [vmem:[%s3 + $0xb8] sm:$0xff]
  %v1189 = vld [vmem:[%s3 + $0xc0] sm:$0xff]
  %v1190 = vld [vmem:[%s3 + $0xc8] sm:$0xff]
  %v1191 = vld [vmem:[%s3 + $0xd0] sm:$0xff]
  %v1192 = vld [vmem:[%s3 + $0xd8] sm:$0xff]
  %v1193 = vld [vmem:[%s3 + $0xe0] sm:$0xff]
  %v1194 = vld [vmem:[%s3 + $0xe8] sm:$0xff]
  %v1195 = vld [vmem:[%s3 + $0xf0] sm:$0xff]
  %v1196 = vld [vmem:[%s3 + $0xf8] sm:$0xff]
  %v1197 = vld [vmem:[%s3 + $0x100] sm:$0xff]
  %v1198 = vld [vmem:[%s3 + $0x108] sm:$0xff]
  %v1199 = vld [vmem:[%s3 + $0x110] sm:$0xff]
  %v1200 = vld [vmem:[%s3 + $0x118] sm:$0xff]
  %v1201 = vld [vmem:[%s3 + $0x120] sm:$0xff]
  %v1202 = vld [vmem:[%s3 + $0x128] sm:$0xff]
  %v1203 = vld [vmem:[%s3 + $0x130] sm:$0xff]
  %v1204 = vld [vmem:[%s3 + $0x138] sm:$0xff]
  %v1205 = vld [vmem:[%s3 + $0x140] sm:$0xff]
  %v1206 = vld [vmem:[%s3 + $0x148] sm:$0xff]
  %v1207 = vld [vmem:[%s3 + $0x150] sm:$0xff]
  %v1208 = vld [vmem:[%s3 + $0x158] sm:$0xff]
  %v1209 = vld [vmem:[%s3 + $0x160] sm:$0xff]
  %v1210 = vld [vmem:[%s3 + $0x168] sm:$0xff]
  %v1211 = vld [vmem:[%s3 + $0x170] sm:$0xff]
  %v1212 = vld [vmem:[%s3 + $0x178] sm:$0xff]
  %v1213 = vld [vmem:[%s3 + $0x180] sm:$0xff]
  %1214 = vmatprep.subr.mxu0 0.0
  %1215 = vmatpush1.msra.mxu0 %v38
  %1216 = vmatprep.subr.mxu0 0.0
  %1217 = vmatpush1.msra.mxu0 %v37
  %1218 = vmatprep.subr.mxu0 0.0
  %1219 = vmatpush1.msra.mxu0 %v36
  %1220 = vmatprep.subr.mxu0 0.0
  %1221 = vmatpush1.msra.mxu0 %v35
  %1222 = vmatprep.subr.mxu0 0.0
  %1223 = vmatpush1.msra.mxu0 %v34
  %1224 = vmatprep.subr.mxu0 0.0
  %1225 = vmatpush1.msra.mxu0 %v33
  %1226 = vmatprep.subr.mxu0 0.0
  %1227 = vmatpush1.msra.mxu0 %v32
  %1228 = vmatprep.subr.mxu0 0.0
  %1229 = vmatpush1.msra.mxu0 %v31
  %1230 = vmatprep.subr.mxu0 0.0
  %1231 = vmatpush1.msra.mxu0 %v30
  %1232 = vmatprep.subr.mxu0 0.0
  %1233 = vmatpush1.msra.mxu0 %v29
  %1234 = vmatprep.subr.mxu0 0.0
  %1235 = vmatpush1.msra.mxu0 %v28
  %1236 = vmatprep.subr.mxu0 0.0
  %1237 = vmatpush1.msra.mxu0 %v27
  %1238 = vmatprep.subr.mxu0 0.0
  %1239 = vmatpush1.msra.mxu0 %v26
  %1240 = vmatprep.subr.mxu0 0.0
  %1241 = vmatpush1.msra.mxu0 %v25
  %1242 = vmatprep.subr.mxu0 0.0
  %1243 = vmatpush1.msra.mxu0 %v24
  %1244 = vmatprep.subr.mxu0 0.0
  %1245 = vmatpush1.msra.mxu0 %v23
  %1246 = vmatprep.subr.mxu0 0.0
  %1247 = vmatpush2.msra.mxu0 0.0
  %1248 = vmatprep.subr.mxu0 0.0
  %1249 = vmatpush2.msra.mxu0 0.0
  %1250 = vmatprep.subr.mxu0 0.0
  %1251 = vmatpush2.msra.mxu0 0.0
  %1252 = vmatprep.subr.mxu0 0.0
  %1253 = vmatpush2.msra.mxu0 0.0
  %1254 = vmatprep.subr.mxu0 0.0
  %1255 = vmatpush2.msra.mxu0 0.0
  %1256 = vmatprep.subr.mxu0 0.0
  %1257 = vmatpush2.msra.mxu0 0.0
  %1258 = vmatprep.subr.mxu0 0.0
  %1259 = vmatpush2.msra.mxu0 0.0
  %1260 = vmatprep.subr.mxu0 0.0
  %1261 = vmatpush2.msra.mxu0 0.0
  %1262 = vmatprep.subr.mxu0 0.0
  %1263 = vmatpush2.msra.mxu0 0.0
  %1264 = vmatprep.subr.mxu0 0.0
  %1265 = vmatpush2.msra.mxu0 0.0
  %1266 = vmatprep.subr.mxu0 0.0
  %1267 = vmatpush2.msra.mxu0 0.0
  %1268 = vmatprep.subr.mxu0 0.0
  %1269 = vmatpush2.msra.mxu0 0.0
  %1270 = vmatprep.subr.mxu0 0.0
  %1271 = vmatpush2.msra.mxu0 0.0
  %1272 = vmatprep.subr.mxu0 0.0
  %1273 = vmatpush2.msra.mxu0 0.0
  %1274 = vmatprep.subr.mxu0 0.0
  %1275 = vmatpush2.msra.mxu0 0.0
  %1276 = vmatprep.subr.mxu0 0.0
  %1277 = vmatpush2.msra.mxu0 0.0
  %1278 = vmatprep.mubr.f32.mxu0 0.0
  %1279 = vmatmul.mubr.f32.gmra.mxu0 %v1165
  %v1280 = vpop.f32.mrf.mxu0
  %v1281 = vadd.f32 0.0, %v1280
  %v1282 = vpop.f32.mrf.mxu0
  %1283 = vmatprep.mubr.f32.mxu0 0.0
  %1284 = vmatmul.mubr.f32.gmra.mxu0 %v1166
  %v1285 = vpop.f32.mrf.mxu0
  %v1286 = vadd.f32 0.0, %v1285
  %v1287 = vpop.f32.mrf.mxu0
  %1288 = vmatprep.mubr.f32.mxu0 0.0
  %1289 = vmatmul.mubr.f32.gmra.mxu0 %v1167
  %v1290 = vpop.f32.mrf.mxu0
  %v1291 = vadd.f32 0.0, %v1290
  %v1292 = vpop.f32.mrf.mxu0
  %1293 = vmatprep.mubr.f32.mxu0 0.0
  %1294 = vmatmul.mubr.f32.gmra.mxu0 %v1168
  %v1295 = vpop.f32.mrf.mxu0
  %v1296 = vadd.f32 0.0, %v1295
  %v1297 = vpop.f32.mrf.mxu0
  %1298 = vmatprep.mubr.f32.mxu0 0.0
  %1299 = vmatmul.mubr.f32.gmra.mxu0 %v1169
  %v1300 = vpop.f32.mrf.mxu0
  %v1301 = vadd.f32 0.0, %v1300
  %v1302 = vpop.f32.mrf.mxu0
  %1303 = vmatprep.mubr.f32.mxu0 0.0
  %1304 = vmatmul.mubr.f32.gmra.mxu0 %v1170
  %v1305 = vpop.f32.mrf.mxu0
  %v1306 = vadd.f32 0.0, %v1305
  %v1307 = vpop.f32.mrf.mxu0
  %1308 = vmatprep.mubr.f32.mxu0 0.0
  %1309 = vmatmul.mubr.f32.gmra.mxu0 %v1171
  %v1310 = vpop.f32.mrf.mxu0
  %v1311 = vadd.f32 0.0, %v1310
  %v1312 = vpop.f32.mrf.mxu0
  %1313 = vmatprep.mubr.f32.mxu0 0.0
  %1314 = vmatmul.mubr.f32.gmra.mxu0 %v1172
  %v1315 = vpop.f32.mrf.mxu0
  %v1316 = vadd.f32 0.0, %v1315
  %v1317 = vpop.f32.mrf.mxu0
  %1318 = vmatprep.mubr.f32.mxu0 0.0
  %1319 = vmatmul.mubr.f32.gmra.mxu0 %v1173
  %v1320 = vpop.f32.mrf.mxu0
  %v1321 = vadd.f32 0.0, %v1320
  %v1322 = vpop.f32.mrf.mxu0
  %1323 = vmatprep.mubr.f32.mxu0 0.0
  %1324 = vmatmul.mubr.f32.gmra.mxu0 %v1174
  %v1325 = vpop.f32.mrf.mxu0
  %v1326 = vadd.f32 0.0, %v1325
  %v1327 = vpop.f32.mrf.mxu0
  %1328 = vmatprep.mubr.f32.mxu0 0.0
  %1329 = vmatmul.mubr.f32.gmra.mxu0 %v1175
  %v1330 = vpop.f32.mrf.mxu0
  %v1331 = vadd.f32 0.0, %v1330
  %v1332 = vpop.f32.mrf.mxu0
  %1333 = vmatprep.mubr.f32.mxu0 0.0
  %1334 = vmatmul.mubr.f32.gmra.mxu0 %v1176
  %v1335 = vpop.f32.mrf.mxu0
  %v1336 = vadd.f32 0.0, %v1335
  %v1337 = vpop.f32.mrf.mxu0
  %1338 = vmatprep.mubr.f32.mxu0 0.0
  %1339 = vmatmul.mubr.f32.gmra.mxu0 %v1177
  %v1340 = vpop.f32.mrf.mxu0
  %v1341 = vadd.f32 0.0, %v1340
  %v1342 = vpop.f32.mrf.mxu0
  %1343 = vmatprep.mubr.f32.mxu0 0.0
  %1344 = vmatmul.mubr.f32.gmra.mxu0 %v1178
  %v1345 = vpop.f32.mrf.mxu0
  %v1346 = vadd.f32 0.0, %v1345
  %v1347 = vpop.f32.mrf.mxu0
  %1348 = vmatprep.mubr.f32.mxu0 0.0
  %1349 = vmatmul.mubr.f32.gmra.mxu0 %v1179
  %v1350 = vpop.f32.mrf.mxu0
  %v1351 = vadd.f32 0.0, %v1350
  %v1352 = vpop.f32.mrf.mxu0
  %1353 = vmatprep.mubr.f32.mxu0 0.0
  %1354 = vmatmul.mubr.f32.gmra.mxu0 %v1180
  %v1355 = vpop.f32.mrf.mxu0
  %v1356 = vadd.f32 0.0, %v1355
  %v1357 = vpop.f32.mrf.mxu0
  %1358 = vmatprep.mubr.f32.mxu0 0.0
  %1359 = vmatmul.mubr.f32.gmra.mxu0 %v1181
  %v1360 = vpop.f32.mrf.mxu0
  %v1361 = vadd.f32 0.0, %v1360
  %v1362 = vpop.f32.mrf.mxu0
  %1363 = vmatprep.mubr.f32.mxu0 0.0
  %1364 = vmatmul.mubr.f32.gmra.mxu0 %v1182
  %v1365 = vpop.f32.mrf.mxu0
  %v1366 = vadd.f32 0.0, %v1365
  %v1367 = vpop.f32.mrf.mxu0
  %1368 = vmatprep.mubr.f32.mxu0 0.0
  %1369 = vmatmul.mubr.f32.gmra.mxu0 %v1183
  %v1370 = vpop.f32.mrf.mxu0
  %v1371 = vadd.f32 0.0, %v1370
  %v1372 = vpop.f32.mrf.mxu0
  %1373 = vmatprep.mubr.f32.mxu0 0.0
  %1374 = vmatmul.mubr.f32.gmra.mxu0 %v1184
  %v1375 = vpop.f32.mrf.mxu0
  %v1376 = vadd.f32 0.0, %v1375
  %v1377 = vpop.f32.mrf.mxu0
  %1378 = vmatprep.mubr.f32.mxu0 0.0
  %1379 = vmatmul.mubr.f32.gmra.mxu0 %v1185
  %v1380 = vpop.f32.mrf.mxu0
  %v1381 = vadd.f32 0.0, %v1380
  %v1382 = vpop.f32.mrf.mxu0
  %1383 = vmatprep.mubr.f32.mxu0 0.0
  %1384 = vmatmul.mubr.f32.gmra.mxu0 %v1186
  %v1385 = vpop.f32.mrf.mxu0
  %v1386 = vadd.f32 0.0, %v1385
  %v1387 = vpop.f32.mrf.mxu0
  %1388 = vmatprep.mubr.f32.mxu0 0.0
  %1389 = vmatmul.mubr.f32.gmra.mxu0 %v1187
  %v1390 = vpop.f32.mrf.mxu0
  %v1391 = vadd.f32 0.0, %v1390
  %v1392 = vpop.f32.mrf.mxu0
  %1393 = vmatprep.mubr.f32.mxu0 0.0
  %1394 = vmatmul.mubr.f32.gmra.mxu0 %v1188
  %v1395 = vpop.f32.mrf.mxu0
  %v1396 = vadd.f32 0.0, %v1395
  %v1397 = vpop.f32.mrf.mxu0
  %1398 = vmatprep.mubr.f32.mxu0 0.0
  %1399 = vmatmul.mubr.f32.gmra.mxu0 %v1189
  %v1400 = vpop.f32.mrf.mxu0
  %v1401 = vadd.f32 0.0, %v1400
  %v1402 = vpop.f32.mrf.mxu0
  %1403 = vmatprep.mubr.f32.mxu0 0.0
  %1404 = vmatmul.mubr.f32.gmra.mxu0 %v1190
  %v1405 = vpop.f32.mrf.mxu0
  %v1406 = vadd.f32 0.0, %v1405
  %v1407 = vpop.f32.mrf.mxu0
  %1408 = vmatprep.mubr.f32.mxu0 0.0
  %1409 = vmatmul.mubr.f32.gmra.mxu0 %v1191
  %v1410 = vpop.f32.mrf.mxu0
  %v1411 = vadd.f32 0.0, %v1410
  %v1412 = vpop.f32.mrf.mxu0
  %1413 = vmatprep.mubr.f32.mxu0 0.0
  %1414 = vmatmul.mubr.f32.gmra.mxu0 %v1192
  %v1415 = vpop.f32.mrf.mxu0
  %v1416 = vadd.f32 0.0, %v1415
  %v1417 = vpop.f32.mrf.mxu0
  %1418 = vmatprep.mubr.f32.mxu0 0.0
  %1419 = vmatmul.mubr.f32.gmra.mxu0 %v1193
  %v1420 = vpop.f32.mrf.mxu0
  %v1421 = vadd.f32 0.0, %v1420
  %v1422 = vpop.f32.mrf.mxu0
  %1423 = vmatprep.mubr.f32.mxu0 0.0
  %1424 = vmatmul.mubr.f32.gmra.mxu0 %v1194
  %v1425 = vpop.f32.mrf.mxu0
  %v1426 = vadd.f32 0.0, %v1425
  %v1427 = vpop.f32.mrf.mxu0
  %1428 = vmatprep.mubr.f32.mxu0 0.0
  %1429 = vmatmul.mubr.f32.gmra.mxu0 %v1195
  %v1430 = vpop.f32.mrf.mxu0
  %v1431 = vadd.f32 0.0, %v1430
  %v1432 = vpop.f32.mrf.mxu0
  %1433 = vmatprep.mubr.f32.mxu0 0.0
  %1434 = vmatmul.mubr.f32.gmra.mxu0 %v1196
  %v1435 = vpop.f32.mrf.mxu0
  %v1436 = vadd.f32 0.0, %v1435
  %v1437 = vpop.f32.mrf.mxu0
  %1438 = vmatprep.mubr.f32.mxu0 0.0
  %1439 = vmatmul.mubr.f32.gmra.mxu0 %v1197
  %v1440 = vpop.f32.mrf.mxu0
  %v1441 = vadd.f32 0.0, %v1440
  %v1442 = vpop.f32.mrf.mxu0
  %1443 = vmatprep.mubr.f32.mxu0 0.0
  %1444 = vmatmul.mubr.f32.gmra.mxu0 %v1198
  %v1445 = vpop.f32.mrf.mxu0
  %v1446 = vadd.f32 0.0, %v1445
  %v1447 = vpop.f32.mrf.mxu0
  %1448 = vmatprep.mubr.f32.mxu0 0.0
  %1449 = vmatmul.mubr.f32.gmra.mxu0 %v1199
  %v1450 = vpop.f32.mrf.mxu0
  %v1451 = vadd.f32 0.0, %v1450
  %v1452 = vpop.f32.mrf.mxu0
  %1453 = vmatprep.mubr.f32.mxu0 0.0
  %1454 = vmatmul.mubr.f32.gmra.mxu0 %v1200
  %v1455 = vpop.f32.mrf.mxu0
  %v1456 = vadd.f32 0.0, %v1455
  %v1457 = vpop.f32.mrf.mxu0
  %1458 = vmatprep.mubr.f32.mxu0 0.0
  %1459 = vmatmul.mubr.f32.gmra.mxu0 %v1201
  %v1460 = vpop.f32.mrf.mxu0
  %v1461 = vadd.f32 0.0, %v1460
  %v1462 = vpop.f32.mrf.mxu0
  %1463 = vmatprep.mubr.f32.mxu0 0.0
  %1464 = vmatmul.mubr.f32.gmra.mxu0 %v1202
  %v1465 = vpop.f32.mrf.mxu0
  %v1466 = vadd.f32 0.0, %v1465
  %v1467 = vpop.f32.mrf.mxu0
  %1468 = vmatprep.mubr.f32.mxu0 0.0
  %1469 = vmatmul.mubr.f32.gmra.mxu0 %v1203
  %v1470 = vpop.f32.mrf.mxu0
  %v1471 = vadd.f32 0.0, %v1470
  %v1472 = vpop.f32.mrf.mxu0
  %1473 = vmatprep.mubr.f32.mxu0 0.0
  %1474 = vmatmul.mubr.f32.gmra.mxu0 %v1204
  %v1475 = vpop.f32.mrf.mxu0
  %v1476 = vadd.f32 0.0, %v1475
  %v1477 = vpop.f32.mrf.mxu0
  %1478 = vmatprep.mubr.f32.mxu0 0.0
  %1479 = vmatmul.mubr.f32.gmra.mxu0 %v1205
  %v1480 = vpop.f32.mrf.mxu0
  %v1481 = vadd.f32 0.0, %v1480
  %v1482 = vpop.f32.mrf.mxu0
  %1483 = vmatprep.mubr.f32.mxu0 0.0
  %1484 = vmatmul.mubr.f32.gmra.mxu0 %v1206
  %v1485 = vpop.f32.mrf.mxu0
  %v1486 = vadd.f32 0.0, %v1485
  %v1487 = vpop.f32.mrf.mxu0
  %1488 = vmatprep.mubr.f32.mxu0 0.0
  %1489 = vmatmul.mubr.f32.gmra.mxu0 %v1207
  %v1490 = vpop.f32.mrf.mxu0
  %v1491 = vadd.f32 0.0, %v1490
  %v1492 = vpop.f32.mrf.mxu0
  %1493 = vmatprep.mubr.f32.mxu0 0.0
  %1494 = vmatmul.mubr.f32.gmra.mxu0 %v1208
  %v1495 = vpop.f32.mrf.mxu0
  %v1496 = vadd.f32 0.0, %v1495
  %v1497 = vpop.f32.mrf.mxu0
  %1498 = vmatprep.mubr.f32.mxu0 0.0
  %1499 = vmatmul.mubr.f32.gmra.mxu0 %v1209
  %v1500 = vpop.f32.mrf.mxu0
  %v1501 = vadd.f32 0.0, %v1500
  %v1502 = vpop.f32.mrf.mxu0
  %1503 = vmatprep.mubr.f32.mxu0 0.0
  %1504 = vmatmul.mubr.f32.gmra.mxu0 %v1210
  %v1505 = vpop.f32.mrf.mxu0
  %v1506 = vadd.f32 0.0, %v1505
  %v1507 = vpop.f32.mrf.mxu0
  %1508 = vmatprep.mubr.f32.mxu0 0.0
  %1509 = vmatmul.mubr.f32.gmra.mxu0 %v1211
  %v1510 = vpop.f32.mrf.mxu0
  %v1511 = vadd.f32 0.0, %v1510
  %v1512 = vpop.f32.mrf.mxu0
  %1513 = vmatprep.mubr.f32.mxu0 0.0
  %1514 = vmatmul.mubr.f32.gmra.mxu0 %v1212
  %v1515 = vpop.f32.mrf.mxu0
  %v1516 = vadd.f32 0.0, %v1515
  %v1517 = vpop.f32.mrf.mxu0
  %1518 = vmatprep.mubr.f32.mxu0 0.0
  %1519 = vmatmul.mubr.f32.gmra.mxu0 %v1213
  %v1520 = vpop.f32.mrf.mxu0
  %v1521 = vadd.f32 0.0, %v1520
  %v1522 = vpop.f32.mrf.mxu0
  %1523 = vdwg.mxu0
  %v1524 = vmax.f32 %v922, %v1281
  %v1525 = vmax.f32 %v927, %v1286
  %v1526 = vmax.f32 %v932, %v1291
  %v1527 = vmax.f32 %v937, %v1296
  %v1528 = vmax.f32 %v942, %v1301
  %v1529 = vmax.f32 %v947, %v1306
  %v1530 = vmax.f32 %v952, %v1311
  %v1531 = vmax.f32 %v957, %v1316
  %v1532 = vmax.f32 %v962, %v1321
  %v1533 = vmax.f32 %v967, %v1326
  %v1534 = vmax.f32 %v972, %v1331
  %v1535 = vmax.f32 %v977, %v1336
  %v1536 = vmax.f32 %v982, %v1341
  %v1537 = vmax.f32 %v987, %v1346
  %v1538 = vmax.f32 %v992, %v1351
  %v1539 = vmax.f32 %v997, %v1356
  %v1540 = vmax.f32 %v1002, %v1361
  %v1541 = vmax.f32 %v1007, %v1366
  %v1542 = vmax.f32 %v1012, %v1371
  %v1543 = vmax.f32 %v1017, %v1376
  %v1544 = vmax.f32 %v1022, %v1381
  %v1545 = vmax.f32 %v1027, %v1386
  %v1546 = vmax.f32 %v1032, %v1391
  %v1547 = vmax.f32 %v1037, %v1396
  %v1548 = vmax.f32 %v1042, %v1401
  %v1549 = vmax.f32 %v1047, %v1406
  %v1550 = vmax.f32 %v1052, %v1411
  %v1551 = vmax.f32 %v1057, %v1416
  %v1552 = vmax.f32 %v1062, %v1421
  %v1553 = vmax.f32 %v1067, %v1426
  %v1554 = vmax.f32 %v1072, %v1431
  %v1555 = vmax.f32 %v1077, %v1436
  %v1556 = vmax.f32 %v1082, %v1441
  %v1557 = vmax.f32 %v1087, %v1446
  %v1558 = vmax.f32 %v1092, %v1451
  %v1559 = vmax.f32 %v1097, %v1456
  %v1560 = vmax.f32 %v1102, %v1461
  %v1561 = vmax.f32 %v1107, %v1466
  %v1562 = vmax.f32 %v1112, %v1471
  %v1563 = vmax.f32 %v1117, %v1476
  %v1564 = vmax.f32 %v1122, %v1481
  %v1565 = vmax.f32 %v1127, %v1486
  %v1566 = vmax.f32 %v1132, %v1491
  %v1567 = vmax.f32 %v1137, %v1496
  %v1568 = vmax.f32 %v1142, %v1501
  %v1569 = vmax.f32 %v1147, %v1506
  %v1570 = vmax.f32 %v1152, %v1511
  %v1571 = vmax.f32 %v1157, %v1516
  %v1572 = vmax.f32 %v1162, %v1521
  %v1573 = vmax.f32 %v757, %v1524
  %v1574 = vmax.f32 %v758, %v1525
  %v1575 = vmax.f32 %v759, %v1526
  %v1576 = vmax.f32 %v760, %v1527
  %v1577 = vmax.f32 %v761, %v1528
  %v1578 = vmax.f32 %v762, %v1529
  %v1579 = vmax.f32 %v763, %v1530
  %v1580 = vmax.f32 %v764, %v1531
  %v1581 = vmax.f32 %v765, %v1532
  %v1582 = vmax.f32 %v766, %v1533
  %v1583 = vmax.f32 %v767, %v1534
  %v1584 = vmax.f32 %v768, %v1535
  %v1585 = vmax.f32 %v769, %v1536
  %v1586 = vmax.f32 %v770, %v1537
  %v1587 = vmax.f32 %v771, %v1538
  %v1588 = vmax.f32 %v772, %v1539
  %v1589 = vmax.f32 %v773, %v1540
  %v1590 = vmax.f32 %v774, %v1541
  %v1591 = vmax.f32 %v775, %v1542
  %v1592 = vmax.f32 %v776, %v1543
  %v1593 = vmax.f32 %v777, %v1544
  %v1594 = vmax.f32 %v778, %v1545
  %v1595 = vmax.f32 %v779, %v1546
  %v1596 = vmax.f32 %v780, %v1547
  %v1597 = vmax.f32 %v781, %v1548
  %v1598 = vmax.f32 %v782, %v1549
  %v1599 = vmax.f32 %v783, %v1550
  %v1600 = vmax.f32 %v784, %v1551
  %v1601 = vmax.f32 %v785, %v1552
  %v1602 = vmax.f32 %v786, %v1553
  %v1603 = vmax.f32 %v787, %v1554
  %v1604 = vmax.f32 %v788, %v1555
  %v1605 = vmax.f32 %v789, %v1556
  %v1606 = vmax.f32 %v790, %v1557
  %v1607 = vmax.f32 %v791, %v1558
  %v1608 = vmax.f32 %v792, %v1559
  %v1609 = vmax.f32 %v793, %v1560
  %v1610 = vmax.f32 %v794, %v1561
  %v1611 = vmax.f32 %v795, %v1562
  %v1612 = vmax.f32 %v796, %v1563
  %v1613 = vmax.f32 %v797, %v1564
  %v1614 = vmax.f32 %v798, %v1565
  %v1615 = vmax.f32 %v799, %v1566
  %v1616 = vmax.f32 %v800, %v1567
  %v1617 = vmax.f32 %v801, %v1568
  %v1618 = vmax.f32 %v802, %v1569
  %v1619 = vmax.f32 %v803, %v1570
  %v1620 = vmax.f32 %v804, %v1571
  %v1621 = vmax.f32 %v805, %v1572
  %v1622 = vld [vmem:[%s5] sm:$0x1]
  %v1624 = vlaneseq
  %v1625 = vshrl.u32 %v1624, 7
  %v1626 = vsub.s32 0, %v1625
  %v1627 = vrot.slane %v1622, %v1626
  %v1629 = vadd.f32 %v1573, %v1627
  %v1630 = vadd.f32 %v1574, %v1627
  %v1631 = vadd.f32 %v1575, %v1627
  %v1632 = vadd.f32 %v1576, %v1627
  %v1633 = vadd.f32 %v1577, %v1627
  %v1634 = vadd.f32 %v1578, %v1627
  %v1635 = vadd.f32 %v1579, %v1627
  %v1636 = vadd.f32 %v1580, %v1627
  %v1637 = vadd.f32 %v1581, %v1627
  %v1638 = vadd.f32 %v1582, %v1627
  %v1639 = vadd.f32 %v1583, %v1627
  %v1640 = vadd.f32 %v1584, %v1627
  %v1641 = vadd.f32 %v1585, %v1627
  %v1642 = vadd.f32 %v1586, %v1627
  %v1643 = vadd.f32 %v1587, %v1627
  %v1644 = vadd.f32 %v1588, %v1627
  %v1645 = vadd.f32 %v1589, %v1627
  %v1646 = vadd.f32 %v1590, %v1627
  %v1647 = vadd.f32 %v1591, %v1627
  %v1648 = vadd.f32 %v1592, %v1627
  %v1649 = vadd.f32 %v1593, %v1627
  %v1650 = vadd.f32 %v1594, %v1627
  %v1651 = vadd.f32 %v1595, %v1627
  %v1652 = vadd.f32 %v1596, %v1627
  %v1653 = vadd.f32 %v1597, %v1627
  %v1654 = vadd.f32 %v1598, %v1627
  %v1655 = vadd.f32 %v1599, %v1627
  %v1656 = vadd.f32 %v1600, %v1627
  %v1657 = vadd.f32 %v1601, %v1627
  %v1658 = vadd.f32 %v1602, %v1627
  %v1659 = vadd.f32 %v1603, %v1627
  %v1660 = vadd.f32 %v1604, %v1627
  %v1661 = vadd.f32 %v1605, %v1627
  %v1662 = vadd.f32 %v1606, %v1627
  %v1663 = vadd.f32 %v1607, %v1627
  %v1664 = vadd.f32 %v1608, %v1627
  %v1665 = vadd.f32 %v1609, %v1627
  %v1666 = vadd.f32 %v1610, %v1627
  %v1667 = vadd.f32 %v1611, %v1627
  %v1668 = vadd.f32 %v1612, %v1627
  %v1669 = vadd.f32 %v1613, %v1627
  %v1670 = vadd.f32 %v1614, %v1627
  %v1671 = vadd.f32 %v1615, %v1627
  %v1672 = vadd.f32 %v1616, %v1627
  %v1673 = vadd.f32 %v1617, %v1627
  %v1674 = vadd.f32 %v1618, %v1627
  %v1675 = vadd.f32 %v1619, %v1627
  %v1676 = vadd.f32 %v1620, %v1627
  %v1677 = vadd.f32 %v1621, %v1627
  %v1678 = vmax.f32 %v1629, 0.0
  %v1679 = vmax.f32 %v1630, 0.0
  %v1680 = vmax.f32 %v1631, 0.0
  %v1681 = vmax.f32 %v1632, 0.0
  %v1682 = vmax.f32 %v1633, 0.0
  %v1683 = vmax.f32 %v1634, 0.0
  %v1684 = vmax.f32 %v1635, 0.0
  %v1685 = vmax.f32 %v1636, 0.0
  %v1686 = vmax.f32 %v1637, 0.0
  %v1687 = vmax.f32 %v1638, 0.0
  %v1688 = vmax.f32 %v1639, 0.0
  %v1689 = vmax.f32 %v1640, 0.0
  %v1690 = vmax.f32 %v1641, 0.0
  %v1691 = vmax.f32 %v1642, 0.0
  %v1692 = vmax.f32 %v1643, 0.0
  %v1693 = vmax.f32 %v1644, 0.0
  %v1694 = vmax.f32 %v1645, 0.0
  %v1695 = vmax.f32 %v1646, 0.0
  %v1696 = vmax.f32 %v1647, 0.0
  %v1697 = vmax.f32 %v1648, 0.0
  %v1698 = vmax.f32 %v1649, 0.0
  %v1699 = vmax.f32 %v1650, 0.0
  %v1700 = vmax.f32 %v1651, 0.0
  %v1701 = vmax.f32 %v1652, 0.0
  %v1702 = vmax.f32 %v1653, 0.0
  %v1703 = vmax.f32 %v1654, 0.0
  %v1704 = vmax.f32 %v1655, 0.0
  %v1705 = vmax.f32 %v1656, 0.0
  %v1706 = vmax.f32 %v1657, 0.0
  %v1707 = vmax.f32 %v1658, 0.0
  %v1708 = vmax.f32 %v1659, 0.0
  %v1709 = vmax.f32 %v1660, 0.0
  %v1710 = vmax.f32 %v1661, 0.0
  %v1711 = vmax.f32 %v1662, 0.0
  %v1712 = vmax.f32 %v1663, 0.0
  %v1713 = vmax.f32 %v1664, 0.0
  %v1714 = vmax.f32 %v1665, 0.0
  %v1715 = vmax.f32 %v1666, 0.0
  %v1716 = vmax.f32 %v1667, 0.0
  %v1717 = vmax.f32 %v1668, 0.0
  %v1718 = vmax.f32 %v1669, 0.0
  %v1719 = vmax.f32 %v1670, 0.0
  %v1720 = vmax.f32 %v1671, 0.0
  %v1721 = vmax.f32 %v1672, 0.0
  %v1722 = vmax.f32 %v1673, 0.0
  %v1723 = vmax.f32 %v1674, 0.0
  %v1724 = vmax.f32 %v1675, 0.0
  %v1725 = vmax.f32 %v1676, 0.0
  %v1726 = vmax.f32 %v1677, 0.0
  %1727 = vst [vmem:[%s6] sm:$0xff] %v1678
  %1728 = vst [vmem:[%s6 + $0x8] sm:$0xff] %v1679
  %1729 = vst [vmem:[%s6 + $0x10] sm:$0xff] %v1680
  %1730 = vst [vmem:[%s6 + $0x18] sm:$0xff] %v1681
  %1731 = vst [vmem:[%s6 + $0x20] sm:$0xff] %v1682
  %1732 = vst [vmem:[%s6 + $0x28] sm:$0xff] %v1683
  %1733 = vst [vmem:[%s6 + $0x30] sm:$0xff] %v1684
  %1734 = vst [vmem:[%s6 + $0x38] sm:$0xff] %v1685
  %1735 = vst [vmem:[%s6 + $0x40] sm:$0xff] %v1686
  %1736 = vst [vmem:[%s6 + $0x48] sm:$0xff] %v1687
  %1737 = vst [vmem:[%s6 + $0x50] sm:$0xff] %v1688
  %1738 = vst [vmem:[%s6 + $0x58] sm:$0xff] %v1689
  %1739 = vst [vmem:[%s6 + $0x60] sm:$0xff] %v1690
  %1740 = vst [vmem:[%s6 + $0x68] sm:$0xff] %v1691
  %1741 = vst [vmem:[%s6 + $0x70] sm:$0xff] %v1692
  %1742 = vst [vmem:[%s6 + $0x78] sm:$0xff] %v1693
  %1743 = vst [vmem:[%s6 + $0x80] sm:$0xff] %v1694
  %1744 = vst [vmem:[%s6 + $0x88] sm:$0xff] %v1695
  %1745 = vst [vmem:[%s6 + $0x90] sm:$0xff] %v1696
  %1746 = vst [vmem:[%s6 + $0x98] sm:$0xff] %v1697
  %1747 = vst [vmem:[%s6 + $0xa0] sm:$0xff] %v1698
  %1748 = vst [vmem:[%s6 + $0xa8] sm:$0xff] %v1699
  %1749 = vst [vmem:[%s6 + $0xb0] sm:$0xff] %v1700
  %1750 = vst [vmem:[%s6 + $0xb8] sm:$0xff] %v1701
  %1751 = vst [vmem:[%s6 + $0xc0] sm:$0xff] %v1702
  %1752 = vst [vmem:[%s6 + $0xc8] sm:$0xff] %v1703
  %1753 = vst [vmem:[%s6 + $0xd0] sm:$0xff] %v1704
  %1754 = vst [vmem:[%s6 + $0xd8] sm:$0xff] %v1705
  %1755 = vst [vmem:[%s6 + $0xe0] sm:$0xff] %v1706
  %1756 = vst [vmem:[%s6 + $0xe8] sm:$0xff] %v1707
  %1757 = vst [vmem:[%s6 + $0xf0] sm:$0xff] %v1708
  %1758 = vst [vmem:[%s6 + $0xf8] sm:$0xff] %v1709
  %1759 = vst [vmem:[%s6 + $0x100] sm:$0xff] %v1710
  %1760 = vst [vmem:[%s6 + $0x108] sm:$0xff] %v1711
  %1761 = vst [vmem:[%s6 + $0x110] sm:$0xff] %v1712
  %1762 = vst [vmem:[%s6 + $0x118] sm:$0xff] %v1713
  %1763 = vst [vmem:[%s6 + $0x120] sm:$0xff] %v1714
  %1764 = vst [vmem:[%s6 + $0x128] sm:$0xff] %v1715
  %1765 = vst [vmem:[%s6 + $0x130] sm:$0xff] %v1716
  %1766 = vst [vmem:[%s6 + $0x138] sm:$0xff] %v1717
  %1767 = vst [vmem:[%s6 + $0x140] sm:$0xff] %v1718
  %1768 = vst [vmem:[%s6 + $0x148] sm:$0xff] %v1719
  %1769 = vst [vmem:[%s6 + $0x150] sm:$0xff] %v1720
  %1770 = vst [vmem:[%s6 + $0x158] sm:$0xff] %v1721
  %1771 = vst [vmem:[%s6 + $0x160] sm:$0xff] %v1722
  %1772 = vst [vmem:[%s6 + $0x168] sm:$0xff] %v1723
  %1773 = vst [vmem:[%s6 + $0x170] sm:$0xff] %v1724
  %1774 = vst [vmem:[%s6 + $0x178] sm:$0xff] %v1725
  %1775 = vst [vmem:[%s6 + $0x180] sm:$0xff] %v1726
  // Predicated region
  $region26: #{lenet_forward.3} parent=0 // pred_check
    _
  $region27: #{lenet_forward.3} parent=0 // pred_check_branch
    %1777 = sbr.rel (0) target = $region29
  $region28: #{lenet_forward.3} parent=0 // pred_region
    _
  $region29: #{lenet_forward.3} parent=0 // pred_fallthru
    _
  // Predicated region
  $region30: #{lenet_forward.3} parent=0 // pred_check
    _
  $region31: #{lenet_forward.3} parent=0 // pred_check_branch
    %1779 = sbr.rel (0) target = $region33
  $region32: #{lenet_forward.3} parent=0 // pred_region
    _
  $region33: #{lenet_forward.3} parent=0 // pred_fallthru
    _

// kernel: lenet_forward.4
$region0: #{lenet_forward.4}
  #allocation0 [shape = 'u32[]', space=smem, size = 0x4, offset = 0x4, fixed_abs, tag = 'smem constant byte address 0x4 - core index']
  #allocation1 [shape = 'u32[144,128]{1,0:T(1,128)}', space=vmem, size = 0x12000, scoped, tag = 'internal scratch']
  %s0 = inlined_call_operand.vmem [shape: f32[50,256], index: 0, kind: input, shape index: {}]
  %s1 = inlined_call_operand.vmem [shape: f32[50,256], index: 1, kind: input, shape index: {}]
  %s2 = inlined_call_operand.vmem [shape: f32[50,256], index: 2, kind: input, shape index: {}]
  %s3 = inlined_call_operand.vmem [shape: f32[50,256], index: 3, kind: input, shape index: {}]
  %s4 = inlined_call_operand.vmem [shape: f32[256,128], index: 4, kind: input, shape index: {}]
  %s5 = inlined_call_operand.vmem [shape: f32[1,128], index: 5, kind: input, shape index: {}]
  %s6 = inlined_call_operand.vmem [shape: f32[50,128], index: 6, kind: output, shape index: {}]
  %s7 = sld [smem:[#allocation0]]
  $region34: #{lenet_forward.4} parent=0
    _
  %s9 = ssub.s32 1, %s7
  %s10 = scalar_select 0, %s9, %s7
  // Predicated region
  $region2: #{lenet_forward.4} parent=0 // pred_check
    _
  $region3: #{lenet_forward.4} parent=0 // pred_check_branch
    %12 = sbr.rel (0) target = $region5
  $region4: #{lenet_forward.4} parent=0 // pred_region
    _
  $region5: #{lenet_forward.4} parent=0 // pred_fallthru
    _
  // Predicated region
  $region6: #{lenet_forward.4} parent=0 // pred_check
    _
  $region7: #{lenet_forward.4} parent=0 // pred_check_branch
    %14 = sbr.rel (0) target = $region9
  $region8: #{lenet_forward.4} parent=0 // pred_region
    _
  $region9: #{lenet_forward.4} parent=0 // pred_fallthru
    _
  // Predicated region
  $region10: #{lenet_forward.4} parent=0 // pred_check
    _
  $region11: #{lenet_forward.4} parent=0 // pred_check_branch
    %16 = sbr.rel (0) target = $region13
  $region12: #{lenet_forward.4} parent=0 // pred_region
    _
  $region13: #{lenet_forward.4} parent=0 // pred_fallthru
    _
  // Predicated region
  $region14: #{lenet_forward.4} parent=0 // pred_check
    _
  $region15: #{lenet_forward.4} parent=0 // pred_check_branch
    %18 = sbr.rel (0) target = $region17
  $region16: #{lenet_forward.4} parent=0 // pred_region
    _
  $region17: #{lenet_forward.4} parent=0 // pred_fallthru
    _
  // Predicated region
  $region18: #{lenet_forward.4} parent=0 // pred_check
    _
  $region19: #{lenet_forward.4} parent=0 // pred_check_branch
    %20 = sbr.rel (0) target = $region21
  $region20: #{lenet_forward.4} parent=0 // pred_region
    _
  $region21: #{lenet_forward.4} parent=0 // pred_fallthru
    _
  // Predicated region
  $region22: #{lenet_forward.4} parent=0 // pred_check
    _
  $region23: #{lenet_forward.4} parent=0 // pred_check_branch
    %22 = sbr.rel (0) target = $region25
  $region24: #{lenet_forward.4} parent=0 // pred_region
    _
  $region25: #{lenet_forward.4} parent=0 // pred_fallthru
    _
  %v23 = vld [vmem:[%s4] sm:$0xff]
  %v24 = vld [vmem:[%s4 + $0x8] sm:$0xff]
  %v25 = vld [vmem:[%s4 + $0x10] sm:$0xff]
  %v26 = vld [vmem:[%s4 + $0x18] sm:$0xff]
  %v27 = vld [vmem:[%s4 + $0x20] sm:$0xff]
  %v28 = vld [vmem:[%s4 + $0x28] sm:$0xff]
  %v29 = vld [vmem:[%s4 + $0x30] sm:$0xff]
  %v30 = vld [vmem:[%s4 + $0x38] sm:$0xff]
  %v31 = vld [vmem:[%s4 + $0x40] sm:$0xff]
  %v32 = vld [vmem:[%s4 + $0x48] sm:$0xff]
  %v33 = vld [vmem:[%s4 + $0x50] sm:$0xff]
  %v34 = vld [vmem:[%s4 + $0x58] sm:$0xff]
  %v35 = vld [vmem:[%s4 + $0x60] sm:$0xff]
  %v36 = vld [vmem:[%s4 + $0x68] sm:$0xff]
  %v37 = vld [vmem:[%s4 + $0x70] sm:$0xff]
  %v38 = vld [vmem:[%s4 + $0x78] sm:$0xff]
  %v39 = vld [vmem:[%s4 + $0x80] sm:$0xff]
  %v40 = vld [vmem:[%s4 + $0x88] sm:$0xff]
  %v41 = vld [vmem:[%s4 + $0x90] sm:$0xff]
  %v42 = vld [vmem:[%s4 + $0x98] sm:$0xff]
  %v43 = vld [vmem:[%s4 + $0xa0] sm:$0xff]
  %v44 = vld [vmem:[%s4 + $0xa8] sm:$0xff]
  %v45 = vld [vmem:[%s4 + $0xb0] sm:$0xff]
  %v46 = vld [vmem:[%s4 + $0xb8] sm:$0xff]
  %v47 = vld [vmem:[%s4 + $0xc0] sm:$0xff]
  %v48 = vld [vmem:[%s4 + $0xc8] sm:$0xff]
  %v49 = vld [vmem:[%s4 + $0xd0] sm:$0xff]
  %v50 = vld [vmem:[%s4 + $0xd8] sm:$0xff]
  %v51 = vld [vmem:[%s4 + $0xe0] sm:$0xff]
  %v52 = vld [vmem:[%s4 + $0xe8] sm:$0xff]
  %v53 = vld [vmem:[%s4 + $0xf0] sm:$0xff]
  %v54 = vld [vmem:[%s4 + $0xf8] sm:$0xff]
  %v55 = vld [vmem:[%s0] sm:$0xff]
  %v56 = vld [vmem:[%s0 + $0x8] sm:$0xff]
  %v57 = vld [vmem:[%s0 + $0x10] sm:$0xff]
  %v58 = vld [vmem:[%s0 + $0x18] sm:$0xff]
  %v59 = vld [vmem:[%s0 + $0x20] sm:$0xff]
  %v60 = vld [vmem:[%s0 + $0x28] sm:$0xff]
  %v61 = vld [vmem:[%s0 + $0x30] sm:$0xff]
  %v62 = vld [vmem:[%s0 + $0x38] sm:$0xff]
  %v63 = vld [vmem:[%s0 + $0x40] sm:$0xff]
  %v64 = vld [vmem:[%s0 + $0x48] sm:$0xff]
  %v65 = vld [vmem:[%s0 + $0x50] sm:$0xff]
  %v66 = vld [vmem:[%s0 + $0x58] sm:$0xff]
  %v67 = vld [vmem:[%s0 + $0x60] sm:$0x3]
  %v68 = vld [vmem:[%s0 + $0x68] sm:$0x3]
  %69 = vmatprep.subr.mxu0 0.0
  %70 = vmatpush1.msra.mxu0 %v38
  %71 = vmatprep.subr.mxu0 0.0
  %72 = vmatpush1.msra.mxu0 %v37
  %73 = vmatprep.subr.mxu0 0.0
  %74 = vmatpush1.msra.mxu0 %v36
  %75 = vmatprep.subr.mxu0 0.0
  %76 = vmatpush1.msra.mxu0 %v35
  %77 = vmatprep.subr.mxu0 0.0
  %78 = vmatpush1.msra.mxu0 %v34
  %79 = vmatprep.subr.mxu0 0.0
  %80 = vmatpush1.msra.mxu0 %v33
  %81 = vmatprep.subr.mxu0 0.0
  %82 = vmatpush1.msra.mxu0 %v32
  %83 = vmatprep.subr.mxu0 0.0
  %84 = vmatpush1.msra.mxu0 %v31
  %85 = vmatprep.subr.mxu0 0.0
  %86 = vmatpush1.msra.mxu0 %v30
  %87 = vmatprep.subr.mxu0 0.0
  %88 = vmatpush1.msra.mxu0 %v29
  %89 = vmatprep.subr.mxu0 0.0
  %90 = vmatpush1.msra.mxu0 %v28
  %91 = vmatprep.subr.mxu0 0.0
  %92 = vmatpush1.msra.mxu0 %v27
  %93 = vmatprep.subr.mxu0 0.0
  %94 = vmatpush1.msra.mxu0 %v26
  %95 = vmatprep.subr.mxu0 0.0
  %96 = vmatpush1.msra.mxu0 %v25
  %97 = vmatprep.subr.mxu0 0.0
  %98 = vmatpush1.msra.mxu0 %v24
  %99 = vmatprep.subr.mxu0 0.0
  %100 = vmatpush1.msra.mxu0 %v23
  %101 = vmatprep.subr.mxu0 0.0
  %102 = vmatpush2.msra.mxu0 %v54
  %103 = vmatprep.subr.mxu0 0.0
  %104 = vmatpush2.msra.mxu0 %v53
  %105 = vmatprep.subr.mxu0 0.0
  %106 = vmatpush2.msra.mxu0 %v52
  %107 = vmatprep.subr.mxu0 0.0
  %108 = vmatpush2.msra.mxu0 %v51
  %109 = vmatprep.subr.mxu0 0.0
  %110 = vmatpush2.msra.mxu0 %v50
  %111 = vmatprep.subr.mxu0 0.0
  %112 = vmatpush2.msra.mxu0 %v49
  %113 = vmatprep.subr.mxu0 0.0
  %114 = vmatpush2.msra.mxu0 %v48
  %115 = vmatprep.subr.mxu0 0.0
  %116 = vmatpush2.msra.mxu0 %v47
  %117 = vmatprep.subr.mxu0 0.0
  %118 = vmatpush2.msra.mxu0 %v46
  %119 = vmatprep.subr.mxu0 0.0
  %120 = vmatpush2.msra.mxu0 %v45
  %121 = vmatprep.subr.mxu0 0.0
  %122 = vmatpush2.msra.mxu0 %v44
  %123 = vmatprep.subr.mxu0 0.0
  %124 = vmatpush2.msra.mxu0 %v43
  %125 = vmatprep.subr.mxu0 0.0
  %126 = vmatpush2.msra.mxu0 %v42
  %127 = vmatprep.subr.mxu0 0.0
  %128 = vmatpush2.msra.mxu0 %v41
  %129 = vmatprep.subr.mxu0 0.0
  %130 = vmatpush2.msra.mxu0 %v40
  %131 = vmatprep.subr.mxu0 0.0
  %132 = vmatpush2.msra.mxu0 %v39
  %133 = vmatprep.mubr.f32.mxu0 %v56
  %134 = vmatmul.mubr.f32.gmra.mxu0 %v55
  %v135 = vpop.f32.mrf.mxu0
  %v136 = vadd.f32 0.0, %v135
  %v137 = vpop.f32.mrf.mxu0
  %138 = vmatprep.mubr.f32.mxu0 %v58
  %139 = vmatmul.mubr.f32.gmra.mxu0 %v57
  %v140 = vpop.f32.mrf.mxu0
  %v141 = vadd.f32 0.0, %v140
  %v142 = vpop.f32.mrf.mxu0
  %143 = vmatprep.mubr.f32.mxu0 %v60
  %144 = vmatmul.mubr.f32.gmra.mxu0 %v59
  %v145 = vpop.f32.mrf.mxu0
  %v146 = vadd.f32 0.0, %v145
  %v147 = vpop.f32.mrf.mxu0
  %148 = vmatprep.mubr.f32.mxu0 %v62
  %149 = vmatmul.mubr.f32.gmra.mxu0 %v61
  %v150 = vpop.f32.mrf.mxu0
  %v151 = vadd.f32 0.0, %v150
  %v152 = vpop.f32.mrf.mxu0
  %153 = vmatprep.mubr.f32.mxu0 %v64
  %154 = vmatmul.mubr.f32.gmra.mxu0 %v63
  %v155 = vpop.f32.mrf.mxu0
  %v156 = vadd.f32 0.0, %v155
  %v157 = vpop.f32.mrf.mxu0
  %158 = vmatprep.mubr.f32.mxu0 %v66
  %159 = vmatmul.mubr.f32.gmra.mxu0 %v65
  %v160 = vpop.f32.mrf.mxu0
  %v161 = vadd.f32 0.0, %v160
  %v162 = vpop.f32.mrf.mxu0
  %163 = vmatprep.mubr.f32.mxu0 %v68
  %164 = vmatmul.mubr.f32.gmra.mxu0 %v67
  %v165 = vpop.f32.mrf.mxu0
  %v166 = vadd.f32 0.0, %v165
  %v167 = vpop.f32.mrf.mxu0
  %168 = vdwg.mxu0
  %v169 = vld [vmem:[%s1] sm:$0xff]
  %v170 = vld [vmem:[%s1 + $0x8] sm:$0xff]
  %v171 = vld [vmem:[%s1 + $0x10] sm:$0xff]
  %v172 = vld [vmem:[%s1 + $0x18] sm:$0xff]
  %v173 = vld [vmem:[%s1 + $0x20] sm:$0xff]
  %v174 = vld [vmem:[%s1 + $0x28] sm:$0xff]
  %v175 = vld [vmem:[%s1 + $0x30] sm:$0xff]
  %v176 = vld [vmem:[%s1 + $0x38] sm:$0xff]
  %v177 = vld [vmem:[%s1 + $0x40] sm:$0xff]
  %v178 = vld [vmem:[%s1 + $0x48] sm:$0xff]
  %v179 = vld [vmem:[%s1 + $0x50] sm:$0xff]
  %v180 = vld [vmem:[%s1 + $0x58] sm:$0xff]
  %v181 = vld [vmem:[%s1 + $0x60] sm:$0x3]
  %v182 = vld [vmem:[%s1 + $0x68] sm:$0x3]
  %183 = vmatprep.subr.mxu0 0.0
  %184 = vmatpush1.msra.mxu0 %v38
  %185 = vmatprep.subr.mxu0 0.0
  %186 = vmatpush1.msra.mxu0 %v37
  %187 = vmatprep.subr.mxu0 0.0
  %188 = vmatpush1.msra.mxu0 %v36
  %189 = vmatprep.subr.mxu0 0.0
  %190 = vmatpush1.msra.mxu0 %v35
  %191 = vmatprep.subr.mxu0 0.0
  %192 = vmatpush1.msra.mxu0 %v34
  %193 = vmatprep.subr.mxu0 0.0
  %194 = vmatpush1.msra.mxu0 %v33
  %195 = vmatprep.subr.mxu0 0.0
  %196 = vmatpush1.msra.mxu0 %v32
  %197 = vmatprep.subr.mxu0 0.0
  %198 = vmatpush1.msra.mxu0 %v31
  %199 = vmatprep.subr.mxu0 0.0
  %200 = vmatpush1.msra.mxu0 %v30
  %201 = vmatprep.subr.mxu0 0.0
  %202 = vmatpush1.msra.mxu0 %v29
  %203 = vmatprep.subr.mxu0 0.0
  %204 = vmatpush1.msra.mxu0 %v28
  %205 = vmatprep.subr.mxu0 0.0
  %206 = vmatpush1.msra.mxu0 %v27
  %207 = vmatprep.subr.mxu0 0.0
  %208 = vmatpush1.msra.mxu0 %v26
  %209 = vmatprep.subr.mxu0 0.0
  %210 = vmatpush1.msra.mxu0 %v25
  %211 = vmatprep.subr.mxu0 0.0
  %212 = vmatpush1.msra.mxu0 %v24
  %213 = vmatprep.subr.mxu0 0.0
  %214 = vmatpush1.msra.mxu0 %v23
  %215 = vmatprep.subr.mxu0 0.0
  %216 = vmatpush2.msra.mxu0 %v54
  %217 = vmatprep.subr.mxu0 0.0
  %218 = vmatpush2.msra.mxu0 %v53
  %219 = vmatprep.subr.mxu0 0.0
  %220 = vmatpush2.msra.mxu0 %v52
  %221 = vmatprep.subr.mxu0 0.0
  %222 = vmatpush2.msra.mxu0 %v51
  %223 = vmatprep.subr.mxu0 0.0
  %224 = vmatpush2.msra.mxu0 %v50
  %225 = vmatprep.subr.mxu0 0.0
  %226 = vmatpush2.msra.mxu0 %v49
  %227 = vmatprep.subr.mxu0 0.0
  %228 = vmatpush2.msra.mxu0 %v48
  %229 = vmatprep.subr.mxu0 0.0
  %230 = vmatpush2.msra.mxu0 %v47
  %231 = vmatprep.subr.mxu0 0.0
  %232 = vmatpush2.msra.mxu0 %v46
  %233 = vmatprep.subr.mxu0 0.0
  %234 = vmatpush2.msra.mxu0 %v45
  %235 = vmatprep.subr.mxu0 0.0
  %236 = vmatpush2.msra.mxu0 %v44
  %237 = vmatprep.subr.mxu0 0.0
  %238 = vmatpush2.msra.mxu0 %v43
  %239 = vmatprep.subr.mxu0 0.0
  %240 = vmatpush2.msra.mxu0 %v42
  %241 = vmatprep.subr.mxu0 0.0
  %242 = vmatpush2.msra.mxu0 %v41
  %243 = vmatprep.subr.mxu0 0.0
  %244 = vmatpush2.msra.mxu0 %v40
  %245 = vmatprep.subr.mxu0 0.0
  %246 = vmatpush2.msra.mxu0 %v39
  %247 = vmatprep.mubr.f32.mxu0 %v170
  %248 = vmatmul.mubr.f32.gmra.mxu0 %v169
  %v249 = vpop.f32.mrf.mxu0
  %v250 = vadd.f32 0.0, %v249
  %v251 = vpop.f32.mrf.mxu0
  %252 = vmatprep.mubr.f32.mxu0 %v172
  %253 = vmatmul.mubr.f32.gmra.mxu0 %v171
  %v254 = vpop.f32.mrf.mxu0
  %v255 = vadd.f32 0.0, %v254
  %v256 = vpop.f32.mrf.mxu0
  %257 = vmatprep.mubr.f32.mxu0 %v174
  %258 = vmatmul.mubr.f32.gmra.mxu0 %v173
  %v259 = vpop.f32.mrf.mxu0
  %v260 = vadd.f32 0.0, %v259
  %v261 = vpop.f32.mrf.mxu0
  %262 = vmatprep.mubr.f32.mxu0 %v176
  %263 = vmatmul.mubr.f32.gmra.mxu0 %v175
  %v264 = vpop.f32.mrf.mxu0
  %v265 = vadd.f32 0.0, %v264
  %v266 = vpop.f32.mrf.mxu0
  %267 = vmatprep.mubr.f32.mxu0 %v178
  %268 = vmatmul.mubr.f32.gmra.mxu0 %v177
  %v269 = vpop.f32.mrf.mxu0
  %v270 = vadd.f32 0.0, %v269
  %v271 = vpop.f32.mrf.mxu0
  %272 = vmatprep.mubr.f32.mxu0 %v180
  %273 = vmatmul.mubr.f32.gmra.mxu0 %v179
  %v274 = vpop.f32.mrf.mxu0
  %v275 = vadd.f32 0.0, %v274
  %v276 = vpop.f32.mrf.mxu0
  %277 = vmatprep.mubr.f32.mxu0 %v182
  %278 = vmatmul.mubr.f32.gmra.mxu0 %v181
  %v279 = vpop.f32.mrf.mxu0
  %v280 = vadd.f32 0.0, %v279
  %v281 = vpop.f32.mrf.mxu0
  %282 = vdwg.mxu0
  %v283 = vmax.f32 %v136, %v250
  %v284 = vmax.f32 %v141, %v255
  %v285 = vmax.f32 %v146, %v260
  %v286 = vmax.f32 %v151, %v265
  %v287 = vmax.f32 %v156, %v270
  %v288 = vmax.f32 %v161, %v275
  %v289 = vmax.f32 %v166, %v280
  %v290 = vld [vmem:[%s2] sm:$0xff]
  %v291 = vld [vmem:[%s2 + $0x8] sm:$0xff]
  %v292 = vld [vmem:[%s2 + $0x10] sm:$0xff]
  %v293 = vld [vmem:[%s2 + $0x18] sm:$0xff]
  %v294 = vld [vmem:[%s2 + $0x20] sm:$0xff]
  %v295 = vld [vmem:[%s2 + $0x28] sm:$0xff]
  %v296 = vld [vmem:[%s2 + $0x30] sm:$0xff]
  %v297 = vld [vmem:[%s2 + $0x38] sm:$0xff]
  %v298 = vld [vmem:[%s2 + $0x40] sm:$0xff]
  %v299 = vld [vmem:[%s2 + $0x48] sm:$0xff]
  %v300 = vld [vmem:[%s2 + $0x50] sm:$0xff]
  %v301 = vld [vmem:[%s2 + $0x58] sm:$0xff]
  %v302 = vld [vmem:[%s2 + $0x60] sm:$0x3]
  %v303 = vld [vmem:[%s2 + $0x68] sm:$0x3]
  %304 = vmatprep.subr.mxu0 0.0
  %305 = vmatpush1.msra.mxu0 %v38
  %306 = vmatprep.subr.mxu0 0.0
  %307 = vmatpush1.msra.mxu0 %v37
  %308 = vmatprep.subr.mxu0 0.0
  %309 = vmatpush1.msra.mxu0 %v36
  %310 = vmatprep.subr.mxu0 0.0
  %311 = vmatpush1.msra.mxu0 %v35
  %312 = vmatprep.subr.mxu0 0.0
  %313 = vmatpush1.msra.mxu0 %v34
  %314 = vmatprep.subr.mxu0 0.0
  %315 = vmatpush1.msra.mxu0 %v33
  %316 = vmatprep.subr.mxu0 0.0
  %317 = vmatpush1.msra.mxu0 %v32
  %318 = vmatprep.subr.mxu0 0.0
  %319 = vmatpush1.msra.mxu0 %v31
  %320 = vmatprep.subr.mxu0 0.0
  %321 = vmatpush1.msra.mxu0 %v30
  %322 = vmatprep.subr.mxu0 0.0
  %323 = vmatpush1.msra.mxu0 %v29
  %324 = vmatprep.subr.mxu0 0.0
  %325 = vmatpush1.msra.mxu0 %v28
  %326 = vmatprep.subr.mxu0 0.0
  %327 = vmatpush1.msra.mxu0 %v27
  %328 = vmatprep.subr.mxu0 0.0
  %329 = vmatpush1.msra.mxu0 %v26
  %330 = vmatprep.subr.mxu0 0.0
  %331 = vmatpush1.msra.mxu0 %v25
  %332 = vmatprep.subr.mxu0 0.0
  %333 = vmatpush1.msra.mxu0 %v24
  %334 = vmatprep.subr.mxu0 0.0
  %335 = vmatpush1.msra.mxu0 %v23
  %336 = vmatprep.subr.mxu0 0.0
  %337 = vmatpush2.msra.mxu0 %v54
  %338 = vmatprep.subr.mxu0 0.0
  %339 = vmatpush2.msra.mxu0 %v53
  %340 = vmatprep.subr.mxu0 0.0
  %341 = vmatpush2.msra.mxu0 %v52
  %342 = vmatprep.subr.mxu0 0.0
  %343 = vmatpush2.msra.mxu0 %v51
  %344 = vmatprep.subr.mxu0 0.0
  %345 = vmatpush2.msra.mxu0 %v50
  %346 = vmatprep.subr.mxu0 0.0
  %347 = vmatpush2.msra.mxu0 %v49
  %348 = vmatprep.subr.mxu0 0.0
  %349 = vmatpush2.msra.mxu0 %v48
  %350 = vmatprep.subr.mxu0 0.0
  %351 = vmatpush2.msra.mxu0 %v47
  %352 = vmatprep.subr.mxu0 0.0
  %353 = vmatpush2.msra.mxu0 %v46
  %354 = vmatprep.subr.mxu0 0.0
  %355 = vmatpush2.msra.mxu0 %v45
  %356 = vmatprep.subr.mxu0 0.0
  %357 = vmatpush2.msra.mxu0 %v44
  %358 = vmatprep.subr.mxu0 0.0
  %359 = vmatpush2.msra.mxu0 %v43
  %360 = vmatprep.subr.mxu0 0.0
  %361 = vmatpush2.msra.mxu0 %v42
  %362 = vmatprep.subr.mxu0 0.0
  %363 = vmatpush2.msra.mxu0 %v41
  %364 = vmatprep.subr.mxu0 0.0
  %365 = vmatpush2.msra.mxu0 %v40
  %366 = vmatprep.subr.mxu0 0.0
  %367 = vmatpush2.msra.mxu0 %v39
  %368 = vmatprep.mubr.f32.mxu0 %v291
  %369 = vmatmul.mubr.f32.gmra.mxu0 %v290
  %v370 = vpop.f32.mrf.mxu0
  %v371 = vadd.f32 0.0, %v370
  %v372 = vpop.f32.mrf.mxu0
  %373 = vmatprep.mubr.f32.mxu0 %v293
  %374 = vmatmul.mubr.f32.gmra.mxu0 %v292
  %v375 = vpop.f32.mrf.mxu0
  %v376 = vadd.f32 0.0, %v375
  %v377 = vpop.f32.mrf.mxu0
  %378 = vmatprep.mubr.f32.mxu0 %v295
  %379 = vmatmul.mubr.f32.gmra.mxu0 %v294
  %v380 = vpop.f32.mrf.mxu0
  %v381 = vadd.f32 0.0, %v380
  %v382 = vpop.f32.mrf.mxu0
  %383 = vmatprep.mubr.f32.mxu0 %v297
  %384 = vmatmul.mubr.f32.gmra.mxu0 %v296
  %v385 = vpop.f32.mrf.mxu0
  %v386 = vadd.f32 0.0, %v385
  %v387 = vpop.f32.mrf.mxu0
  %388 = vmatprep.mubr.f32.mxu0 %v299
  %389 = vmatmul.mubr.f32.gmra.mxu0 %v298
  %v390 = vpop.f32.mrf.mxu0
  %v391 = vadd.f32 0.0, %v390
  %v392 = vpop.f32.mrf.mxu0
  %393 = vmatprep.mubr.f32.mxu0 %v301
  %394 = vmatmul.mubr.f32.gmra.mxu0 %v300
  %v395 = vpop.f32.mrf.mxu0
  %v396 = vadd.f32 0.0, %v395
  %v397 = vpop.f32.mrf.mxu0
  %398 = vmatprep.mubr.f32.mxu0 %v303
  %399 = vmatmul.mubr.f32.gmra.mxu0 %v302
  %v400 = vpop.f32.mrf.mxu0
  %v401 = vadd.f32 0.0, %v400
  %v402 = vpop.f32.mrf.mxu0
  %403 = vdwg.mxu0
  %v404 = vld [vmem:[%s3] sm:$0xff]
  %v405 = vld [vmem:[%s3 + $0x8] sm:$0xff]
  %v406 = vld [vmem:[%s3 + $0x10] sm:$0xff]
  %v407 = vld [vmem:[%s3 + $0x18] sm:$0xff]
  %v408 = vld [vmem:[%s3 + $0x20] sm:$0xff]
  %v409 = vld [vmem:[%s3 + $0x28] sm:$0xff]
  %v410 = vld [vmem:[%s3 + $0x30] sm:$0xff]
  %v411 = vld [vmem:[%s3 + $0x38] sm:$0xff]
  %v412 = vld [vmem:[%s3 + $0x40] sm:$0xff]
  %v413 = vld [vmem:[%s3 + $0x48] sm:$0xff]
  %v414 = vld [vmem:[%s3 + $0x50] sm:$0xff]
  %v415 = vld [vmem:[%s3 + $0x58] sm:$0xff]
  %v416 = vld [vmem:[%s3 + $0x60] sm:$0x3]
  %v417 = vld [vmem:[%s3 + $0x68] sm:$0x3]
  %418 = vmatprep.subr.mxu0 0.0
  %419 = vmatpush1.msra.mxu0 %v38
  %420 = vmatprep.subr.mxu0 0.0
  %421 = vmatpush1.msra.mxu0 %v37
  %422 = vmatprep.subr.mxu0 0.0
  %423 = vmatpush1.msra.mxu0 %v36
  %424 = vmatprep.subr.mxu0 0.0
  %425 = vmatpush1.msra.mxu0 %v35
  %426 = vmatprep.subr.mxu0 0.0
  %427 = vmatpush1.msra.mxu0 %v34
  %428 = vmatprep.subr.mxu0 0.0
  %429 = vmatpush1.msra.mxu0 %v33
  %430 = vmatprep.subr.mxu0 0.0
  %431 = vmatpush1.msra.mxu0 %v32
  %432 = vmatprep.subr.mxu0 0.0
  %433 = vmatpush1.msra.mxu0 %v31
  %434 = vmatprep.subr.mxu0 0.0
  %435 = vmatpush1.msra.mxu0 %v30
  %436 = vmatprep.subr.mxu0 0.0
  %437 = vmatpush1.msra.mxu0 %v29
  %438 = vmatprep.subr.mxu0 0.0
  %439 = vmatpush1.msra.mxu0 %v28
  %440 = vmatprep.subr.mxu0 0.0
  %441 = vmatpush1.msra.mxu0 %v27
  %442 = vmatprep.subr.mxu0 0.0
  %443 = vmatpush1.msra.mxu0 %v26
  %444 = vmatprep.subr.mxu0 0.0
  %445 = vmatpush1.msra.mxu0 %v25
  %446 = vmatprep.subr.mxu0 0.0
  %447 = vmatpush1.msra.mxu0 %v24
  %448 = vmatprep.subr.mxu0 0.0
  %449 = vmatpush1.msra.mxu0 %v23
  %450 = vmatprep.subr.mxu0 0.0
  %451 = vmatpush2.msra.mxu0 %v54
  %452 = vmatprep.subr.mxu0 0.0
  %453 = vmatpush2.msra.mxu0 %v53
  %454 = vmatprep.subr.mxu0 0.0
  %455 = vmatpush2.msra.mxu0 %v52
  %456 = vmatprep.subr.mxu0 0.0
  %457 = vmatpush2.msra.mxu0 %v51
  %458 = vmatprep.subr.mxu0 0.0
  %459 = vmatpush2.msra.mxu0 %v50
  %460 = vmatprep.subr.mxu0 0.0
  %461 = vmatpush2.msra.mxu0 %v49
  %462 = vmatprep.subr.mxu0 0.0
  %463 = vmatpush2.msra.mxu0 %v48
  %464 = vmatprep.subr.mxu0 0.0
  %465 = vmatpush2.msra.mxu0 %v47
  %466 = vmatprep.subr.mxu0 0.0
  %467 = vmatpush2.msra.mxu0 %v46
  %468 = vmatprep.subr.mxu0 0.0
  %469 = vmatpush2.msra.mxu0 %v45
  %470 = vmatprep.subr.mxu0 0.0
  %471 = vmatpush2.msra.mxu0 %v44
  %472 = vmatprep.subr.mxu0 0.0
  %473 = vmatpush2.msra.mxu0 %v43
  %474 = vmatprep.subr.mxu0 0.0
  %475 = vmatpush2.msra.mxu0 %v42
  %476 = vmatprep.subr.mxu0 0.0
  %477 = vmatpush2.msra.mxu0 %v41
  %478 = vmatprep.subr.mxu0 0.0
  %479 = vmatpush2.msra.mxu0 %v40
  %480 = vmatprep.subr.mxu0 0.0
  %481 = vmatpush2.msra.mxu0 %v39
  %482 = vmatprep.mubr.f32.mxu0 %v405
  %483 = vmatmul.mubr.f32.gmra.mxu0 %v404
  %v484 = vpop.f32.mrf.mxu0
  %v485 = vadd.f32 0.0, %v484
  %v486 = vpop.f32.mrf.mxu0
  %487 = vmatprep.mubr.f32.mxu0 %v407
  %488 = vmatmul.mubr.f32.gmra.mxu0 %v406
  %v489 = vpop.f32.mrf.mxu0
  %v490 = vadd.f32 0.0, %v489
  %v491 = vpop.f32.mrf.mxu0
  %492 = vmatprep.mubr.f32.mxu0 %v409
  %493 = vmatmul.mubr.f32.gmra.mxu0 %v408
  %v494 = vpop.f32.mrf.mxu0
  %v495 = vadd.f32 0.0, %v494
  %v496 = vpop.f32.mrf.mxu0
  %497 = vmatprep.mubr.f32.mxu0 %v411
  %498 = vmatmul.mubr.f32.gmra.mxu0 %v410
  %v499 = vpop.f32.mrf.mxu0
  %v500 = vadd.f32 0.0, %v499
  %v501 = vpop.f32.mrf.mxu0
  %502 = vmatprep.mubr.f32.mxu0 %v413
  %503 = vmatmul.mubr.f32.gmra.mxu0 %v412
  %v504 = vpop.f32.mrf.mxu0
  %v505 = vadd.f32 0.0, %v504
  %v506 = vpop.f32.mrf.mxu0
  %507 = vmatprep.mubr.f32.mxu0 %v415
  %508 = vmatmul.mubr.f32.gmra.mxu0 %v414
  %v509 = vpop.f32.mrf.mxu0
  %v510 = vadd.f32 0.0, %v509
  %v511 = vpop.f32.mrf.mxu0
  %512 = vmatprep.mubr.f32.mxu0 %v417
  %513 = vmatmul.mubr.f32.gmra.mxu0 %v416
  %v514 = vpop.f32.mrf.mxu0
  %v515 = vadd.f32 0.0, %v514
  %v516 = vpop.f32.mrf.mxu0
  %517 = vdwg.mxu0
  %v518 = vmax.f32 %v371, %v485
  %v519 = vmax.f32 %v376, %v490
  %v520 = vmax.f32 %v381, %v495
  %v521 = vmax.f32 %v386, %v500
  %v522 = vmax.f32 %v391, %v505
  %v523 = vmax.f32 %v396, %v510
  %v524 = vmax.f32 %v401, %v515
  %v525 = vmax.f32 %v283, %v518
  %v526 = vmax.f32 %v284, %v519
  %v527 = vmax.f32 %v285, %v520
  %v528 = vmax.f32 %v286, %v521
  %v529 = vmax.f32 %v287, %v522
  %v530 = vmax.f32 %v288, %v523
  %v531 = vmax.f32 %v289, %v524
  %v532 = vld [vmem:[%s5] sm:$0x1]
  %v534 = vlaneseq
  %v535 = vshrl.u32 %v534, 7
  %v536 = vsub.s32 0, %v535
  %v537 = vrot.slane %v532, %v536
  %v539 = vadd.f32 %v525, %v537
  %v540 = vadd.f32 %v526, %v537
  %v541 = vadd.f32 %v527, %v537
  %v542 = vadd.f32 %v528, %v537
  %v543 = vadd.f32 %v529, %v537
  %v544 = vadd.f32 %v530, %v537
  %v545 = vadd.f32 %v531, %v537
  %v546 = vmax.f32 %v539, 0.0
  %v547 = vmax.f32 %v540, 0.0
  %v548 = vmax.f32 %v541, 0.0
  %v549 = vmax.f32 %v542, 0.0
  %v550 = vmax.f32 %v543, 0.0
  %v551 = vmax.f32 %v544, 0.0
  %v552 = vmax.f32 %v545, 0.0
  %553 = vst [vmem:[%s6] sm:$0xff] %v546
  %554 = vst [vmem:[%s6 + $0x8] sm:$0xff] %v547
  %555 = vst [vmem:[%s6 + $0x10] sm:$0xff] %v548
  %556 = vst [vmem:[%s6 + $0x18] sm:$0xff] %v549
  %557 = vst [vmem:[%s6 + $0x20] sm:$0xff] %v550
  %558 = vst [vmem:[%s6 + $0x28] sm:$0xff] %v551
  %559 = vst [vmem:[%s6 + $0x30] sm:$0x3] %v552
  // Predicated region
  $region26: #{lenet_forward.4} parent=0 // pred_check
    _
  $region27: #{lenet_forward.4} parent=0 // pred_check_branch
    %561 = sbr.rel (0) target = $region29
  $region28: #{lenet_forward.4} parent=0 // pred_region
    _
  $region29: #{lenet_forward.4} parent=0 // pred_fallthru
    _
  // Predicated region
  $region30: #{lenet_forward.4} parent=0 // pred_check
    _
  $region31: #{lenet_forward.4} parent=0 // pred_check_branch
    %563 = sbr.rel (0) target = $region33
  $region32: #{lenet_forward.4} parent=0 // pred_region
    _
  $region33: #{lenet_forward.4} parent=0 // pred_fallthru
    _

// kernel: lenet_forward.5
$region0: #{lenet_forward.5}
  #allocation0 [shape = 'u32[]', space=smem, size = 0x4, offset = 0x4, fixed_abs, tag = 'smem constant byte address 0x4 - core index']
  #allocation1 [shape = 'u32[144,128]{1,0:T(1,128)}', space=vmem, size = 0x12000, scoped, tag = 'internal scratch']
  %s0 = inlined_call_operand.vmem [shape: f32[2,3200], index: 0, kind: input, shape index: {}]
  %s1 = inlined_call_operand.vmem [shape: f32[3200,120], index: 1, kind: input, shape index: {}]
  %s2 = inlined_call_operand.vmem [shape: f32[1,120], index: 2, kind: input, shape index: {}]
  %s3 = inlined_call_operand.vmem [shape: f32[120,84], index: 3, kind: input, shape index: {}]
  %s4 = inlined_call_operand.vmem [shape: f32[1,84], index: 4, kind: input, shape index: {}]
  %s5 = inlined_call_operand.vmem [shape: f32[84,10], index: 5, kind: input, shape index: {}]
  %s6 = inlined_call_operand.vmem [shape: f32[1,10], index: 6, kind: input, shape index: {}]
  %s7 = inlined_call_operand.hbm [shape: f32[2,10], index: 7, kind: output, shape index: {}]
  %s8 = sld [smem:[#allocation0]]
  $region38: #{lenet_forward.5} parent=0
    _
  %s10 = ssub.s32 1, %s8
  %s11 = scalar_select 0, %s10, %s8
  $region1: #{lenet_forward.5} parent=0
    #allocation2 [shape = 'u8[1024]{0}', space=vmem, size = 0x400, scoped, tag = 'output window, operand 0, single buffered']
    #allocation3 [shape = 's32[1]{0}', space=sflag, size = 0x4, scoped, tag = 'scoped memory for lenet_forward.5']
    %12 = vsyncpa [#allocation3], 0
    // Predicated region
    $region2: #{lenet_forward.5} parent=1 // pred_check
      _
    $region3: #{lenet_forward.5} parent=1 // pred_check_branch
      %14 = sbr.rel (0) target = $region5
    $region4: #{lenet_forward.5} parent=1 // pred_region
      _
    $region5: #{lenet_forward.5} parent=1 // pred_fallthru
      _
    // Predicated region
    $region6: #{lenet_forward.5} parent=1 // pred_check
      _
    $region7: #{lenet_forward.5} parent=1 // pred_check_branch
      %16 = sbr.rel (0) target = $region9
    $region8: #{lenet_forward.5} parent=1 // pred_region
      _
    $region9: #{lenet_forward.5} parent=1 // pred_fallthru
      _
    // Predicated region
    $region10: #{lenet_forward.5} parent=1 // pred_check
      _
    $region11: #{lenet_forward.5} parent=1 // pred_check_branch
      %18 = sbr.rel (0) target = $region13
    $region12: #{lenet_forward.5} parent=1 // pred_region
      _
    $region13: #{lenet_forward.5} parent=1 // pred_fallthru
      _
    // Predicated region
    $region14: #{lenet_forward.5} parent=1 // pred_check
      _
    $region15: #{lenet_forward.5} parent=1 // pred_check_branch
      %20 = sbr.rel (0) target = $region17
    $region16: #{lenet_forward.5} parent=1 // pred_region
      _
    $region17: #{lenet_forward.5} parent=1 // pred_fallthru
      _
    // Predicated region
    $region18: #{lenet_forward.5} parent=1 // pred_check
      _
    $region19: #{lenet_forward.5} parent=1 // pred_check_branch
      %22 = sbr.rel (0) target = $region21
    $region20: #{lenet_forward.5} parent=1 // pred_region
      _
    $region21: #{lenet_forward.5} parent=1 // pred_fallthru
      _
    // Predicated region
    $region22: #{lenet_forward.5} parent=1 // pred_check
      _
    $region23: #{lenet_forward.5} parent=1 // pred_check_branch
      %24 = sbr.rel (0) target = $region25
    $region24: #{lenet_forward.5} parent=1 // pred_region
      _
    $region25: #{lenet_forward.5} parent=1 // pred_fallthru
      _
    // Predicated region
    $region26: #{lenet_forward.5} parent=1 // pred_check
      _
    $region27: #{lenet_forward.5} parent=1 // pred_check_branch
      %26 = sbr.rel (0) target = $region29
    $region28: #{lenet_forward.5} parent=1 // pred_region
      _
    $region29: #{lenet_forward.5} parent=1 // pred_fallthru
      _
    %v27 = vld [vmem:[%s0] sm:$0xff]
    %v28 = vld [vmem:[%s0 + $0x8] sm:$0xff]
    %v29 = vld [vmem:[%s0 + $0x10] sm:$0xff]
    %v30 = vld [vmem:[%s0 + $0x18] sm:$0xff]
    %v31 = vld [vmem:[%s0 + $0x20] sm:$0xff]
    %v32 = vld [vmem:[%s0 + $0x28] sm:$0xff]
    %v33 = vld [vmem:[%s0 + $0x30] sm:$0x3]
    %v34 = vld [vmem:[%s1] sm:$0xff]
    %v35 = vld [vmem:[%s1 + $0x8] sm:$0xff]
    %v36 = vld [vmem:[%s1 + $0x10] sm:$0xff]
    %v37 = vld [vmem:[%s1 + $0x18] sm:$0xff]
    %v38 = vld [vmem:[%s1 + $0x20] sm:$0xff]
    %v39 = vld [vmem:[%s1 + $0x28] sm:$0xff]
    %v40 = vld [vmem:[%s1 + $0x30] sm:$0xff]
    %v41 = vld [vmem:[%s1 + $0x38] sm:$0xff]
    %v42 = vld [vmem:[%s1 + $0x40] sm:$0xff]
    %v43 = vld [vmem:[%s1 + $0x48] sm:$0xff]
    %v44 = vld [vmem:[%s1 + $0x50] sm:$0xff]
    %v45 = vld [vmem:[%s1 + $0x58] sm:$0xff]
    %v46 = vld [vmem:[%s1 + $0x60] sm:$0xff]
    %v47 = vld [vmem:[%s1 + $0x68] sm:$0xff]
    %v48 = vld [vmem:[%s1 + $0x70] sm:$0xff]
    %v49 = vld [vmem:[%s1 + $0x78] sm:$0xff]
    %v50 = vld [vmem:[%s1 + $0x80] sm:$0xff]
    %v51 = vld [vmem:[%s1 + $0x88] sm:$0xff]
    %v52 = vld [vmem:[%s1 + $0x90] sm:$0xff]
    %v53 = vld [vmem:[%s1 + $0x98] sm:$0xff]
    %v54 = vld [vmem:[%s1 + $0xa0] sm:$0xff]
    %v55 = vld [vmem:[%s1 + $0xa8] sm:$0xff]
    %v56 = vld [vmem:[%s1 + $0xb0] sm:$0xff]
    %v57 = vld [vmem:[%s1 + $0xb8] sm:$0xff]
    %v58 = vld [vmem:[%s1 + $0xc0] sm:$0xff]
    %v59 = vld [vmem:[%s1 + $0xc8] sm:$0xff]
    %v60 = vld [vmem:[%s1 + $0xd0] sm:$0xff]
    %v61 = vld [vmem:[%s1 + $0xd8] sm:$0xff]
    %v62 = vld [vmem:[%s1 + $0xe0] sm:$0xff]
    %v63 = vld [vmem:[%s1 + $0xe8] sm:$0xff]
    %v64 = vld [vmem:[%s1 + $0xf0] sm:$0xff]
    %v65 = vld [vmem:[%s1 + $0xf8] sm:$0xff]
    %v66 = vld [vmem:[%s1 + $0x100] sm:$0xff]
    %v67 = vld [vmem:[%s1 + $0x108] sm:$0xff]
    %v68 = vld [vmem:[%s1 + $0x110] sm:$0xff]
    %v69 = vld [vmem:[%s1 + $0x118] sm:$0xff]
    %v70 = vld [vmem:[%s1 + $0x120] sm:$0xff]
    %v71 = vld [vmem:[%s1 + $0x128] sm:$0xff]
    %v72 = vld [vmem:[%s1 + $0x130] sm:$0xff]
    %v73 = vld [vmem:[%s1 + $0x138] sm:$0xff]
    %v74 = vld [vmem:[%s1 + $0x140] sm:$0xff]
    %v75 = vld [vmem:[%s1 + $0x148] sm:$0xff]
    %v76 = vld [vmem:[%s1 + $0x150] sm:$0xff]
    %v77 = vld [vmem:[%s1 + $0x158] sm:$0xff]
    %v78 = vld [vmem:[%s1 + $0x160] sm:$0xff]
    %v79 = vld [vmem:[%s1 + $0x168] sm:$0xff]
    %v80 = vld [vmem:[%s1 + $0x170] sm:$0xff]
    %v81 = vld [vmem:[%s1 + $0x178] sm:$0xff]
    %v82 = vld [vmem:[%s1 + $0x180] sm:$0xff]
    %v83 = vld [vmem:[%s1 + $0x188] sm:$0xff]
    %v84 = vld [vmem:[%s1 + $0x190] sm:$0xff]
    %v85 = vld [vmem:[%s1 + $0x198] sm:$0xff]
    %v86 = vld [vmem:[%s1 + $0x1a0] sm:$0xff]
    %v87 = vld [vmem:[%s1 + $0x1a8] sm:$0xff]
    %v88 = vld [vmem:[%s1 + $0x1b0] sm:$0xff]
    %v89 = vld [vmem:[%s1 + $0x1b8] sm:$0xff]
    %v90 = vld [vmem:[%s1 + $0x1c0] sm:$0xff]
    %v91 = vld [vmem:[%s1 + $0x1c8] sm:$0xff]
    %v92 = vld [vmem:[%s1 + $0x1d0] sm:$0xff]
    %v93 = vld [vmem:[%s1 + $0x1d8] sm:$0xff]
    %v94 = vld [vmem:[%s1 + $0x1e0] sm:$0xff]
    %v95 = vld [vmem:[%s1 + $0x1e8] sm:$0xff]
    %v96 = vld [vmem:[%s1 + $0x1f0] sm:$0xff]
    %v97 = vld [vmem:[%s1 + $0x1f8] sm:$0xff]
    %v98 = vld [vmem:[%s1 + $0x200] sm:$0xff]
    %v99 = vld [vmem:[%s1 + $0x208] sm:$0xff]
    %v100 = vld [vmem:[%s1 + $0x210] sm:$0xff]
    %v101 = vld [vmem:[%s1 + $0x218] sm:$0xff]
    %v102 = vld [vmem:[%s1 + $0x220] sm:$0xff]
    %v103 = vld [vmem:[%s1 + $0x228] sm:$0xff]
    %v104 = vld [vmem:[%s1 + $0x230] sm:$0xff]
    %v105 = vld [vmem:[%s1 + $0x238] sm:$0xff]
    %v106 = vld [vmem:[%s1 + $0x240] sm:$0xff]
    %v107 = vld [vmem:[%s1 + $0x248] sm:$0xff]
    %v108 = vld [vmem:[%s1 + $0x250] sm:$0xff]
    %v109 = vld [vmem:[%s1 + $0x258] sm:$0xff]
    %v110 = vld [vmem:[%s1 + $0x260] sm:$0xff]
    %v111 = vld [vmem:[%s1 + $0x268] sm:$0xff]
    %v112 = vld [vmem:[%s1 + $0x270] sm:$0xff]
    %v113 = vld [vmem:[%s1 + $0x278] sm:$0xff]
    %v114 = vld [vmem:[%s1 + $0x280] sm:$0xff]
    %v115 = vld [vmem:[%s1 + $0x288] sm:$0xff]
    %v116 = vld [vmem:[%s1 + $0x290] sm:$0xff]
    %v117 = vld [vmem:[%s1 + $0x298] sm:$0xff]
    %v118 = vld [vmem:[%s1 + $0x2a0] sm:$0xff]
    %v119 = vld [vmem:[%s1 + $0x2a8] sm:$0xff]
    %v120 = vld [vmem:[%s1 + $0x2b0] sm:$0xff]
    %v121 = vld [vmem:[%s1 + $0x2b8] sm:$0xff]
    %v122 = vld [vmem:[%s1 + $0x2c0] sm:$0xff]
    %v123 = vld [vmem:[%s1 + $0x2c8] sm:$0xff]
    %v124 = vld [vmem:[%s1 + $0x2d0] sm:$0xff]
    %v125 = vld [vmem:[%s1 + $0x2d8] sm:$0xff]
    %v126 = vld [vmem:[%s1 + $0x2e0] sm:$0xff]
    %v127 = vld [vmem:[%s1 + $0x2e8] sm:$0xff]
    %v128 = vld [vmem:[%s1 + $0x2f0] sm:$0xff]
    %v129 = vld [vmem:[%s1 + $0x2f8] sm:$0xff]
    %v130 = vld [vmem:[%s1 + $0x300] sm:$0xff]
    %v131 = vld [vmem:[%s1 + $0x308] sm:$0xff]
    %v132 = vld [vmem:[%s1 + $0x310] sm:$0xff]
    %v133 = vld [vmem:[%s1 + $0x318] sm:$0xff]
    %v134 = vld [vmem:[%s1 + $0x320] sm:$0xff]
    %v135 = vld [vmem:[%s1 + $0x328] sm:$0xff]
    %v136 = vld [vmem:[%s1 + $0x330] sm:$0xff]
    %v137 = vld [vmem:[%s1 + $0x338] sm:$0xff]
    %v138 = vld [vmem:[%s1 + $0x340] sm:$0xff]
    %v139 = vld [vmem:[%s1 + $0x348] sm:$0xff]
    %v140 = vld [vmem:[%s1 + $0x350] sm:$0xff]
    %v141 = vld [vmem:[%s1 + $0x358] sm:$0xff]
    %v142 = vld [vmem:[%s1 + $0x360] sm:$0xff]
    %v143 = vld [vmem:[%s1 + $0x368] sm:$0xff]
    %v144 = vld [vmem:[%s1 + $0x370] sm:$0xff]
    %v145 = vld [vmem:[%s1 + $0x378] sm:$0xff]
    %v146 = vld [vmem:[%s1 + $0x380] sm:$0xff]
    %v147 = vld [vmem:[%s1 + $0x388] sm:$0xff]
    %v148 = vld [vmem:[%s1 + $0x390] sm:$0xff]
    %v149 = vld [vmem:[%s1 + $0x398] sm:$0xff]
    %v150 = vld [vmem:[%s1 + $0x3a0] sm:$0xff]
    %v151 = vld [vmem:[%s1 + $0x3a8] sm:$0xff]
    %v152 = vld [vmem:[%s1 + $0x3b0] sm:$0xff]
    %v153 = vld [vmem:[%s1 + $0x3b8] sm:$0xff]
    %v154 = vld [vmem:[%s1 + $0x3c0] sm:$0xff]
    %v155 = vld [vmem:[%s1 + $0x3c8] sm:$0xff]
    %v156 = vld [vmem:[%s1 + $0x3d0] sm:$0xff]
    %v157 = vld [vmem:[%s1 + $0x3d8] sm:$0xff]
    %v158 = vld [vmem:[%s1 + $0x3e0] sm:$0xff]
    %v159 = vld [vmem:[%s1 + $0x3e8] sm:$0xff]
    %v160 = vld [vmem:[%s1 + $0x3f0] sm:$0xff]
    %v161 = vld [vmem:[%s1 + $0x3f8] sm:$0xff]
    %v162 = vld [vmem:[%s1 + $0x400] sm:$0xff]
    %v163 = vld [vmem:[%s1 + $0x408] sm:$0xff]
    %v164 = vld [vmem:[%s1 + $0x410] sm:$0xff]
    %v165 = vld [vmem:[%s1 + $0x418] sm:$0xff]
    %v166 = vld [vmem:[%s1 + $0x420] sm:$0xff]
    %v167 = vld [vmem:[%s1 + $0x428] sm:$0xff]
    %v168 = vld [vmem:[%s1 + $0x430] sm:$0xff]
    %v169 = vld [vmem:[%s1 + $0x438] sm:$0xff]
    %v170 = vld [vmem:[%s1 + $0x440] sm:$0xff]
    %v171 = vld [vmem:[%s1 + $0x448] sm:$0xff]
    %v172 = vld [vmem:[%s1 + $0x450] sm:$0xff]
    %v173 = vld [vmem:[%s1 + $0x458] sm:$0xff]
    %v174 = vld [vmem:[%s1 + $0x460] sm:$0xff]
    %v175 = vld [vmem:[%s1 + $0x468] sm:$0xff]
    %v176 = vld [vmem:[%s1 + $0x470] sm:$0xff]
    %v177 = vld [vmem:[%s1 + $0x478] sm:$0xff]
    %v178 = vld [vmem:[%s1 + $0x480] sm:$0xff]
    %v179 = vld [vmem:[%s1 + $0x488] sm:$0xff]
    %v180 = vld [vmem:[%s1 + $0x490] sm:$0xff]
    %v181 = vld [vmem:[%s1 + $0x498] sm:$0xff]
    %v182 = vld [vmem:[%s1 + $0x4a0] sm:$0xff]
    %v183 = vld [vmem:[%s1 + $0x4a8] sm:$0xff]
    %v184 = vld [vmem:[%s1 + $0x4b0] sm:$0xff]
    %v185 = vld [vmem:[%s1 + $0x4b8] sm:$0xff]
    %v186 = vld [vmem:[%s1 + $0x4c0] sm:$0xff]
    %v187 = vld [vmem:[%s1 + $0x4c8] sm:$0xff]
    %v188 = vld [vmem:[%s1 + $0x4d0] sm:$0xff]
    %v189 = vld [vmem:[%s1 + $0x4d8] sm:$0xff]
    %v190 = vld [vmem:[%s1 + $0x4e0] sm:$0xff]
    %v191 = vld [vmem:[%s1 + $0x4e8] sm:$0xff]
    %v192 = vld [vmem:[%s1 + $0x4f0] sm:$0xff]
    %v193 = vld [vmem:[%s1 + $0x4f8] sm:$0xff]
    %v194 = vld [vmem:[%s1 + $0x500] sm:$0xff]
    %v195 = vld [vmem:[%s1 + $0x508] sm:$0xff]
    %v196 = vld [vmem:[%s1 + $0x510] sm:$0xff]
    %v197 = vld [vmem:[%s1 + $0x518] sm:$0xff]
    %v198 = vld [vmem:[%s1 + $0x520] sm:$0xff]
    %v199 = vld [vmem:[%s1 + $0x528] sm:$0xff]
    %v200 = vld [vmem:[%s1 + $0x530] sm:$0xff]
    %v201 = vld [vmem:[%s1 + $0x538] sm:$0xff]
    %v202 = vld [vmem:[%s1 + $0x540] sm:$0xff]
    %v203 = vld [vmem:[%s1 + $0x548] sm:$0xff]
    %v204 = vld [vmem:[%s1 + $0x550] sm:$0xff]
    %v205 = vld [vmem:[%s1 + $0x558] sm:$0xff]
    %v206 = vld [vmem:[%s1 + $0x560] sm:$0xff]
    %v207 = vld [vmem:[%s1 + $0x568] sm:$0xff]
    %v208 = vld [vmem:[%s1 + $0x570] sm:$0xff]
    %v209 = vld [vmem:[%s1 + $0x578] sm:$0xff]
    %v210 = vld [vmem:[%s1 + $0x580] sm:$0xff]
    %v211 = vld [vmem:[%s1 + $0x588] sm:$0xff]
    %v212 = vld [vmem:[%s1 + $0x590] sm:$0xff]
    %v213 = vld [vmem:[%s1 + $0x598] sm:$0xff]
    %v214 = vld [vmem:[%s1 + $0x5a0] sm:$0xff]
    %v215 = vld [vmem:[%s1 + $0x5a8] sm:$0xff]
    %v216 = vld [vmem:[%s1 + $0x5b0] sm:$0xff]
    %v217 = vld [vmem:[%s1 + $0x5b8] sm:$0xff]
    %v218 = vld [vmem:[%s1 + $0x5c0] sm:$0xff]
    %v219 = vld [vmem:[%s1 + $0x5c8] sm:$0xff]
    %v220 = vld [vmem:[%s1 + $0x5d0] sm:$0xff]
    %v221 = vld [vmem:[%s1 + $0x5d8] sm:$0xff]
    %v222 = vld [vmem:[%s1 + $0x5e0] sm:$0xff]
    %v223 = vld [vmem:[%s1 + $0x5e8] sm:$0xff]
    %v224 = vld [vmem:[%s1 + $0x5f0] sm:$0xff]
    %v225 = vld [vmem:[%s1 + $0x5f8] sm:$0xff]
    %v226 = vld [vmem:[%s1 + $0x600] sm:$0xff]
    %v227 = vld [vmem:[%s1 + $0x608] sm:$0xff]
    %v228 = vld [vmem:[%s1 + $0x610] sm:$0xff]
    %v229 = vld [vmem:[%s1 + $0x618] sm:$0xff]
    %v230 = vld [vmem:[%s1 + $0x620] sm:$0xff]
    %v231 = vld [vmem:[%s1 + $0x628] sm:$0xff]
    %v232 = vld [vmem:[%s1 + $0x630] sm:$0xff]
    %v233 = vld [vmem:[%s1 + $0x638] sm:$0xff]
    %v234 = vld [vmem:[%s1 + $0x640] sm:$0xff]
    %v235 = vld [vmem:[%s1 + $0x648] sm:$0xff]
    %v236 = vld [vmem:[%s1 + $0x650] sm:$0xff]
    %v237 = vld [vmem:[%s1 + $0x658] sm:$0xff]
    %v238 = vld [vmem:[%s1 + $0x660] sm:$0xff]
    %v239 = vld [vmem:[%s1 + $0x668] sm:$0xff]
    %v240 = vld [vmem:[%s1 + $0x670] sm:$0xff]
    %v241 = vld [vmem:[%s1 + $0x678] sm:$0xff]
    %v242 = vld [vmem:[%s1 + $0x680] sm:$0xff]
    %v243 = vld [vmem:[%s1 + $0x688] sm:$0xff]
    %v244 = vld [vmem:[%s1 + $0x690] sm:$0xff]
    %v245 = vld [vmem:[%s1 + $0x698] sm:$0xff]
    %v246 = vld [vmem:[%s1 + $0x6a0] sm:$0xff]
    %v247 = vld [vmem:[%s1 + $0x6a8] sm:$0xff]
    %v248 = vld [vmem:[%s1 + $0x6b0] sm:$0xff]
    %v249 = vld [vmem:[%s1 + $0x6b8] sm:$0xff]
    %v250 = vld [vmem:[%s1 + $0x6c0] sm:$0xff]
    %v251 = vld [vmem:[%s1 + $0x6c8] sm:$0xff]
    %v252 = vld [vmem:[%s1 + $0x6d0] sm:$0xff]
    %v253 = vld [vmem:[%s1 + $0x6d8] sm:$0xff]
    %v254 = vld [vmem:[%s1 + $0x6e0] sm:$0xff]
    %v255 = vld [vmem:[%s1 + $0x6e8] sm:$0xff]
    %v256 = vld [vmem:[%s1 + $0x6f0] sm:$0xff]
    %v257 = vld [vmem:[%s1 + $0x6f8] sm:$0xff]
    %v258 = vld [vmem:[%s1 + $0x700] sm:$0xff]
    %v259 = vld [vmem:[%s1 + $0x708] sm:$0xff]
    %v260 = vld [vmem:[%s1 + $0x710] sm:$0xff]
    %v261 = vld [vmem:[%s1 + $0x718] sm:$0xff]
    %v262 = vld [vmem:[%s1 + $0x720] sm:$0xff]
    %v263 = vld [vmem:[%s1 + $0x728] sm:$0xff]
    %v264 = vld [vmem:[%s1 + $0x730] sm:$0xff]
    %v265 = vld [vmem:[%s1 + $0x738] sm:$0xff]
    %v266 = vld [vmem:[%s1 + $0x740] sm:$0xff]
    %v267 = vld [vmem:[%s1 + $0x748] sm:$0xff]
    %v268 = vld [vmem:[%s1 + $0x750] sm:$0xff]
    %v269 = vld [vmem:[%s1 + $0x758] sm:$0xff]
    %v270 = vld [vmem:[%s1 + $0x760] sm:$0xff]
    %v271 = vld [vmem:[%s1 + $0x768] sm:$0xff]
    %v272 = vld [vmem:[%s1 + $0x770] sm:$0xff]
    %v273 = vld [vmem:[%s1 + $0x778] sm:$0xff]
    %v274 = vld [vmem:[%s1 + $0x780] sm:$0xff]
    %v275 = vld [vmem:[%s1 + $0x788] sm:$0xff]
    %v276 = vld [vmem:[%s1 + $0x790] sm:$0xff]
    %v277 = vld [vmem:[%s1 + $0x798] sm:$0xff]
    %v278 = vld [vmem:[%s1 + $0x7a0] sm:$0xff]
    %v279 = vld [vmem:[%s1 + $0x7a8] sm:$0xff]
    %v280 = vld [vmem:[%s1 + $0x7b0] sm:$0xff]
    %v281 = vld [vmem:[%s1 + $0x7b8] sm:$0xff]
    %v282 = vld [vmem:[%s1 + $0x7c0] sm:$0xff]
    %v283 = vld [vmem:[%s1 + $0x7c8] sm:$0xff]
    %v284 = vld [vmem:[%s1 + $0x7d0] sm:$0xff]
    %v285 = vld [vmem:[%s1 + $0x7d8] sm:$0xff]
    %v286 = vld [vmem:[%s1 + $0x7e0] sm:$0xff]
    %v287 = vld [vmem:[%s1 + $0x7e8] sm:$0xff]
    %v288 = vld [vmem:[%s1 + $0x7f0] sm:$0xff]
    %v289 = vld [vmem:[%s1 + $0x7f8] sm:$0xff]
    %v290 = vld [vmem:[%s1 + $0x800] sm:$0xff]
    %v291 = vld [vmem:[%s1 + $0x808] sm:$0xff]
    %v292 = vld [vmem:[%s1 + $0x810] sm:$0xff]
    %v293 = vld [vmem:[%s1 + $0x818] sm:$0xff]
    %v294 = vld [vmem:[%s1 + $0x820] sm:$0xff]
    %v295 = vld [vmem:[%s1 + $0x828] sm:$0xff]
    %v296 = vld [vmem:[%s1 + $0x830] sm:$0xff]
    %v297 = vld [vmem:[%s1 + $0x838] sm:$0xff]
    %v298 = vld [vmem:[%s1 + $0x840] sm:$0xff]
    %v299 = vld [vmem:[%s1 + $0x848] sm:$0xff]
    %v300 = vld [vmem:[%s1 + $0x850] sm:$0xff]
    %v301 = vld [vmem:[%s1 + $0x858] sm:$0xff]
    %v302 = vld [vmem:[%s1 + $0x860] sm:$0xff]
    %v303 = vld [vmem:[%s1 + $0x868] sm:$0xff]
    %v304 = vld [vmem:[%s1 + $0x870] sm:$0xff]
    %v305 = vld [vmem:[%s1 + $0x878] sm:$0xff]
    %v306 = vld [vmem:[%s1 + $0x880] sm:$0xff]
    %v307 = vld [vmem:[%s1 + $0x888] sm:$0xff]
    %v308 = vld [vmem:[%s1 + $0x890] sm:$0xff]
    %v309 = vld [vmem:[%s1 + $0x898] sm:$0xff]
    %v310 = vld [vmem:[%s1 + $0x8a0] sm:$0xff]
    %v311 = vld [vmem:[%s1 + $0x8a8] sm:$0xff]
    %v312 = vld [vmem:[%s1 + $0x8b0] sm:$0xff]
    %v313 = vld [vmem:[%s1 + $0x8b8] sm:$0xff]
    %v314 = vld [vmem:[%s1 + $0x8c0] sm:$0xff]
    %v315 = vld [vmem:[%s1 + $0x8c8] sm:$0xff]
    %v316 = vld [vmem:[%s1 + $0x8d0] sm:$0xff]
    %v317 = vld [vmem:[%s1 + $0x8d8] sm:$0xff]
    %v318 = vld [vmem:[%s1 + $0x8e0] sm:$0xff]
    %v319 = vld [vmem:[%s1 + $0x8e8] sm:$0xff]
    %v320 = vld [vmem:[%s1 + $0x8f0] sm:$0xff]
    %v321 = vld [vmem:[%s1 + $0x8f8] sm:$0xff]
    %v322 = vld [vmem:[%s1 + $0x900] sm:$0xff]
    %v323 = vld [vmem:[%s1 + $0x908] sm:$0xff]
    %v324 = vld [vmem:[%s1 + $0x910] sm:$0xff]
    %v325 = vld [vmem:[%s1 + $0x918] sm:$0xff]
    %v326 = vld [vmem:[%s1 + $0x920] sm:$0xff]
    %v327 = vld [vmem:[%s1 + $0x928] sm:$0xff]
    %v328 = vld [vmem:[%s1 + $0x930] sm:$0xff]
    %v329 = vld [vmem:[%s1 + $0x938] sm:$0xff]
    %v330 = vld [vmem:[%s1 + $0x940] sm:$0xff]
    %v331 = vld [vmem:[%s1 + $0x948] sm:$0xff]
    %v332 = vld [vmem:[%s1 + $0x950] sm:$0xff]
    %v333 = vld [vmem:[%s1 + $0x958] sm:$0xff]
    %v334 = vld [vmem:[%s1 + $0x960] sm:$0xff]
    %v335 = vld [vmem:[%s1 + $0x968] sm:$0xff]
    %v336 = vld [vmem:[%s1 + $0x970] sm:$0xff]
    %v337 = vld [vmem:[%s1 + $0x978] sm:$0xff]
    %v338 = vld [vmem:[%s1 + $0x980] sm:$0xff]
    %v339 = vld [vmem:[%s1 + $0x988] sm:$0xff]
    %v340 = vld [vmem:[%s1 + $0x990] sm:$0xff]
    %v341 = vld [vmem:[%s1 + $0x998] sm:$0xff]
    %v342 = vld [vmem:[%s1 + $0x9a0] sm:$0xff]
    %v343 = vld [vmem:[%s1 + $0x9a8] sm:$0xff]
    %v344 = vld [vmem:[%s1 + $0x9b0] sm:$0xff]
    %v345 = vld [vmem:[%s1 + $0x9b8] sm:$0xff]
    %v346 = vld [vmem:[%s1 + $0x9c0] sm:$0xff]
    %v347 = vld [vmem:[%s1 + $0x9c8] sm:$0xff]
    %v348 = vld [vmem:[%s1 + $0x9d0] sm:$0xff]
    %v349 = vld [vmem:[%s1 + $0x9d8] sm:$0xff]
    %v350 = vld [vmem:[%s1 + $0x9e0] sm:$0xff]
    %v351 = vld [vmem:[%s1 + $0x9e8] sm:$0xff]
    %v352 = vld [vmem:[%s1 + $0x9f0] sm:$0xff]
    %v353 = vld [vmem:[%s1 + $0x9f8] sm:$0xff]
    %v354 = vld [vmem:[%s1 + $0xa00] sm:$0xff]
    %v355 = vld [vmem:[%s1 + $0xa08] sm:$0xff]
    %v356 = vld [vmem:[%s1 + $0xa10] sm:$0xff]
    %v357 = vld [vmem:[%s1 + $0xa18] sm:$0xff]
    %v358 = vld [vmem:[%s1 + $0xa20] sm:$0xff]
    %v359 = vld [vmem:[%s1 + $0xa28] sm:$0xff]
    %v360 = vld [vmem:[%s1 + $0xa30] sm:$0xff]
    %v361 = vld [vmem:[%s1 + $0xa38] sm:$0xff]
    %v362 = vld [vmem:[%s1 + $0xa40] sm:$0xff]
    %v363 = vld [vmem:[%s1 + $0xa48] sm:$0xff]
    %v364 = vld [vmem:[%s1 + $0xa50] sm:$0xff]
    %v365 = vld [vmem:[%s1 + $0xa58] sm:$0xff]
    %v366 = vld [vmem:[%s1 + $0xa60] sm:$0xff]
    %v367 = vld [vmem:[%s1 + $0xa68] sm:$0xff]
    %v368 = vld [vmem:[%s1 + $0xa70] sm:$0xff]
    %v369 = vld [vmem:[%s1 + $0xa78] sm:$0xff]
    %v370 = vld [vmem:[%s1 + $0xa80] sm:$0xff]
    %v371 = vld [vmem:[%s1 + $0xa88] sm:$0xff]
    %v372 = vld [vmem:[%s1 + $0xa90] sm:$0xff]
    %v373 = vld [vmem:[%s1 + $0xa98] sm:$0xff]
    %v374 = vld [vmem:[%s1 + $0xaa0] sm:$0xff]
    %v375 = vld [vmem:[%s1 + $0xaa8] sm:$0xff]
    %v376 = vld [vmem:[%s1 + $0xab0] sm:$0xff]
    %v377 = vld [vmem:[%s1 + $0xab8] sm:$0xff]
    %v378 = vld [vmem:[%s1 + $0xac0] sm:$0xff]
    %v379 = vld [vmem:[%s1 + $0xac8] sm:$0xff]
    %v380 = vld [vmem:[%s1 + $0xad0] sm:$0xff]
    %v381 = vld [vmem:[%s1 + $0xad8] sm:$0xff]
    %v382 = vld [vmem:[%s1 + $0xae0] sm:$0xff]
    %v383 = vld [vmem:[%s1 + $0xae8] sm:$0xff]
    %v384 = vld [vmem:[%s1 + $0xaf0] sm:$0xff]
    %v385 = vld [vmem:[%s1 + $0xaf8] sm:$0xff]
    %v386 = vld [vmem:[%s1 + $0xb00] sm:$0xff]
    %v387 = vld [vmem:[%s1 + $0xb08] sm:$0xff]
    %v388 = vld [vmem:[%s1 + $0xb10] sm:$0xff]
    %v389 = vld [vmem:[%s1 + $0xb18] sm:$0xff]
    %v390 = vld [vmem:[%s1 + $0xb20] sm:$0xff]
    %v391 = vld [vmem:[%s1 + $0xb28] sm:$0xff]
    %v392 = vld [vmem:[%s1 + $0xb30] sm:$0xff]
    %v393 = vld [vmem:[%s1 + $0xb38] sm:$0xff]
    %v394 = vld [vmem:[%s1 + $0xb40] sm:$0xff]
    %v395 = vld [vmem:[%s1 + $0xb48] sm:$0xff]
    %v396 = vld [vmem:[%s1 + $0xb50] sm:$0xff]
    %v397 = vld [vmem:[%s1 + $0xb58] sm:$0xff]
    %v398 = vld [vmem:[%s1 + $0xb60] sm:$0xff]
    %v399 = vld [vmem:[%s1 + $0xb68] sm:$0xff]
    %v400 = vld [vmem:[%s1 + $0xb70] sm:$0xff]
    %v401 = vld [vmem:[%s1 + $0xb78] sm:$0xff]
    %v402 = vld [vmem:[%s1 + $0xb80] sm:$0xff]
    %v403 = vld [vmem:[%s1 + $0xb88] sm:$0xff]
    %v404 = vld [vmem:[%s1 + $0xb90] sm:$0xff]
    %v405 = vld [vmem:[%s1 + $0xb98] sm:$0xff]
    %v406 = vld [vmem:[%s1 + $0xba0] sm:$0xff]
    %v407 = vld [vmem:[%s1 + $0xba8] sm:$0xff]
    %v408 = vld [vmem:[%s1 + $0xbb0] sm:$0xff]
    %v409 = vld [vmem:[%s1 + $0xbb8] sm:$0xff]
    %v410 = vld [vmem:[%s1 + $0xbc0] sm:$0xff]
    %v411 = vld [vmem:[%s1 + $0xbc8] sm:$0xff]
    %v412 = vld [vmem:[%s1 + $0xbd0] sm:$0xff]
    %v413 = vld [vmem:[%s1 + $0xbd8] sm:$0xff]
    %v414 = vld [vmem:[%s1 + $0xbe0] sm:$0xff]
    %v415 = vld [vmem:[%s1 + $0xbe8] sm:$0xff]
    %v416 = vld [vmem:[%s1 + $0xbf0] sm:$0xff]
    %v417 = vld [vmem:[%s1 + $0xbf8] sm:$0xff]
    %v418 = vld [vmem:[%s1 + $0xc00] sm:$0xff]
    %v419 = vld [vmem:[%s1 + $0xc08] sm:$0xff]
    %v420 = vld [vmem:[%s1 + $0xc10] sm:$0xff]
    %v421 = vld [vmem:[%s1 + $0xc18] sm:$0xff]
    %v422 = vld [vmem:[%s1 + $0xc20] sm:$0xff]
    %v423 = vld [vmem:[%s1 + $0xc28] sm:$0xff]
    %v424 = vld [vmem:[%s1 + $0xc30] sm:$0xff]
    %v425 = vld [vmem:[%s1 + $0xc38] sm:$0xff]
    %v426 = vld [vmem:[%s1 + $0xc40] sm:$0xff]
    %v427 = vld [vmem:[%s1 + $0xc48] sm:$0xff]
    %v428 = vld [vmem:[%s1 + $0xc50] sm:$0xff]
    %v429 = vld [vmem:[%s1 + $0xc58] sm:$0xff]
    %v430 = vld [vmem:[%s1 + $0xc60] sm:$0xff]
    %v431 = vld [vmem:[%s1 + $0xc68] sm:$0xff]
    %v432 = vld [vmem:[%s1 + $0xc70] sm:$0xff]
    %v433 = vld [vmem:[%s1 + $0xc78] sm:$0xff]
    %v434 = vld [vmem:[%s2] sm:$0x1]
    %v436 = vlaneseq
    %v437 = vshrl.u32 %v436, 7
    %v438 = vsub.s32 0, %v437
    %v439 = vrot.slane %v434, %v438
    %v448 = vcombine.high %v27, %v27
    %v450 = vunpack.c.l.s4 1983009808
    %v451 = vunpack.c.0.s8 %v450
    %v452 = vlaneseq
    %v453 = vshrl.u32 %v452, 7
    %v454 = vsub.s32 %v451, %v453
    %v455 = vrot.slane %v27, %v454
    %v457 = vunpack.c.l.s4 1983009808
    %v458 = vunpack.c.0.s8 %v457
    %v459 = vlaneseq
    %v460 = vshrl.u32 %v459, 7
    %v461 = vsub.s32 %v458, %v460
    %v462 = vrot.slane %v448, %v461
    %v463 = vcombine.high %v455, %v455
    %v464 = vcombine.high %v462, %v462
    %v465 = vcombine.high %v28, %v28
    %v467 = vunpack.c.l.s4 1983009808
    %v468 = vunpack.c.0.s8 %v467
    %v469 = vlaneseq
    %v470 = vshrl.u32 %v469, 7
    %v471 = vsub.s32 %v468, %v470
    %v472 = vrot.slane %v28, %v471
    %v474 = vunpack.c.l.s4 1983009808
    %v475 = vunpack.c.0.s8 %v474
    %v476 = vlaneseq
    %v477 = vshrl.u32 %v476, 7
    %v478 = vsub.s32 %v475, %v477
    %v479 = vrot.slane %v465, %v478
    %v480 = vcombine.high %v472, %v472
    %v481 = vcombine.high %v479, %v479
    %v482 = vcombine.high %v29, %v29
    %v484 = vunpack.c.l.s4 1983009808
    %v485 = vunpack.c.0.s8 %v484
    %v486 = vlaneseq
    %v487 = vshrl.u32 %v486, 7
    %v488 = vsub.s32 %v485, %v487
    %v489 = vrot.slane %v29, %v488
    %v491 = vunpack.c.l.s4 1983009808
    %v492 = vunpack.c.0.s8 %v491
    %v493 = vlaneseq
    %v494 = vshrl.u32 %v493, 7
    %v495 = vsub.s32 %v492, %v494
    %v496 = vrot.slane %v482, %v495
    %v497 = vcombine.high %v489, %v489
    %v498 = vcombine.high %v496, %v496
    %v499 = vcombine.high %v30, %v30
    %v501 = vunpack.c.l.s4 1983009808
    %v502 = vunpack.c.0.s8 %v501
    %v503 = vlaneseq
    %v504 = vshrl.u32 %v503, 7
    %v505 = vsub.s32 %v502, %v504
    %v506 = vrot.slane %v30, %v505
    %v508 = vunpack.c.l.s4 1983009808
    %v509 = vunpack.c.0.s8 %v508
    %v510 = vlaneseq
    %v511 = vshrl.u32 %v510, 7
    %v512 = vsub.s32 %v509, %v511
    %v513 = vrot.slane %v499, %v512
    %v514 = vcombine.high %v506, %v506
    %v515 = vcombine.high %v513, %v513
    %v516 = vcombine.high %v31, %v31
    %v518 = vunpack.c.l.s4 1983009808
    %v519 = vunpack.c.0.s8 %v518
    %v520 = vlaneseq
    %v521 = vshrl.u32 %v520, 7
    %v522 = vsub.s32 %v519, %v521
    %v523 = vrot.slane %v31, %v522
    %v525 = vunpack.c.l.s4 1983009808
    %v526 = vunpack.c.0.s8 %v525
    %v527 = vlaneseq
    %v528 = vshrl.u32 %v527, 7
    %v529 = vsub.s32 %v526, %v528
    %v530 = vrot.slane %v516, %v529
    %v531 = vcombine.high %v523, %v523
    %v532 = vcombine.high %v530, %v530
    %v533 = vcombine.high %v32, %v32
    %v535 = vunpack.c.l.s4 1983009808
    %v536 = vunpack.c.0.s8 %v535
    %v537 = vlaneseq
    %v538 = vshrl.u32 %v537, 7
    %v539 = vsub.s32 %v536, %v538
    %v540 = vrot.slane %v32, %v539
    %v542 = vunpack.c.l.s4 1983009808
    %v543 = vunpack.c.0.s8 %v542
    %v544 = vlaneseq
    %v545 = vshrl.u32 %v544, 7
    %v546 = vsub.s32 %v543, %v545
    %v547 = vrot.slane %v533, %v546
    %v548 = vcombine.high %v540, %v540
    %v549 = vcombine.high %v547, %v547
    %v551 = vunpack.c.l.s4 1983009808
    %v552 = vunpack.c.0.s8 %v551
    %v553 = vlaneseq
    %v554 = vshrl.u32 %v553, 7
    %v555 = vsub.s32 %v552, %v554
    %v556 = vrot.slane %v33, %v555
    %582 = vmatprep.subr.mxu0 0.0
    %583 = vmatpush1.msra.mxu0 %v49
    %584 = vmatprep.subr.mxu0 0.0
    %585 = vmatpush1.msra.mxu0 %v48
    %586 = vmatprep.subr.mxu0 0.0
    %587 = vmatpush1.msra.mxu0 %v47
    %588 = vmatprep.subr.mxu0 0.0
    %589 = vmatpush1.msra.mxu0 %v46
    %590 = vmatprep.subr.mxu0 0.0
    %591 = vmatpush1.msra.mxu0 %v45
    %592 = vmatprep.subr.mxu0 0.0
    %593 = vmatpush1.msra.mxu0 %v44
    %594 = vmatprep.subr.mxu0 0.0
    %595 = vmatpush1.msra.mxu0 %v43
    %596 = vmatprep.subr.mxu0 0.0
    %597 = vmatpush1.msra.mxu0 %v42
    %598 = vmatprep.subr.mxu0 0.0
    %599 = vmatpush1.msra.mxu0 %v41
    %600 = vmatprep.subr.mxu0 0.0
    %601 = vmatpush1.msra.mxu0 %v40
    %602 = vmatprep.subr.mxu0 0.0
    %603 = vmatpush1.msra.mxu0 %v39
    %604 = vmatprep.subr.mxu0 0.0
    %605 = vmatpush1.msra.mxu0 %v38
    %606 = vmatprep.subr.mxu0 0.0
    %607 = vmatpush1.msra.mxu0 %v37
    %608 = vmatprep.subr.mxu0 0.0
    %609 = vmatpush1.msra.mxu0 %v36
    %610 = vmatprep.subr.mxu0 0.0
    %611 = vmatpush1.msra.mxu0 %v35
    %612 = vmatprep.subr.mxu0 0.0
    %613 = vmatpush1.msra.mxu0 %v34
    %614 = vmatprep.subr.mxu0 0.0
    %615 = vmatpush2.msra.mxu0 %v65
    %616 = vmatprep.subr.mxu0 0.0
    %617 = vmatpush2.msra.mxu0 %v64
    %618 = vmatprep.subr.mxu0 0.0
    %619 = vmatpush2.msra.mxu0 %v63
    %620 = vmatprep.subr.mxu0 0.0
    %621 = vmatpush2.msra.mxu0 %v62
    %622 = vmatprep.subr.mxu0 0.0
    %623 = vmatpush2.msra.mxu0 %v61
    %624 = vmatprep.subr.mxu0 0.0
    %625 = vmatpush2.msra.mxu0 %v60
    %626 = vmatprep.subr.mxu0 0.0
    %627 = vmatpush2.msra.mxu0 %v59
    %628 = vmatprep.subr.mxu0 0.0
    %629 = vmatpush2.msra.mxu0 %v58
    %630 = vmatprep.subr.mxu0 0.0
    %631 = vmatpush2.msra.mxu0 %v57
    %632 = vmatprep.subr.mxu0 0.0
    %633 = vmatpush2.msra.mxu0 %v56
    %634 = vmatprep.subr.mxu0 0.0
    %635 = vmatpush2.msra.mxu0 %v55
    %636 = vmatprep.subr.mxu0 0.0
    %637 = vmatpush2.msra.mxu0 %v54
    %638 = vmatprep.subr.mxu0 0.0
    %639 = vmatpush2.msra.mxu0 %v53
    %640 = vmatprep.subr.mxu0 0.0
    %641 = vmatpush2.msra.mxu0 %v52
    %642 = vmatprep.subr.mxu0 0.0
    %643 = vmatpush2.msra.mxu0 %v51
    %644 = vmatprep.subr.mxu0 0.0
    %645 = vmatpush2.msra.mxu0 %v50
    %646 = vmatprep.mubr.f32.mxu0 %v463
    %647 = vmatmul.mubr.f32.gmra.mxu0 %v455
    %v648 = vpop.f32.mrf.mxu0
    %v649 = vadd.f32 %v439, %v648
    %v650 = vpop.f32.mrf.mxu0
    %651 = vdwg.mxu0
    %652 = vmatprep.subr.mxu0 0.0
    %653 = vmatpush1.msra.mxu0 %v81
    %654 = vmatprep.subr.mxu0 0.0
    %655 = vmatpush1.msra.mxu0 %v80
    %656 = vmatprep.subr.mxu0 0.0
    %657 = vmatpush1.msra.mxu0 %v79
    %658 = vmatprep.subr.mxu0 0.0
    %659 = vmatpush1.msra.mxu0 %v78
    %660 = vmatprep.subr.mxu0 0.0
    %661 = vmatpush1.msra.mxu0 %v77
    %662 = vmatprep.subr.mxu0 0.0
    %663 = vmatpush1.msra.mxu0 %v76
    %664 = vmatprep.subr.mxu0 0.0
    %665 = vmatpush1.msra.mxu0 %v75
    %666 = vmatprep.subr.mxu0 0.0
    %667 = vmatpush1.msra.mxu0 %v74
    %668 = vmatprep.subr.mxu0 0.0
    %669 = vmatpush1.msra.mxu0 %v73
    %670 = vmatprep.subr.mxu0 0.0
    %671 = vmatpush1.msra.mxu0 %v72
    %672 = vmatprep.subr.mxu0 0.0
    %673 = vmatpush1.msra.mxu0 %v71
    %674 = vmatprep.subr.mxu0 0.0
    %675 = vmatpush1.msra.mxu0 %v70
    %676 = vmatprep.subr.mxu0 0.0
    %677 = vmatpush1.msra.mxu0 %v69
    %678 = vmatprep.subr.mxu0 0.0
    %679 = vmatpush1.msra.mxu0 %v68
    %680 = vmatprep.subr.mxu0 0.0
    %681 = vmatpush1.msra.mxu0 %v67
    %682 = vmatprep.subr.mxu0 0.0
    %683 = vmatpush1.msra.mxu0 %v66
    %684 = vmatprep.subr.mxu0 0.0
    %685 = vmatpush2.msra.mxu0 %v97
    %686 = vmatprep.subr.mxu0 0.0
    %687 = vmatpush2.msra.mxu0 %v96
    %688 = vmatprep.subr.mxu0 0.0
    %689 = vmatpush2.msra.mxu0 %v95
    %690 = vmatprep.subr.mxu0 0.0
    %691 = vmatpush2.msra.mxu0 %v94
    %692 = vmatprep.subr.mxu0 0.0
    %693 = vmatpush2.msra.mxu0 %v93
    %694 = vmatprep.subr.mxu0 0.0
    %695 = vmatpush2.msra.mxu0 %v92
    %696 = vmatprep.subr.mxu0 0.0
    %697 = vmatpush2.msra.mxu0 %v91
    %698 = vmatprep.subr.mxu0 0.0
    %699 = vmatpush2.msra.mxu0 %v90
    %700 = vmatprep.subr.mxu0 0.0
    %701 = vmatpush2.msra.mxu0 %v89
    %702 = vmatprep.subr.mxu0 0.0
    %703 = vmatpush2.msra.mxu0 %v88
    %704 = vmatprep.subr.mxu0 0.0
    %705 = vmatpush2.msra.mxu0 %v87
    %706 = vmatprep.subr.mxu0 0.0
    %707 = vmatpush2.msra.mxu0 %v86
    %708 = vmatprep.subr.mxu0 0.0
    %709 = vmatpush2.msra.mxu0 %v85
    %710 = vmatprep.subr.mxu0 0.0
    %711 = vmatpush2.msra.mxu0 %v84
    %712 = vmatprep.subr.mxu0 0.0
    %713 = vmatpush2.msra.mxu0 %v83
    %714 = vmatprep.subr.mxu0 0.0
    %715 = vmatpush2.msra.mxu0 %v82
    %716 = vmatprep.mubr.f32.mxu0 %v464
    %717 = vmatmul.mubr.f32.gmra.mxu0 %v462
    %v718 = vpop.f32.mrf.mxu0
    %v719 = vadd.f32 %v649, %v718
    %v720 = vpop.f32.mrf.mxu0
    %721 = vdwg.mxu0
    %722 = vmatprep.subr.mxu0 0.0
    %723 = vmatpush1.msra.mxu0 %v113
    %724 = vmatprep.subr.mxu0 0.0
    %725 = vmatpush1.msra.mxu0 %v112
    %726 = vmatprep.subr.mxu0 0.0
    %727 = vmatpush1.msra.mxu0 %v111
    %728 = vmatprep.subr.mxu0 0.0
    %729 = vmatpush1.msra.mxu0 %v110
    %730 = vmatprep.subr.mxu0 0.0
    %731 = vmatpush1.msra.mxu0 %v109
    %732 = vmatprep.subr.mxu0 0.0
    %733 = vmatpush1.msra.mxu0 %v108
    %734 = vmatprep.subr.mxu0 0.0
    %735 = vmatpush1.msra.mxu0 %v107
    %736 = vmatprep.subr.mxu0 0.0
    %737 = vmatpush1.msra.mxu0 %v106
    %738 = vmatprep.subr.mxu0 0.0
    %739 = vmatpush1.msra.mxu0 %v105
    %740 = vmatprep.subr.mxu0 0.0
    %741 = vmatpush1.msra.mxu0 %v104
    %742 = vmatprep.subr.mxu0 0.0
    %743 = vmatpush1.msra.mxu0 %v103
    %744 = vmatprep.subr.mxu0 0.0
    %745 = vmatpush1.msra.mxu0 %v102
    %746 = vmatprep.subr.mxu0 0.0
    %747 = vmatpush1.msra.mxu0 %v101
    %748 = vmatprep.subr.mxu0 0.0
    %749 = vmatpush1.msra.mxu0 %v100
    %750 = vmatprep.subr.mxu0 0.0
    %751 = vmatpush1.msra.mxu0 %v99
    %752 = vmatprep.subr.mxu0 0.0
    %753 = vmatpush1.msra.mxu0 %v98
    %754 = vmatprep.subr.mxu0 0.0
    %755 = vmatpush2.msra.mxu0 %v129
    %756 = vmatprep.subr.mxu0 0.0
    %757 = vmatpush2.msra.mxu0 %v128
    %758 = vmatprep.subr.mxu0 0.0
    %759 = vmatpush2.msra.mxu0 %v127
    %760 = vmatprep.subr.mxu0 0.0
    %761 = vmatpush2.msra.mxu0 %v126
    %762 = vmatprep.subr.mxu0 0.0
    %763 = vmatpush2.msra.mxu0 %v125
    %764 = vmatprep.subr.mxu0 0.0
    %765 = vmatpush2.msra.mxu0 %v124
    %766 = vmatprep.subr.mxu0 0.0
    %767 = vmatpush2.msra.mxu0 %v123
    %768 = vmatprep.subr.mxu0 0.0
    %769 = vmatpush2.msra.mxu0 %v122
    %770 = vmatprep.subr.mxu0 0.0
    %771 = vmatpush2.msra.mxu0 %v121
    %772 = vmatprep.subr.mxu0 0.0
    %773 = vmatpush2.msra.mxu0 %v120
    %774 = vmatprep.subr.mxu0 0.0
    %775 = vmatpush2.msra.mxu0 %v119
    %776 = vmatprep.subr.mxu0 0.0
    %777 = vmatpush2.msra.mxu0 %v118
    %778 = vmatprep.subr.mxu0 0.0
    %779 = vmatpush2.msra.mxu0 %v117
    %780 = vmatprep.subr.mxu0 0.0
    %781 = vmatpush2.msra.mxu0 %v116
    %782 = vmatprep.subr.mxu0 0.0
    %783 = vmatpush2.msra.mxu0 %v115
    %784 = vmatprep.subr.mxu0 0.0
    %785 = vmatpush2.msra.mxu0 %v114
    %786 = vmatprep.mubr.f32.mxu0 %v480
    %787 = vmatmul.mubr.f32.gmra.mxu0 %v472
    %v788 = vpop.f32.mrf.mxu0
    %v789 = vadd.f32 %v719, %v788
    %v790 = vpop.f32.mrf.mxu0
    %791 = vdwg.mxu0
    %792 = vmatprep.subr.mxu0 0.0
    %793 = vmatpush1.msra.mxu0 %v145
    %794 = vmatprep.subr.mxu0 0.0
    %795 = vmatpush1.msra.mxu0 %v144
    %796 = vmatprep.subr.mxu0 0.0
    %797 = vmatpush1.msra.mxu0 %v143
    %798 = vmatprep.subr.mxu0 0.0
    %799 = vmatpush1.msra.mxu0 %v142
    %800 = vmatprep.subr.mxu0 0.0
    %801 = vmatpush1.msra.mxu0 %v141
    %802 = vmatprep.subr.mxu0 0.0
    %803 = vmatpush1.msra.mxu0 %v140
    %804 = vmatprep.subr.mxu0 0.0
    %805 = vmatpush1.msra.mxu0 %v139
    %806 = vmatprep.subr.mxu0 0.0
    %807 = vmatpush1.msra.mxu0 %v138
    %808 = vmatprep.subr.mxu0 0.0
    %809 = vmatpush1.msra.mxu0 %v137
    %810 = vmatprep.subr.mxu0 0.0
    %811 = vmatpush1.msra.mxu0 %v136
    %812 = vmatprep.subr.mxu0 0.0
    %813 = vmatpush1.msra.mxu0 %v135
    %814 = vmatprep.subr.mxu0 0.0
    %815 = vmatpush1.msra.mxu0 %v134
    %816 = vmatprep.subr.mxu0 0.0
    %817 = vmatpush1.msra.mxu0 %v133
    %818 = vmatprep.subr.mxu0 0.0
    %819 = vmatpush1.msra.mxu0 %v132
    %820 = vmatprep.subr.mxu0 0.0
    %821 = vmatpush1.msra.mxu0 %v131
    %822 = vmatprep.subr.mxu0 0.0
    %823 = vmatpush1.msra.mxu0 %v130
    %824 = vmatprep.subr.mxu0 0.0
    %825 = vmatpush2.msra.mxu0 %v161
    %826 = vmatprep.subr.mxu0 0.0
    %827 = vmatpush2.msra.mxu0 %v160
    %828 = vmatprep.subr.mxu0 0.0
    %829 = vmatpush2.msra.mxu0 %v159
    %830 = vmatprep.subr.mxu0 0.0
    %831 = vmatpush2.msra.mxu0 %v158
    %832 = vmatprep.subr.mxu0 0.0
    %833 = vmatpush2.msra.mxu0 %v157
    %834 = vmatprep.subr.mxu0 0.0
    %835 = vmatpush2.msra.mxu0 %v156
    %836 = vmatprep.subr.mxu0 0.0
    %837 = vmatpush2.msra.mxu0 %v155
    %838 = vmatprep.subr.mxu0 0.0
    %839 = vmatpush2.msra.mxu0 %v154
    %840 = vmatprep.subr.mxu0 0.0
    %841 = vmatpush2.msra.mxu0 %v153
    %842 = vmatprep.subr.mxu0 0.0
    %843 = vmatpush2.msra.mxu0 %v152
    %844 = vmatprep.subr.mxu0 0.0
    %845 = vmatpush2.msra.mxu0 %v151
    %846 = vmatprep.subr.mxu0 0.0
    %847 = vmatpush2.msra.mxu0 %v150
    %848 = vmatprep.subr.mxu0 0.0
    %849 = vmatpush2.msra.mxu0 %v149
    %850 = vmatprep.subr.mxu0 0.0
    %851 = vmatpush2.msra.mxu0 %v148
    %852 = vmatprep.subr.mxu0 0.0
    %853 = vmatpush2.msra.mxu0 %v147
    %854 = vmatprep.subr.mxu0 0.0
    %855 = vmatpush2.msra.mxu0 %v146
    %856 = vmatprep.mubr.f32.mxu0 %v481
    %857 = vmatmul.mubr.f32.gmra.mxu0 %v479
    %v858 = vpop.f32.mrf.mxu0
    %v859 = vadd.f32 %v789, %v858
    %v860 = vpop.f32.mrf.mxu0
    %861 = vdwg.mxu0
    %862 = vmatprep.subr.mxu0 0.0
    %863 = vmatpush1.msra.mxu0 %v177
    %864 = vmatprep.subr.mxu0 0.0
    %865 = vmatpush1.msra.mxu0 %v176
    %866 = vmatprep.subr.mxu0 0.0
    %867 = vmatpush1.msra.mxu0 %v175
    %868 = vmatprep.subr.mxu0 0.0
    %869 = vmatpush1.msra.mxu0 %v174
    %870 = vmatprep.subr.mxu0 0.0
    %871 = vmatpush1.msra.mxu0 %v173
    %872 = vmatprep.subr.mxu0 0.0
    %873 = vmatpush1.msra.mxu0 %v172
    %874 = vmatprep.subr.mxu0 0.0
    %875 = vmatpush1.msra.mxu0 %v171
    %876 = vmatprep.subr.mxu0 0.0
    %877 = vmatpush1.msra.mxu0 %v170
    %878 = vmatprep.subr.mxu0 0.0
    %879 = vmatpush1.msra.mxu0 %v169
    %880 = vmatprep.subr.mxu0 0.0
    %881 = vmatpush1.msra.mxu0 %v168
    %882 = vmatprep.subr.mxu0 0.0
    %883 = vmatpush1.msra.mxu0 %v167
    %884 = vmatprep.subr.mxu0 0.0
    %885 = vmatpush1.msra.mxu0 %v166
    %886 = vmatprep.subr.mxu0 0.0
    %887 = vmatpush1.msra.mxu0 %v165
    %888 = vmatprep.subr.mxu0 0.0
    %889 = vmatpush1.msra.mxu0 %v164
    %890 = vmatprep.subr.mxu0 0.0
    %891 = vmatpush1.msra.mxu0 %v163
    %892 = vmatprep.subr.mxu0 0.0
    %893 = vmatpush1.msra.mxu0 %v162
    %894 = vmatprep.subr.mxu0 0.0
    %895 = vmatpush2.msra.mxu0 %v193
    %896 = vmatprep.subr.mxu0 0.0
    %897 = vmatpush2.msra.mxu0 %v192
    %898 = vmatprep.subr.mxu0 0.0
    %899 = vmatpush2.msra.mxu0 %v191
    %900 = vmatprep.subr.mxu0 0.0
    %901 = vmatpush2.msra.mxu0 %v190
    %902 = vmatprep.subr.mxu0 0.0
    %903 = vmatpush2.msra.mxu0 %v189
    %904 = vmatprep.subr.mxu0 0.0
    %905 = vmatpush2.msra.mxu0 %v188
    %906 = vmatprep.subr.mxu0 0.0
    %907 = vmatpush2.msra.mxu0 %v187
    %908 = vmatprep.subr.mxu0 0.0
    %909 = vmatpush2.msra.mxu0 %v186
    %910 = vmatprep.subr.mxu0 0.0
    %911 = vmatpush2.msra.mxu0 %v185
    %912 = vmatprep.subr.mxu0 0.0
    %913 = vmatpush2.msra.mxu0 %v184
    %914 = vmatprep.subr.mxu0 0.0
    %915 = vmatpush2.msra.mxu0 %v183
    %916 = vmatprep.subr.mxu0 0.0
    %917 = vmatpush2.msra.mxu0 %v182
    %918 = vmatprep.subr.mxu0 0.0
    %919 = vmatpush2.msra.mxu0 %v181
    %920 = vmatprep.subr.mxu0 0.0
    %921 = vmatpush2.msra.mxu0 %v180
    %922 = vmatprep.subr.mxu0 0.0
    %923 = vmatpush2.msra.mxu0 %v179
    %924 = vmatprep.subr.mxu0 0.0
    %925 = vmatpush2.msra.mxu0 %v178
    %926 = vmatprep.mubr.f32.mxu0 %v497
    %927 = vmatmul.mubr.f32.gmra.mxu0 %v489
    %v928 = vpop.f32.mrf.mxu0
    %v929 = vadd.f32 %v859, %v928
    %v930 = vpop.f32.mrf.mxu0
    %931 = vdwg.mxu0
    %932 = vmatprep.subr.mxu0 0.0
    %933 = vmatpush1.msra.mxu0 %v209
    %934 = vmatprep.subr.mxu0 0.0
    %935 = vmatpush1.msra.mxu0 %v208
    %936 = vmatprep.subr.mxu0 0.0
    %937 = vmatpush1.msra.mxu0 %v207
    %938 = vmatprep.subr.mxu0 0.0
    %939 = vmatpush1.msra.mxu0 %v206
    %940 = vmatprep.subr.mxu0 0.0
    %941 = vmatpush1.msra.mxu0 %v205
    %942 = vmatprep.subr.mxu0 0.0
    %943 = vmatpush1.msra.mxu0 %v204
    %944 = vmatprep.subr.mxu0 0.0
    %945 = vmatpush1.msra.mxu0 %v203
    %946 = vmatprep.subr.mxu0 0.0
    %947 = vmatpush1.msra.mxu0 %v202
    %948 = vmatprep.subr.mxu0 0.0
    %949 = vmatpush1.msra.mxu0 %v201
    %950 = vmatprep.subr.mxu0 0.0
    %951 = vmatpush1.msra.mxu0 %v200
    %952 = vmatprep.subr.mxu0 0.0
    %953 = vmatpush1.msra.mxu0 %v199
    %954 = vmatprep.subr.mxu0 0.0
    %955 = vmatpush1.msra.mxu0 %v198
    %956 = vmatprep.subr.mxu0 0.0
    %957 = vmatpush1.msra.mxu0 %v197
    %958 = vmatprep.subr.mxu0 0.0
    %959 = vmatpush1.msra.mxu0 %v196
    %960 = vmatprep.subr.mxu0 0.0
    %961 = vmatpush1.msra.mxu0 %v195
    %962 = vmatprep.subr.mxu0 0.0
    %963 = vmatpush1.msra.mxu0 %v194
    %964 = vmatprep.subr.mxu0 0.0
    %965 = vmatpush2.msra.mxu0 %v225
    %966 = vmatprep.subr.mxu0 0.0
    %967 = vmatpush2.msra.mxu0 %v224
    %968 = vmatprep.subr.mxu0 0.0
    %969 = vmatpush2.msra.mxu0 %v223
    %970 = vmatprep.subr.mxu0 0.0
    %971 = vmatpush2.msra.mxu0 %v222
    %972 = vmatprep.subr.mxu0 0.0
    %973 = vmatpush2.msra.mxu0 %v221
    %974 = vmatprep.subr.mxu0 0.0
    %975 = vmatpush2.msra.mxu0 %v220
    %976 = vmatprep.subr.mxu0 0.0
    %977 = vmatpush2.msra.mxu0 %v219
    %978 = vmatprep.subr.mxu0 0.0
    %979 = vmatpush2.msra.mxu0 %v218
    %980 = vmatprep.subr.mxu0 0.0
    %981 = vmatpush2.msra.mxu0 %v217
    %982 = vmatprep.subr.mxu0 0.0
    %983 = vmatpush2.msra.mxu0 %v216
    %984 = vmatprep.subr.mxu0 0.0
    %985 = vmatpush2.msra.mxu0 %v215
    %986 = vmatprep.subr.mxu0 0.0
    %987 = vmatpush2.msra.mxu0 %v214
    %988 = vmatprep.subr.mxu0 0.0
    %989 = vmatpush2.msra.mxu0 %v213
    %990 = vmatprep.subr.mxu0 0.0
    %991 = vmatpush2.msra.mxu0 %v212
    %992 = vmatprep.subr.mxu0 0.0
    %993 = vmatpush2.msra.mxu0 %v211
    %994 = vmatprep.subr.mxu0 0.0
    %995 = vmatpush2.msra.mxu0 %v210
    %996 = vmatprep.mubr.f32.mxu0 %v498
    %997 = vmatmul.mubr.f32.gmra.mxu0 %v496
    %v998 = vpop.f32.mrf.mxu0
    %v999 = vadd.f32 %v929, %v998
    %v1000 = vpop.f32.mrf.mxu0
    %1001 = vdwg.mxu0
    %1002 = vmatprep.subr.mxu0 0.0
    %1003 = vmatpush1.msra.mxu0 %v241
    %1004 = vmatprep.subr.mxu0 0.0
    %1005 = vmatpush1.msra.mxu0 %v240
    %1006 = vmatprep.subr.mxu0 0.0
    %1007 = vmatpush1.msra.mxu0 %v239
    %1008 = vmatprep.subr.mxu0 0.0
    %1009 = vmatpush1.msra.mxu0 %v238
    %1010 = vmatprep.subr.mxu0 0.0
    %1011 = vmatpush1.msra.mxu0 %v237
    %1012 = vmatprep.subr.mxu0 0.0
    %1013 = vmatpush1.msra.mxu0 %v236
    %1014 = vmatprep.subr.mxu0 0.0
    %1015 = vmatpush1.msra.mxu0 %v235
    %1016 = vmatprep.subr.mxu0 0.0
    %1017 = vmatpush1.msra.mxu0 %v234
    %1018 = vmatprep.subr.mxu0 0.0
    %1019 = vmatpush1.msra.mxu0 %v233
    %1020 = vmatprep.subr.mxu0 0.0
    %1021 = vmatpush1.msra.mxu0 %v232
    %1022 = vmatprep.subr.mxu0 0.0
    %1023 = vmatpush1.msra.mxu0 %v231
    %1024 = vmatprep.subr.mxu0 0.0
    %1025 = vmatpush1.msra.mxu0 %v230
    %1026 = vmatprep.subr.mxu0 0.0
    %1027 = vmatpush1.msra.mxu0 %v229
    %1028 = vmatprep.subr.mxu0 0.0
    %1029 = vmatpush1.msra.mxu0 %v228
    %1030 = vmatprep.subr.mxu0 0.0
    %1031 = vmatpush1.msra.mxu0 %v227
    %1032 = vmatprep.subr.mxu0 0.0
    %1033 = vmatpush1.msra.mxu0 %v226
    %1034 = vmatprep.subr.mxu0 0.0
    %1035 = vmatpush2.msra.mxu0 %v257
    %1036 = vmatprep.subr.mxu0 0.0
    %1037 = vmatpush2.msra.mxu0 %v256
    %1038 = vmatprep.subr.mxu0 0.0
    %1039 = vmatpush2.msra.mxu0 %v255
    %1040 = vmatprep.subr.mxu0 0.0
    %1041 = vmatpush2.msra.mxu0 %v254
    %1042 = vmatprep.subr.mxu0 0.0
    %1043 = vmatpush2.msra.mxu0 %v253
    %1044 = vmatprep.subr.mxu0 0.0
    %1045 = vmatpush2.msra.mxu0 %v252
    %1046 = vmatprep.subr.mxu0 0.0
    %1047 = vmatpush2.msra.mxu0 %v251
    %1048 = vmatprep.subr.mxu0 0.0
    %1049 = vmatpush2.msra.mxu0 %v250
    %1050 = vmatprep.subr.mxu0 0.0
    %1051 = vmatpush2.msra.mxu0 %v249
    %1052 = vmatprep.subr.mxu0 0.0
    %1053 = vmatpush2.msra.mxu0 %v248
    %1054 = vmatprep.subr.mxu0 0.0
    %1055 = vmatpush2.msra.mxu0 %v247
    %1056 = vmatprep.subr.mxu0 0.0
    %1057 = vmatpush2.msra.mxu0 %v246
    %1058 = vmatprep.subr.mxu0 0.0
    %1059 = vmatpush2.msra.mxu0 %v245
    %1060 = vmatprep.subr.mxu0 0.0
    %1061 = vmatpush2.msra.mxu0 %v244
    %1062 = vmatprep.subr.mxu0 0.0
    %1063 = vmatpush2.msra.mxu0 %v243
    %1064 = vmatprep.subr.mxu0 0.0
    %1065 = vmatpush2.msra.mxu0 %v242
    %1066 = vmatprep.mubr.f32.mxu0 %v514
    %1067 = vmatmul.mubr.f32.gmra.mxu0 %v506
    %v1068 = vpop.f32.mrf.mxu0
    %v1069 = vadd.f32 %v999, %v1068
    %v1070 = vpop.f32.mrf.mxu0
    %1071 = vdwg.mxu0
    %1072 = vmatprep.subr.mxu0 0.0
    %1073 = vmatpush1.msra.mxu0 %v273
    %1074 = vmatprep.subr.mxu0 0.0
    %1075 = vmatpush1.msra.mxu0 %v272
    %1076 = vmatprep.subr.mxu0 0.0
    %1077 = vmatpush1.msra.mxu0 %v271
    %1078 = vmatprep.subr.mxu0 0.0
    %1079 = vmatpush1.msra.mxu0 %v270
    %1080 = vmatprep.subr.mxu0 0.0
    %1081 = vmatpush1.msra.mxu0 %v269
    %1082 = vmatprep.subr.mxu0 0.0
    %1083 = vmatpush1.msra.mxu0 %v268
    %1084 = vmatprep.subr.mxu0 0.0
    %1085 = vmatpush1.msra.mxu0 %v267
    %1086 = vmatprep.subr.mxu0 0.0
    %1087 = vmatpush1.msra.mxu0 %v266
    %1088 = vmatprep.subr.mxu0 0.0
    %1089 = vmatpush1.msra.mxu0 %v265
    %1090 = vmatprep.subr.mxu0 0.0
    %1091 = vmatpush1.msra.mxu0 %v264
    %1092 = vmatprep.subr.mxu0 0.0
    %1093 = vmatpush1.msra.mxu0 %v263
    %1094 = vmatprep.subr.mxu0 0.0
    %1095 = vmatpush1.msra.mxu0 %v262
    %1096 = vmatprep.subr.mxu0 0.0
    %1097 = vmatpush1.msra.mxu0 %v261
    %1098 = vmatprep.subr.mxu0 0.0
    %1099 = vmatpush1.msra.mxu0 %v260
    %1100 = vmatprep.subr.mxu0 0.0
    %1101 = vmatpush1.msra.mxu0 %v259
    %1102 = vmatprep.subr.mxu0 0.0
    %1103 = vmatpush1.msra.mxu0 %v258
    %1104 = vmatprep.subr.mxu0 0.0
    %1105 = vmatpush2.msra.mxu0 %v289
    %1106 = vmatprep.subr.mxu0 0.0
    %1107 = vmatpush2.msra.mxu0 %v288
    %1108 = vmatprep.subr.mxu0 0.0
    %1109 = vmatpush2.msra.mxu0 %v287
    %1110 = vmatprep.subr.mxu0 0.0
    %1111 = vmatpush2.msra.mxu0 %v286
    %1112 = vmatprep.subr.mxu0 0.0
    %1113 = vmatpush2.msra.mxu0 %v285
    %1114 = vmatprep.subr.mxu0 0.0
    %1115 = vmatpush2.msra.mxu0 %v284
    %1116 = vmatprep.subr.mxu0 0.0
    %1117 = vmatpush2.msra.mxu0 %v283
    %1118 = vmatprep.subr.mxu0 0.0
    %1119 = vmatpush2.msra.mxu0 %v282
    %1120 = vmatprep.subr.mxu0 0.0
    %1121 = vmatpush2.msra.mxu0 %v281
    %1122 = vmatprep.subr.mxu0 0.0
    %1123 = vmatpush2.msra.mxu0 %v280
    %1124 = vmatprep.subr.mxu0 0.0
    %1125 = vmatpush2.msra.mxu0 %v279
    %1126 = vmatprep.subr.mxu0 0.0
    %1127 = vmatpush2.msra.mxu0 %v278
    %1128 = vmatprep.subr.mxu0 0.0
    %1129 = vmatpush2.msra.mxu0 %v277
    %1130 = vmatprep.subr.mxu0 0.0
    %1131 = vmatpush2.msra.mxu0 %v276
    %1132 = vmatprep.subr.mxu0 0.0
    %1133 = vmatpush2.msra.mxu0 %v275
    %1134 = vmatprep.subr.mxu0 0.0
    %1135 = vmatpush2.msra.mxu0 %v274
    %1136 = vmatprep.mubr.f32.mxu0 %v515
    %1137 = vmatmul.mubr.f32.gmra.mxu0 %v513
    %v1138 = vpop.f32.mrf.mxu0
    %v1139 = vadd.f32 %v1069, %v1138
    %v1140 = vpop.f32.mrf.mxu0
    %1141 = vdwg.mxu0
    %1142 = vmatprep.subr.mxu0 0.0
    %1143 = vmatpush1.msra.mxu0 %v305
    %1144 = vmatprep.subr.mxu0 0.0
    %1145 = vmatpush1.msra.mxu0 %v304
    %1146 = vmatprep.subr.mxu0 0.0
    %1147 = vmatpush1.msra.mxu0 %v303
    %1148 = vmatprep.subr.mxu0 0.0
    %1149 = vmatpush1.msra.mxu0 %v302
    %1150 = vmatprep.subr.mxu0 0.0
    %1151 = vmatpush1.msra.mxu0 %v301
    %1152 = vmatprep.subr.mxu0 0.0
    %1153 = vmatpush1.msra.mxu0 %v300
    %1154 = vmatprep.subr.mxu0 0.0
    %1155 = vmatpush1.msra.mxu0 %v299
    %1156 = vmatprep.subr.mxu0 0.0
    %1157 = vmatpush1.msra.mxu0 %v298
    %1158 = vmatprep.subr.mxu0 0.0
    %1159 = vmatpush1.msra.mxu0 %v297
    %1160 = vmatprep.subr.mxu0 0.0
    %1161 = vmatpush1.msra.mxu0 %v296
    %1162 = vmatprep.subr.mxu0 0.0
    %1163 = vmatpush1.msra.mxu0 %v295
    %1164 = vmatprep.subr.mxu0 0.0
    %1165 = vmatpush1.msra.mxu0 %v294
    %1166 = vmatprep.subr.mxu0 0.0
    %1167 = vmatpush1.msra.mxu0 %v293
    %1168 = vmatprep.subr.mxu0 0.0
    %1169 = vmatpush1.msra.mxu0 %v292
    %1170 = vmatprep.subr.mxu0 0.0
    %1171 = vmatpush1.msra.mxu0 %v291
    %1172 = vmatprep.subr.mxu0 0.0
    %1173 = vmatpush1.msra.mxu0 %v290
    %1174 = vmatprep.subr.mxu0 0.0
    %1175 = vmatpush2.msra.mxu0 %v321
    %1176 = vmatprep.subr.mxu0 0.0
    %1177 = vmatpush2.msra.mxu0 %v320
    %1178 = vmatprep.subr.mxu0 0.0
    %1179 = vmatpush2.msra.mxu0 %v319
    %1180 = vmatprep.subr.mxu0 0.0
    %1181 = vmatpush2.msra.mxu0 %v318
    %1182 = vmatprep.subr.mxu0 0.0
    %1183 = vmatpush2.msra.mxu0 %v317
    %1184 = vmatprep.subr.mxu0 0.0
    %1185 = vmatpush2.msra.mxu0 %v316
    %1186 = vmatprep.subr.mxu0 0.0
    %1187 = vmatpush2.msra.mxu0 %v315
    %1188 = vmatprep.subr.mxu0 0.0
    %1189 = vmatpush2.msra.mxu0 %v314
    %1190 = vmatprep.subr.mxu0 0.0
    %1191 = vmatpush2.msra.mxu0 %v313
    %1192 = vmatprep.subr.mxu0 0.0
    %1193 = vmatpush2.msra.mxu0 %v312
    %1194 = vmatprep.subr.mxu0 0.0
    %1195 = vmatpush2.msra.mxu0 %v311
    %1196 = vmatprep.subr.mxu0 0.0
    %1197 = vmatpush2.msra.mxu0 %v310
    %1198 = vmatprep.subr.mxu0 0.0
    %1199 = vmatpush2.msra.mxu0 %v309
    %1200 = vmatprep.subr.mxu0 0.0
    %1201 = vmatpush2.msra.mxu0 %v308
    %1202 = vmatprep.subr.mxu0 0.0
    %1203 = vmatpush2.msra.mxu0 %v307
    %1204 = vmatprep.subr.mxu0 0.0
    %1205 = vmatpush2.msra.mxu0 %v306
    %1206 = vmatprep.mubr.f32.mxu0 %v531
    %1207 = vmatmul.mubr.f32.gmra.mxu0 %v523
    %v1208 = vpop.f32.mrf.mxu0
    %v1209 = vadd.f32 %v1139, %v1208
    %v1210 = vpop.f32.mrf.mxu0
    %1211 = vdwg.mxu0
    %1212 = vmatprep.subr.mxu0 0.0
    %1213 = vmatpush1.msra.mxu0 %v337
    %1214 = vmatprep.subr.mxu0 0.0
    %1215 = vmatpush1.msra.mxu0 %v336
    %1216 = vmatprep.subr.mxu0 0.0
    %1217 = vmatpush1.msra.mxu0 %v335
    %1218 = vmatprep.subr.mxu0 0.0
    %1219 = vmatpush1.msra.mxu0 %v334
    %1220 = vmatprep.subr.mxu0 0.0
    %1221 = vmatpush1.msra.mxu0 %v333
    %1222 = vmatprep.subr.mxu0 0.0
    %1223 = vmatpush1.msra.mxu0 %v332
    %1224 = vmatprep.subr.mxu0 0.0
    %1225 = vmatpush1.msra.mxu0 %v331
    %1226 = vmatprep.subr.mxu0 0.0
    %1227 = vmatpush1.msra.mxu0 %v330
    %1228 = vmatprep.subr.mxu0 0.0
    %1229 = vmatpush1.msra.mxu0 %v329
    %1230 = vmatprep.subr.mxu0 0.0
    %1231 = vmatpush1.msra.mxu0 %v328
    %1232 = vmatprep.subr.mxu0 0.0
    %1233 = vmatpush1.msra.mxu0 %v327
    %1234 = vmatprep.subr.mxu0 0.0
    %1235 = vmatpush1.msra.mxu0 %v326
    %1236 = vmatprep.subr.mxu0 0.0
    %1237 = vmatpush1.msra.mxu0 %v325
    %1238 = vmatprep.subr.mxu0 0.0
    %1239 = vmatpush1.msra.mxu0 %v324
    %1240 = vmatprep.subr.mxu0 0.0
    %1241 = vmatpush1.msra.mxu0 %v323
    %1242 = vmatprep.subr.mxu0 0.0
    %1243 = vmatpush1.msra.mxu0 %v322
    %1244 = vmatprep.subr.mxu0 0.0
    %1245 = vmatpush2.msra.mxu0 %v353
    %1246 = vmatprep.subr.mxu0 0.0
    %1247 = vmatpush2.msra.mxu0 %v352
    %1248 = vmatprep.subr.mxu0 0.0
    %1249 = vmatpush2.msra.mxu0 %v351
    %1250 = vmatprep.subr.mxu0 0.0
    %1251 = vmatpush2.msra.mxu0 %v350
    %1252 = vmatprep.subr.mxu0 0.0
    %1253 = vmatpush2.msra.mxu0 %v349
    %1254 = vmatprep.subr.mxu0 0.0
    %1255 = vmatpush2.msra.mxu0 %v348
    %1256 = vmatprep.subr.mxu0 0.0
    %1257 = vmatpush2.msra.mxu0 %v347
    %1258 = vmatprep.subr.mxu0 0.0
    %1259 = vmatpush2.msra.mxu0 %v346
    %1260 = vmatprep.subr.mxu0 0.0
    %1261 = vmatpush2.msra.mxu0 %v345
    %1262 = vmatprep.subr.mxu0 0.0
    %1263 = vmatpush2.msra.mxu0 %v344
    %1264 = vmatprep.subr.mxu0 0.0
    %1265 = vmatpush2.msra.mxu0 %v343
    %1266 = vmatprep.subr.mxu0 0.0
    %1267 = vmatpush2.msra.mxu0 %v342
    %1268 = vmatprep.subr.mxu0 0.0
    %1269 = vmatpush2.msra.mxu0 %v341
    %1270 = vmatprep.subr.mxu0 0.0
    %1271 = vmatpush2.msra.mxu0 %v340
    %1272 = vmatprep.subr.mxu0 0.0
    %1273 = vmatpush2.msra.mxu0 %v339
    %1274 = vmatprep.subr.mxu0 0.0
    %1275 = vmatpush2.msra.mxu0 %v338
    %1276 = vmatprep.mubr.f32.mxu0 %v532
    %1277 = vmatmul.mubr.f32.gmra.mxu0 %v530
    %v1278 = vpop.f32.mrf.mxu0
    %v1279 = vadd.f32 %v1209, %v1278
    %v1280 = vpop.f32.mrf.mxu0
    %1281 = vdwg.mxu0
    %1282 = vmatprep.subr.mxu0 0.0
    %1283 = vmatpush1.msra.mxu0 %v369
    %1284 = vmatprep.subr.mxu0 0.0
    %1285 = vmatpush1.msra.mxu0 %v368
    %1286 = vmatprep.subr.mxu0 0.0
    %1287 = vmatpush1.msra.mxu0 %v367
    %1288 = vmatprep.subr.mxu0 0.0
    %1289 = vmatpush1.msra.mxu0 %v366
    %1290 = vmatprep.subr.mxu0 0.0
    %1291 = vmatpush1.msra.mxu0 %v365
    %1292 = vmatprep.subr.mxu0 0.0
    %1293 = vmatpush1.msra.mxu0 %v364
    %1294 = vmatprep.subr.mxu0 0.0
    %1295 = vmatpush1.msra.mxu0 %v363
    %1296 = vmatprep.subr.mxu0 0.0
    %1297 = vmatpush1.msra.mxu0 %v362
    %1298 = vmatprep.subr.mxu0 0.0
    %1299 = vmatpush1.msra.mxu0 %v361
    %1300 = vmatprep.subr.mxu0 0.0
    %1301 = vmatpush1.msra.mxu0 %v360
    %1302 = vmatprep.subr.mxu0 0.0
    %1303 = vmatpush1.msra.mxu0 %v359
    %1304 = vmatprep.subr.mxu0 0.0
    %1305 = vmatpush1.msra.mxu0 %v358
    %1306 = vmatprep.subr.mxu0 0.0
    %1307 = vmatpush1.msra.mxu0 %v357
    %1308 = vmatprep.subr.mxu0 0.0
    %1309 = vmatpush1.msra.mxu0 %v356
    %1310 = vmatprep.subr.mxu0 0.0
    %1311 = vmatpush1.msra.mxu0 %v355
    %1312 = vmatprep.subr.mxu0 0.0
    %1313 = vmatpush1.msra.mxu0 %v354
    %1314 = vmatprep.subr.mxu0 0.0
    %1315 = vmatpush2.msra.mxu0 %v385
    %1316 = vmatprep.subr.mxu0 0.0
    %1317 = vmatpush2.msra.mxu0 %v384
    %1318 = vmatprep.subr.mxu0 0.0
    %1319 = vmatpush2.msra.mxu0 %v383
    %1320 = vmatprep.subr.mxu0 0.0
    %1321 = vmatpush2.msra.mxu0 %v382
    %1322 = vmatprep.subr.mxu0 0.0
    %1323 = vmatpush2.msra.mxu0 %v381
    %1324 = vmatprep.subr.mxu0 0.0
    %1325 = vmatpush2.msra.mxu0 %v380
    %1326 = vmatprep.subr.mxu0 0.0
    %1327 = vmatpush2.msra.mxu0 %v379
    %1328 = vmatprep.subr.mxu0 0.0
    %1329 = vmatpush2.msra.mxu0 %v378
    %1330 = vmatprep.subr.mxu0 0.0
    %1331 = vmatpush2.msra.mxu0 %v377
    %1332 = vmatprep.subr.mxu0 0.0
    %1333 = vmatpush2.msra.mxu0 %v376
    %1334 = vmatprep.subr.mxu0 0.0
    %1335 = vmatpush2.msra.mxu0 %v375
    %1336 = vmatprep.subr.mxu0 0.0
    %1337 = vmatpush2.msra.mxu0 %v374
    %1338 = vmatprep.subr.mxu0 0.0
    %1339 = vmatpush2.msra.mxu0 %v373
    %1340 = vmatprep.subr.mxu0 0.0
    %1341 = vmatpush2.msra.mxu0 %v372
    %1342 = vmatprep.subr.mxu0 0.0
    %1343 = vmatpush2.msra.mxu0 %v371
    %1344 = vmatprep.subr.mxu0 0.0
    %1345 = vmatpush2.msra.mxu0 %v370
    %1346 = vmatprep.mubr.f32.mxu0 %v548
    %1347 = vmatmul.mubr.f32.gmra.mxu0 %v540
    %v1348 = vpop.f32.mrf.mxu0
    %v1349 = vadd.f32 %v1279, %v1348
    %v1350 = vpop.f32.mrf.mxu0
    %1351 = vdwg.mxu0
    %1352 = vmatprep.subr.mxu0 0.0
    %1353 = vmatpush1.msra.mxu0 %v401
    %1354 = vmatprep.subr.mxu0 0.0
    %1355 = vmatpush1.msra.mxu0 %v400
    %1356 = vmatprep.subr.mxu0 0.0
    %1357 = vmatpush1.msra.mxu0 %v399
    %1358 = vmatprep.subr.mxu0 0.0
    %1359 = vmatpush1.msra.mxu0 %v398
    %1360 = vmatprep.subr.mxu0 0.0
    %1361 = vmatpush1.msra.mxu0 %v397
    %1362 = vmatprep.subr.mxu0 0.0
    %1363 = vmatpush1.msra.mxu0 %v396
    %1364 = vmatprep.subr.mxu0 0.0
    %1365 = vmatpush1.msra.mxu0 %v395
    %1366 = vmatprep.subr.mxu0 0.0
    %1367 = vmatpush1.msra.mxu0 %v394
    %1368 = vmatprep.subr.mxu0 0.0
    %1369 = vmatpush1.msra.mxu0 %v393
    %1370 = vmatprep.subr.mxu0 0.0
    %1371 = vmatpush1.msra.mxu0 %v392
    %1372 = vmatprep.subr.mxu0 0.0
    %1373 = vmatpush1.msra.mxu0 %v391
    %1374 = vmatprep.subr.mxu0 0.0
    %1375 = vmatpush1.msra.mxu0 %v390
    %1376 = vmatprep.subr.mxu0 0.0
    %1377 = vmatpush1.msra.mxu0 %v389
    %1378 = vmatprep.subr.mxu0 0.0
    %1379 = vmatpush1.msra.mxu0 %v388
    %1380 = vmatprep.subr.mxu0 0.0
    %1381 = vmatpush1.msra.mxu0 %v387
    %1382 = vmatprep.subr.mxu0 0.0
    %1383 = vmatpush1.msra.mxu0 %v386
    %1384 = vmatprep.subr.mxu0 0.0
    %1385 = vmatpush2.msra.mxu0 %v417
    %1386 = vmatprep.subr.mxu0 0.0
    %1387 = vmatpush2.msra.mxu0 %v416
    %1388 = vmatprep.subr.mxu0 0.0
    %1389 = vmatpush2.msra.mxu0 %v415
    %1390 = vmatprep.subr.mxu0 0.0
    %1391 = vmatpush2.msra.mxu0 %v414
    %1392 = vmatprep.subr.mxu0 0.0
    %1393 = vmatpush2.msra.mxu0 %v413
    %1394 = vmatprep.subr.mxu0 0.0
    %1395 = vmatpush2.msra.mxu0 %v412
    %1396 = vmatprep.subr.mxu0 0.0
    %1397 = vmatpush2.msra.mxu0 %v411
    %1398 = vmatprep.subr.mxu0 0.0
    %1399 = vmatpush2.msra.mxu0 %v410
    %1400 = vmatprep.subr.mxu0 0.0
    %1401 = vmatpush2.msra.mxu0 %v409
    %1402 = vmatprep.subr.mxu0 0.0
    %1403 = vmatpush2.msra.mxu0 %v408
    %1404 = vmatprep.subr.mxu0 0.0
    %1405 = vmatpush2.msra.mxu0 %v407
    %1406 = vmatprep.subr.mxu0 0.0
    %1407 = vmatpush2.msra.mxu0 %v406
    %1408 = vmatprep.subr.mxu0 0.0
    %1409 = vmatpush2.msra.mxu0 %v405
    %1410 = vmatprep.subr.mxu0 0.0
    %1411 = vmatpush2.msra.mxu0 %v404
    %1412 = vmatprep.subr.mxu0 0.0
    %1413 = vmatpush2.msra.mxu0 %v403
    %1414 = vmatprep.subr.mxu0 0.0
    %1415 = vmatpush2.msra.mxu0 %v402
    %1416 = vmatprep.mubr.f32.mxu0 %v549
    %1417 = vmatmul.mubr.f32.gmra.mxu0 %v547
    %v1418 = vpop.f32.mrf.mxu0
    %v1419 = vadd.f32 %v1349, %v1418
    %v1420 = vpop.f32.mrf.mxu0
    %1421 = vdwg.mxu0
    %1422 = vmatprep.subr.mxu0 0.0
    %1423 = vmatpush1.msra.mxu0 %v433
    %1424 = vmatprep.subr.mxu0 0.0
    %1425 = vmatpush1.msra.mxu0 %v432
    %1426 = vmatprep.subr.mxu0 0.0
    %1427 = vmatpush1.msra.mxu0 %v431
    %1428 = vmatprep.subr.mxu0 0.0
    %1429 = vmatpush1.msra.mxu0 %v430
    %1430 = vmatprep.subr.mxu0 0.0
    %1431 = vmatpush1.msra.mxu0 %v429
    %1432 = vmatprep.subr.mxu0 0.0
    %1433 = vmatpush1.msra.mxu0 %v428
    %1434 = vmatprep.subr.mxu0 0.0
    %1435 = vmatpush1.msra.mxu0 %v427
    %1436 = vmatprep.subr.mxu0 0.0
    %1437 = vmatpush1.msra.mxu0 %v426
    %1438 = vmatprep.subr.mxu0 0.0
    %1439 = vmatpush1.msra.mxu0 %v425
    %1440 = vmatprep.subr.mxu0 0.0
    %1441 = vmatpush1.msra.mxu0 %v424
    %1442 = vmatprep.subr.mxu0 0.0
    %1443 = vmatpush1.msra.mxu0 %v423
    %1444 = vmatprep.subr.mxu0 0.0
    %1445 = vmatpush1.msra.mxu0 %v422
    %1446 = vmatprep.subr.mxu0 0.0
    %1447 = vmatpush1.msra.mxu0 %v421
    %1448 = vmatprep.subr.mxu0 0.0
    %1449 = vmatpush1.msra.mxu0 %v420
    %1450 = vmatprep.subr.mxu0 0.0
    %1451 = vmatpush1.msra.mxu0 %v419
    %1452 = vmatprep.subr.mxu0 0.0
    %1453 = vmatpush1.msra.mxu0 %v418
    %1454 = vmatprep.subr.mxu0 0.0
    %1455 = vmatpush2.msra.mxu0 0.0
    %1456 = vmatprep.subr.mxu0 0.0
    %1457 = vmatpush2.msra.mxu0 0.0
    %1458 = vmatprep.subr.mxu0 0.0
    %1459 = vmatpush2.msra.mxu0 0.0
    %1460 = vmatprep.subr.mxu0 0.0
    %1461 = vmatpush2.msra.mxu0 0.0
    %1462 = vmatprep.subr.mxu0 0.0
    %1463 = vmatpush2.msra.mxu0 0.0
    %1464 = vmatprep.subr.mxu0 0.0
    %1465 = vmatpush2.msra.mxu0 0.0
    %1466 = vmatprep.subr.mxu0 0.0
    %1467 = vmatpush2.msra.mxu0 0.0
    %1468 = vmatprep.subr.mxu0 0.0
    %1469 = vmatpush2.msra.mxu0 0.0
    %1470 = vmatprep.subr.mxu0 0.0
    %1471 = vmatpush2.msra.mxu0 0.0
    %1472 = vmatprep.subr.mxu0 0.0
    %1473 = vmatpush2.msra.mxu0 0.0
    %1474 = vmatprep.subr.mxu0 0.0
    %1475 = vmatpush2.msra.mxu0 0.0
    %1476 = vmatprep.subr.mxu0 0.0
    %1477 = vmatpush2.msra.mxu0 0.0
    %1478 = vmatprep.subr.mxu0 0.0
    %1479 = vmatpush2.msra.mxu0 0.0
    %1480 = vmatprep.subr.mxu0 0.0
    %1481 = vmatpush2.msra.mxu0 0.0
    %1482 = vmatprep.subr.mxu0 0.0
    %1483 = vmatpush2.msra.mxu0 0.0
    %1484 = vmatprep.subr.mxu0 0.0
    %1485 = vmatpush2.msra.mxu0 0.0
    %1486 = vmatprep.mubr.f32.mxu0 0.0
    %1487 = vmatmul.mubr.f32.gmra.mxu0 %v556
    %v1488 = vpop.f32.mrf.mxu0
    %v1489 = vadd.f32 %v1419, %v1488
    %v1490 = vpop.f32.mrf.mxu0
    %1491 = vdwg.mxu0
    %v1492 = vmax.f32 %v1489, 0.0
    %v1493 = vld [vmem:[%s3] sm:$0xff]
    %v1494 = vld [vmem:[%s3 + $0x8] sm:$0xff]
    %v1495 = vld [vmem:[%s3 + $0x10] sm:$0xff]
    %v1496 = vld [vmem:[%s3 + $0x18] sm:$0xff]
    %v1497 = vld [vmem:[%s3 + $0x20] sm:$0xff]
    %v1498 = vld [vmem:[%s3 + $0x28] sm:$0xff]
    %v1499 = vld [vmem:[%s3 + $0x30] sm:$0xff]
    %v1500 = vld [vmem:[%s3 + $0x38] sm:$0xff]
    %v1501 = vld [vmem:[%s3 + $0x40] sm:$0xff]
    %v1502 = vld [vmem:[%s3 + $0x48] sm:$0xff]
    %v1503 = vld [vmem:[%s3 + $0x50] sm:$0xff]
    %v1504 = vld [vmem:[%s3 + $0x58] sm:$0xff]
    %v1505 = vld [vmem:[%s3 + $0x60] sm:$0xff]
    %v1506 = vld [vmem:[%s3 + $0x68] sm:$0xff]
    %v1507 = vld [vmem:[%s3 + $0x70] sm:$0xff]
    %v1508 = vld [vmem:[%s4] sm:$0x1]
    %v1510 = vlaneseq
    %v1511 = vshrl.u32 %v1510, 7
    %v1512 = vsub.s32 0, %v1511
    %v1513 = vrot.slane %v1508, %v1512
    %vm1515 = vcmask 982016
    %v1517 = vsel %vm1515, %v1492, 0
    %1519 = vmatprep.subr.mxu0 0.0
    %1520 = vmatpush1.msra.mxu0 0.0
    %1521 = vmatprep.subr.mxu0 0.0
    %1522 = vmatpush1.msra.mxu0 %v1507
    %1523 = vmatprep.subr.mxu0 0.0
    %1524 = vmatpush1.msra.mxu0 %v1506
    %1525 = vmatprep.subr.mxu0 0.0
    %1526 = vmatpush1.msra.mxu0 %v1505
    %1527 = vmatprep.subr.mxu0 0.0
    %1528 = vmatpush1.msra.mxu0 %v1504
    %1529 = vmatprep.subr.mxu0 0.0
    %1530 = vmatpush1.msra.mxu0 %v1503
    %1531 = vmatprep.subr.mxu0 0.0
    %1532 = vmatpush1.msra.mxu0 %v1502
    %1533 = vmatprep.subr.mxu0 0.0
    %1534 = vmatpush1.msra.mxu0 %v1501
    %1535 = vmatprep.subr.mxu0 0.0
    %1536 = vmatpush1.msra.mxu0 %v1500
    %1537 = vmatprep.subr.mxu0 0.0
    %1538 = vmatpush1.msra.mxu0 %v1499
    %1539 = vmatprep.subr.mxu0 0.0
    %1540 = vmatpush1.msra.mxu0 %v1498
    %1541 = vmatprep.subr.mxu0 0.0
    %1542 = vmatpush1.msra.mxu0 %v1497
    %1543 = vmatprep.subr.mxu0 0.0
    %1544 = vmatpush1.msra.mxu0 %v1496
    %1545 = vmatprep.subr.mxu0 0.0
    %1546 = vmatpush1.msra.mxu0 %v1495
    %1547 = vmatprep.subr.mxu0 0.0
    %1548 = vmatpush1.msra.mxu0 %v1494
    %1549 = vmatprep.subr.mxu0 0.0
    %1550 = vmatpush1.msra.mxu0 %v1493
    %1551 = vmatprep.subr.mxu0 0.0
    %1552 = vmatpush2.msra.mxu0 0.0
    %1553 = vmatprep.subr.mxu0 0.0
    %1554 = vmatpush2.msra.mxu0 0.0
    %1555 = vmatprep.subr.mxu0 0.0
    %1556 = vmatpush2.msra.mxu0 0.0
    %1557 = vmatprep.subr.mxu0 0.0
    %1558 = vmatpush2.msra.mxu0 0.0
    %1559 = vmatprep.subr.mxu0 0.0
    %1560 = vmatpush2.msra.mxu0 0.0
    %1561 = vmatprep.subr.mxu0 0.0
    %1562 = vmatpush2.msra.mxu0 0.0
    %1563 = vmatprep.subr.mxu0 0.0
    %1564 = vmatpush2.msra.mxu0 0.0
    %1565 = vmatprep.subr.mxu0 0.0
    %1566 = vmatpush2.msra.mxu0 0.0
    %1567 = vmatprep.subr.mxu0 0.0
    %1568 = vmatpush2.msra.mxu0 0.0
    %1569 = vmatprep.subr.mxu0 0.0
    %1570 = vmatpush2.msra.mxu0 0.0
    %1571 = vmatprep.subr.mxu0 0.0
    %1572 = vmatpush2.msra.mxu0 0.0
    %1573 = vmatprep.subr.mxu0 0.0
    %1574 = vmatpush2.msra.mxu0 0.0
    %1575 = vmatprep.subr.mxu0 0.0
    %1576 = vmatpush2.msra.mxu0 0.0
    %1577 = vmatprep.subr.mxu0 0.0
    %1578 = vmatpush2.msra.mxu0 0.0
    %1579 = vmatprep.subr.mxu0 0.0
    %1580 = vmatpush2.msra.mxu0 0.0
    %1581 = vmatprep.subr.mxu0 0.0
    %1582 = vmatpush2.msra.mxu0 0.0
    %1583 = vmatprep.mubr.f32.mxu0 0.0
    %1584 = vmatmul.mubr.f32.gmra.mxu0 %v1517
    %v1585 = vpop.f32.mrf.mxu0
    %v1586 = vadd.f32 %v1513, %v1585
    %v1587 = vpop.f32.mrf.mxu0
    %1588 = vdwg.mxu0
    %v1589 = vmax.f32 %v1586, 0.0
    %v1590 = vld [vmem:[%s5] sm:$0xff]
    %v1591 = vld [vmem:[%s5 + $0x8] sm:$0xff]
    %v1592 = vld [vmem:[%s5 + $0x10] sm:$0xff]
    %v1593 = vld [vmem:[%s5 + $0x18] sm:$0xff]
    %v1594 = vld [vmem:[%s5 + $0x20] sm:$0xff]
    %v1595 = vld [vmem:[%s5 + $0x28] sm:$0xff]
    %v1596 = vld [vmem:[%s5 + $0x30] sm:$0xff]
    %v1597 = vld [vmem:[%s5 + $0x38] sm:$0xff]
    %v1598 = vld [vmem:[%s5 + $0x40] sm:$0xff]
    %v1599 = vld [vmem:[%s5 + $0x48] sm:$0xff]
    %v1600 = vld [vmem:[%s5 + $0x50] sm:$0xf]
    %v1601 = vld [vmem:[%s6] sm:$0x1]
    %v1603 = vlaneseq
    %v1604 = vshrl.u32 %v1603, 7
    %v1605 = vsub.s32 0, %v1604
    %v1606 = vrot.slane %v1601, %v1605
    %vm1608 = vcmask 687104
    %v1610 = vsel %vm1608, %v1589, 0
    %vm1612 = vcmask 1043456
    %v1614 = vsel %vm1612, %v1600, 0
    %1616 = vmatprep.subr.mxu0 0.0
    %1617 = vmatpush1.msra.mxu0 0.0
    %1618 = vmatprep.subr.mxu0 0.0
    %1619 = vmatpush1.msra.mxu0 0.0
    %1620 = vmatprep.subr.mxu0 0.0
    %1621 = vmatpush1.msra.mxu0 0.0
    %1622 = vmatprep.subr.mxu0 0.0
    %1623 = vmatpush1.msra.mxu0 0.0
    %1624 = vmatprep.subr.mxu0 0.0
    %1625 = vmatpush1.msra.mxu0 0.0
    %1626 = vmatprep.subr.mxu0 0.0
    %1627 = vmatpush1.msra.mxu0 %v1614
    %1628 = vmatprep.subr.mxu0 0.0
    %1629 = vmatpush1.msra.mxu0 %v1599
    %1630 = vmatprep.subr.mxu0 0.0
    %1631 = vmatpush1.msra.mxu0 %v1598
    %1632 = vmatprep.subr.mxu0 0.0
    %1633 = vmatpush1.msra.mxu0 %v1597
    %1634 = vmatprep.subr.mxu0 0.0
    %1635 = vmatpush1.msra.mxu0 %v1596
    %1636 = vmatprep.subr.mxu0 0.0
    %1637 = vmatpush1.msra.mxu0 %v1595
    %1638 = vmatprep.subr.mxu0 0.0
    %1639 = vmatpush1.msra.mxu0 %v1594
    %1640 = vmatprep.subr.mxu0 0.0
    %1641 = vmatpush1.msra.mxu0 %v1593
    %1642 = vmatprep.subr.mxu0 0.0
    %1643 = vmatpush1.msra.mxu0 %v1592
    %1644 = vmatprep.subr.mxu0 0.0
    %1645 = vmatpush1.msra.mxu0 %v1591
    %1646 = vmatprep.subr.mxu0 0.0
    %1647 = vmatpush1.msra.mxu0 %v1590
    %1648 = vmatprep.subr.mxu0 0.0
    %1649 = vmatpush2.msra.mxu0 0.0
    %1650 = vmatprep.subr.mxu0 0.0
    %1651 = vmatpush2.msra.mxu0 0.0
    %1652 = vmatprep.subr.mxu0 0.0
    %1653 = vmatpush2.msra.mxu0 0.0
    %1654 = vmatprep.subr.mxu0 0.0
    %1655 = vmatpush2.msra.mxu0 0.0
    %1656 = vmatprep.subr.mxu0 0.0
    %1657 = vmatpush2.msra.mxu0 0.0
    %1658 = vmatprep.subr.mxu0 0.0
    %1659 = vmatpush2.msra.mxu0 0.0
    %1660 = vmatprep.subr.mxu0 0.0
    %1661 = vmatpush2.msra.mxu0 0.0
    %1662 = vmatprep.subr.mxu0 0.0
    %1663 = vmatpush2.msra.mxu0 0.0
    %1664 = vmatprep.subr.mxu0 0.0
    %1665 = vmatpush2.msra.mxu0 0.0
    %1666 = vmatprep.subr.mxu0 0.0
    %1667 = vmatpush2.msra.mxu0 0.0
    %1668 = vmatprep.subr.mxu0 0.0
    %1669 = vmatpush2.msra.mxu0 0.0
    %1670 = vmatprep.subr.mxu0 0.0
    %1671 = vmatpush2.msra.mxu0 0.0
    %1672 = vmatprep.subr.mxu0 0.0
    %1673 = vmatpush2.msra.mxu0 0.0
    %1674 = vmatprep.subr.mxu0 0.0
    %1675 = vmatpush2.msra.mxu0 0.0
    %1676 = vmatprep.subr.mxu0 0.0
    %1677 = vmatpush2.msra.mxu0 0.0
    %1678 = vmatprep.subr.mxu0 0.0
    %1679 = vmatpush2.msra.mxu0 0.0
    %1680 = vmatprep.mubr.f32.mxu0 0.0
    %1681 = vmatmul.mubr.f32.gmra.mxu0 %v1610
    %v1682 = vpop.f32.mrf.mxu0
    %v1683 = vadd.f32 %v1606, %v1682
    %v1684 = vpop.f32.mrf.mxu0
    %1685 = vdwg.mxu0
    %vm1686 = vcmask 74752
    %1687 = vst.msk [vmem:[#allocation2] sm:$0x3] %vm1686, %v1683
    // Predicated region
    $region30: #{lenet_forward.5} parent=1 // pred_check
      _
    $region31: #{lenet_forward.5} parent=1 // pred_check_branch
      %1689 = sbr.rel (0) target = $region33
    $region32: #{lenet_forward.5} parent=1 // pred_region
      %s1691 = ssub.s32 32, 32
      %1692 = vsyncadd [#allocation3], %s1691
      %s1694 = sshll.u32 [#allocation2], 4
      %s1695 = int_to_ptr.vmem [resolvable:$true] %s1694
      %1697 = dma.vmem_to_hbm [thread:$0]  %s1695, 32, %s7, [#allocation3]
    $region33: #{lenet_forward.5} parent=1 // pred_fallthru
      _
    // Predicated region
    $region34: #{lenet_forward.5} parent=1 // pred_check
      _
    $region35: #{lenet_forward.5} parent=1 // pred_check_branch
      %1699 = sbr.rel (0) target = $region37
    $region36: #{lenet_forward.5} parent=1 // pred_region
      %1700 = dma.done [#allocation3], 32
    $region37: #{lenet_forward.5} parent=1 // pred_fallthru
      _
    %1701 = vsyncpa [#allocation3], 1

</llo_original>
